<compile_context>
chip_gen: v7x
topology: tpu7x:2x2x1
jax: 0.10.0
libtpu: 0.0.40
codegen_flags: <defaults>
</compile_context>

<pallas_src>
import jax
import jax.numpy as jnp
import numpy as np
from jax import lax
from jax.experimental import pallas as pl
from jax.experimental.pallas import tpu as pltpu

EPS = 1e-5
SUB = 8  # sublane quantum; channels padded only to this (not to 128 lanes)


# ----------------------------------------------------------------------------
# Kernels
# ----------------------------------------------------------------------------
def pool_conv1_kernel(x_ref, w_ref, z_ref, st_ref, xpad_ref):
    # x_ref:   (Hp, 2, Wp, 2*Ci)  one image; 2x2 pool taps exposed by a *free*
    #          row-major reshape (dim1 = H parity, lane halves = W parity).
    # w_ref:   (9, Ci, Co)        bf16 conv1 weights, tap-major leading dim.
    # z_ref:   (Hp, Wp, Co)       bf16 pre-BN conv1 output for this image.
    # st_ref:  (1, 2, Co)         f32 per-image [mean, M2] BN partials.
    # xpad_ref:(Hp+2, Wq, Ci)     f32 VMEM scratch: zero halo + pooled interior.
    Hp, _, Wp, C2 = x_ref.shape
    Ci = C2 // 2
    Co = w_ref.shape[-1]
    Wq = xpad_ref.shape[1]

    # fused 2x2 max-pool (pure VPU, no HBM round trip)
    x = x_ref[...]
    m = jnp.maximum(x[:, 0], x[:, 1])                  # pool along H
    pooled = jnp.maximum(m[:, :, :Ci], m[:, :, Ci:])   # pool along W -> (Hp,Wp,Ci)

    # refresh only the 1-element halo border; the interior is fully overwritten
    # every step (no full zero-fill of the scratch per grid iteration).
    zrow = jnp.zeros((1, Wq, Ci), jnp.float32)
    zcol = jnp.zeros((Hp, 1, Ci), jnp.float32)
    xpad_ref[0:1, :, :] = zrow
    xpad_ref[Hp + 1:Hp + 2, :, :] = zrow
    xpad_ref[1:Hp + 1, 0:1, :] = zcol
    xpad_ref[1:Hp + 1, Wp + 1:Wp + 2, :] = zcol
    xpad_ref[1:Hp + 1, 1:Wp + 1, :] = pooled

    # 3x3 conv as 9 accumulated MXU dots taken straight off the halo scratch
    # (no im2col slab write+read).  bf16 MXU operands, f32 accumulation.
    acc = None
    for k in range(9):
        dy, dx = divmod(k, 3)
        lhs = xpad_ref[dy:dy + Hp, dx:dx + Wp, :].reshape(Hp * Wp, Ci)
        p = jnp.dot(lhs.astype(jnp.bfloat16), w_ref[k],
                    preferred_element_type=jnp.float32)
        acc = p if acc is None else acc + p

    z_ref[...] = acc.reshape(Hp, Wp, Co).astype(z_ref.dtype)

    # per-image (mean, M2) partials from the exact f32 accumulator
    inv_n = 1.0 / (Hp * Wp)
    mean = jnp.sum(acc, axis=0, keepdims=True) * inv_n
    d = acc - mean
    st_ref[0, 0:1, :] = mean
    st_ref[0, 1:2, :] = jnp.sum(d * d, axis=0, keepdims=True)


def bn_relu_conv2_kernel(z1_ref, a_ref, b_ref, w_ref, z2_ref, st_ref, hpad_ref):
    # z1_ref: (Hp, Wp, Co) bf16 pre-BN conv1 output; a_ref/b_ref: (1, Co) fused
    # BN1 scale/shift; w_ref: (9, Co, Co) bf16; z2_ref: bf16 pre-BN conv2 out;
    # st_ref: BN2 partials; hpad_ref: f32 halo scratch.
    Hp, Wp, Co = z1_ref.shape
    Wq = hpad_ref.shape[1]

    # BN1 (fused affine) + ReLU, in f32 on the VPU
    h = jnp.maximum(z1_ref[...].astype(jnp.float32) * a_ref[...] + b_ref[...], 0.0)

    zrow = jnp.zeros((1, Wq, Co), jnp.float32)
    zcol = jnp.zeros((Hp, 1, Co), jnp.float32)
    hpad_ref[0:1, :, :] = zrow
    hpad_ref[Hp + 1:Hp + 2, :, :] = zrow
    hpad_ref[1:Hp + 1, 0:1, :] = zcol
    hpad_ref[1:Hp + 1, Wp + 1:Wp + 2, :] = zcol
    hpad_ref[1:Hp + 1, 1:Wp + 1, :] = h

    acc = None
    for k in range(9):
        dy, dx = divmod(k, 3)
        lhs = hpad_ref[dy:dy + Hp, dx:dx + Wp, :].reshape(Hp * Wp, Co)
        p = jnp.dot(lhs.astype(jnp.bfloat16), w_ref[k],
                    preferred_element_type=jnp.float32)
        acc = p if acc is None else acc + p

    z2_ref[...] = acc.reshape(Hp, Wp, Co).astype(z2_ref.dtype)

    inv_n = 1.0 / (Hp * Wp)
    mean = jnp.sum(acc, axis=0, keepdims=True) * inv_n
    d = acc - mean
    st_ref[0, 0:1, :] = mean
    st_ref[0, 1:2, :] = jnp.sum(d * d, axis=0, keepdims=True)


def bn_relu_kernel(z_ref, a_ref, b_ref, o_ref):
    # elementwise BN2 (fused affine) + ReLU, f32 output
    o_ref[...] = jnp.maximum(
        z_ref[...].astype(jnp.float32) * a_ref[...] + b_ref[...], 0.0
    ).astype(o_ref.dtype)


# ----------------------------------------------------------------------------
# Wrapper
# ----------------------------------------------------------------------------
def _round_up(x, m):
    return (x + m - 1) // m * m


def _pad_last(a, target):
    pad = target - a.shape[-1]
    if pad == 0:
        return a
    return jnp.pad(a, [(0, 0)] * (a.ndim - 1) + [(0, pad)])


def _pack_weight(w, cin_p, cout_p):
    # (3,3,Cin,Cout) HWIO -> (9, Cin_p, Cout_p) bf16, tap-major leading dim
    kh, kw, ci, co = w.shape
    w = jnp.pad(w, ((0, 0), (0, 0), (0, cin_p - ci), (0, cout_p - co)))
    return w.reshape(kh * kw, cin_p, cout_p).astype(jnp.bfloat16)


def _bn_affine(stats, gamma, beta, n_imgs, n_per_img):
    # stats: (N, 2, Co) per-image [mean, M2]; Chan's parallel-variance combine.
    means = stats[:, 0, :]
    m2s = stats[:, 1, :]
    mu = jnp.mean(means, axis=0)
    m2 = jnp.sum(m2s, axis=0) + n_per_img * jnp.sum((means - mu) ** 2, axis=0)
    var = jnp.maximum(m2 / (n_imgs * n_per_img), 0.0)
    a = gamma * lax.rsqrt(var + EPS)
    b = beta - mu * a
    return a.reshape(1, -1), b.reshape(1, -1)


def _compiler_params():
    # per-generation VMEM budget: v5e/v6e have 128 MiB physical, v7x only 64.
    try:
        cap = getattr(pltpu.get_tpu_info(), "vmem_capacity_bytes", 64 * 1024 * 1024)
    except Exception:
        cap = 64 * 1024 * 1024
    return pltpu.CompilerParams(
        dimension_semantics=("parallel",),
        vmem_limit_bytes=int(min(cap * 3 // 4, 96 * 1024 * 1024)),
    )


@jax.jit
def down_forward(x_nchw, params):
    N, Cin, H, W = x_nchw.shape
    Cout = params["w1"].shape[-1]
    assert H % 2 == 0 and W % 2 == 0
    Hp, Wp = H // 2, W // 2
    # Near-natural channel widths in HBM (pad only to the 8-row sublane
    # quantum, not to 128 lanes) -> no 16-32x HBM traffic inflation here.
    Ci = _round_up(Cin, SUB)
    Co = _round_up(Cout, SUB)
    Wq = _round_up(Wp + 2, SUB)   # sublane-aligned halo-scratch width

    # NCHW -> NHWC, small channel pad, then a *free* row-major reshape that
    # exposes the 2x2 pool taps: (N, H, W, Ci) -> (N*Hp, 2, Wp, 2*Ci).
    x = jnp.transpose(x_nchw, (0, 2, 3, 1))
    x = _pad_last(x, Ci).reshape(N * Hp, 2, Wp, 2 * Ci)

    w1 = _pack_weight(params["w1"], Ci, Co)    # (9, Ci, Co) bf16
    w2 = _pack_weight(params["w2"], Co, Co)    # (9, Co, Co) bf16
    g1 = _pad_last(params["g1"], Co)
    b1 = _pad_last(params["b1"], Co)
    g2 = _pad_last(params["g2"], Co)
    b2 = _pad_last(params["b2"], Co)
    # NOTE: conv biases cb1/cb2 are intentionally unused: a per-channel constant
    # added before *train-mode* BatchNorm cancels exactly in the mean.

    cparams = _compiler_params()

    # ---- pass 1: fused maxpool + conv1 (+ per-image BN1 partials) ----------
    z1, st1 = pl.pallas_call(
        pool_conv1_kernel,
        grid=(N,),
        in_specs=[
            pl.BlockSpec((Hp, 2, Wp, 2 * Ci), lambda i: (i, 0, 0, 0)),
            pl.BlockSpec((9, Ci, Co), lambda i: (0, 0, 0)),
        ],
        out_specs=(
            pl.BlockSpec((Hp, Wp, Co), lambda i: (i, 0, 0)),
            pl.BlockSpec((1, 2, Co), lambda i: (i, 0, 0)),
        ),
        out_shape=(
            jax.ShapeDtypeStruct((N * Hp, Wp, Co), jnp.bfloat16),  # bf16 intermediate
            jax.ShapeDtypeStruct((N, 2, Co), jnp.float32),
        ),
        scratch_shapes=[pltpu.VMEM((Hp + 2, Wq, Ci), jnp.float32)],
        compiler_params=cparams,
    )(x, w1)

    a1v, b1v = _bn_affine(st1, g1, b1, N, Hp * Wp)

    # ---- pass 2: BN1 + ReLU fused into conv2 (+ BN2 partials) --------------
    z2, st2 = pl.pallas_call(
        bn_relu_conv2_kernel,
        grid=(N,),
        in_specs=[
            pl.BlockSpec((Hp, Wp, Co), lambda i: (i, 0, 0)),
            pl.BlockSpec((1, Co), lambda i: (0, 0)),
            pl.BlockSpec((1, Co), lambda i: (0, 0)),
            pl.BlockSpec((9, Co, Co), lambda i: (0, 0, 0)),
        ],
        out_specs=(
            pl.BlockSpec((Hp, Wp, Co), lambda i: (i, 0, 0)),
            pl.BlockSpec((1, 2, Co), lambda i: (i, 0, 0)),
        ),
        out_shape=(
            jax.ShapeDtypeStruct((N * Hp, Wp, Co), jnp.bfloat16),
            jax.ShapeDtypeStruct((N, 2, Co), jnp.float32),
        ),
        scratch_shapes=[pltpu.VMEM((Hp + 2, Wq, Co), jnp.float32)],
        compiler_params=cparams,
    )(z1, a1v, b1v, w2)

    a2v, b2v = _bn_affine(st2, g2, b2, N, Hp * Wp)

    # ---- pass 3: BN2 + ReLU -------------------------------------------------
    y = pl.pallas_call(
        bn_relu_kernel,
        grid=(N,),
        in_specs=[
            pl.BlockSpec((Hp, Wp, Co), lambda i: (i, 0, 0)),
            pl.BlockSpec((1, Co), lambda i: (0, 0)),
            pl.BlockSpec((1, Co), lambda i: (0, 0)),
        ],
        out_specs=pl.BlockSpec((Hp, Wp, Co), lambda i: (i, 0, 0)),
        out_shape=jax.ShapeDtypeStruct((N * Hp, Wp, Co), jnp.float32),
        compiler_params=cparams,
    )(z2, a2v, b2v)

    # Back to the module's NCHW contract.  (In a full UNet the next block would
    # consume the NHWC output directly and this transpose would be deleted.)
    y = y.reshape(N, Hp, Wp, Co)
    if Co != Cout:
        y = y[..., :Cout]
    return jnp.transpose(y, (0, 3, 1, 2))


def init_params(key, in_ch, out_ch):
    ks = jax.random.split(key, 8)
    scale1 = 1.0 / np.sqrt(in_ch * 9)
    scale2 = 1.0 / np.sqrt(out_ch * 9)
    return {
        "w1":  jax.random.uniform(ks[0], (3, 3, in_ch, out_ch), jnp.float32,
                                  -scale1, scale1),
        "cb1": jax.random.uniform(ks[1], (out_ch,), jnp.float32, -scale1, scale1),
        "g1":  jax.random.uniform(ks[2], (out_ch,), jnp.float32, 0.5, 1.5),
        "b1":  jax.random.uniform(ks[3], (out_ch,), jnp.float32, -0.5, 0.5),
        "w2":  jax.random.uniform(ks[4], (3, 3, out_ch, out_ch), jnp.float32,
                                  -scale2, scale2),
        "cb2": jax.random.uniform(ks[5], (out_ch,), jnp.float32, -scale2, scale2),
        "g2":  jax.random.uniform(ks[6], (out_ch,), jnp.float32, 0.5, 1.5),
        "b2":  jax.random.uniform(ks[7], (out_ch,), jnp.float32, -0.5, 0.5),
    }


# ----------------------------------------------------------------------------
# Pure-JAX f32 reference (keeps the conv bias, which cancels under train BN)
# ----------------------------------------------------------------------------
def _reference(x_nchw, params):
    x = jnp.transpose(x_nchw, (0, 2, 3, 1))  # NHWC
    x = lax.reduce_window(x, -jnp.inf, lax.max, (1, 2, 2, 1), (1, 2, 2, 1), "VALID")

    def block(x, w, g, b, cb):
        y = lax.conv_general_dilated(
            x, w, window_strides=(1, 1), padding="SAME",
            dimension_numbers=("NHWC", "HWIO", "NHWC")) + cb
        mean = jnp.mean(y, axis=(0, 1, 2), keepdims=True)
        var = jnp.mean((y - mean) ** 2, axis=(0, 1, 2), keepdims=True)
        return jnp.maximum((y - mean) * lax.rsqrt(var + EPS) * g + b, 0.0)

    x = block(x, params["w1"], params["g1"], params["b1"], params["cb1"])
    x = block(x, params["w2"], params["g2"], params["b2"], params["cb2"])
    return jnp.transpose(x, (0, 3, 1, 2))


if __name__ == "__main__":
    key = jax.random.PRNGKey(0)
    k_x, k_p = jax.random.split(key)

    in_ch, out_ch = 4, 8
    x = jax.random.normal(k_x, (2, in_ch, 16, 16), jnp.float32)  # NCHW, like PyTorch
    params = init_params(k_p, in_ch, out_ch)

    out = down_forward(x, params)
    out = jax.block_until_ready(out)
    assert out.shape == (2, out_ch, 8, 8), out.shape

    ref = jax.block_until_ready(_reference(x, params))
    # bf16 MXU operands / bf16 intermediates -> compare against the f32
    # reference with a bf16-appropriate tolerance (BN absorbs most of it).
    np.testing.assert_allclose(np.asarray(out), np.asarray(ref),
                               rtol=5e-2, atol=5e-2)

    print("KERNEL_OK")
</pallas_src>

<mosaic_0001>
module attributes {stable_mosaic.version = 11 : i64} {
  func.func @pool_conv1_kernel(%arg0: i32, %arg1: memref<8x2x8x16xf32, #tpu.memory_space<vmem>>, %arg2: memref<9x8x8xbf16, #tpu.memory_space<vmem>>, %arg3: memref<8x8x8xbf16, #tpu.memory_space<vmem>>, %arg4: memref<1x2x8xf32, #tpu.memory_space<vmem>>, %arg5: memref<10x16x8xf32, #tpu.memory_space<vmem>>) attributes {dimension_semantics = [#tpu.dimension_semantics<parallel>], iteration_bounds = array<i64: 2>, scalar_prefetch = 0 : i64, scratch_operands = 1 : i64, tpu.core_type = #tpu.core_type<tc>, window_params = [{transform_indices = @transform_0, window_bounds = array<i64: 8, 2, 8, 16>}, {pipeline_mode = #tpu.pipeline_mode<synchronous>, transform_indices = @transform_1, window_bounds = array<i64: 9, 8, 8>}, {transform_indices = @transform_2, window_bounds = array<i64: 8, 8, 8>}, {transform_indices = @transform_3, window_bounds = array<i64: 1, 2, 8>}]} {
    %c0 = arith.constant 0 : index
    %c0_0 = arith.constant 0 : index
    %c0_1 = arith.constant 0 : index
    %c0_2 = arith.constant 0 : index
    %0 = vector.load %arg1[%c0, %c0_0, %c0_1, %c0_2] : memref<8x2x8x16xf32, #tpu.memory_space<vmem>>, vector<8x2x8x16xf32>
    %1 = vector.extract_strided_slice %0 {offsets = [0, 0, 0, 0], sizes = [8, 1, 8, 16], strides = [1, 1, 1, 1]} : vector<8x2x8x16xf32> to vector<8x1x8x16xf32>
    %2 = vector.shape_cast %1 : vector<8x1x8x16xf32> to vector<8x8x16xf32>
    %3 = vector.extract_strided_slice %0 {offsets = [0, 1, 0, 0], sizes = [8, 1, 8, 16], strides = [1, 1, 1, 1]} : vector<8x2x8x16xf32> to vector<8x1x8x16xf32>
    %4 = vector.shape_cast %3 : vector<8x1x8x16xf32> to vector<8x8x16xf32>
    %5 = arith.maximumf %2, %4 : vector<8x8x16xf32>
    %6 = vector.extract_strided_slice %5 {offsets = [0, 0, 0], sizes = [8, 8, 8], strides = [1, 1, 1]} : vector<8x8x16xf32> to vector<8x8x8xf32>
    %7 = vector.extract_strided_slice %5 {offsets = [0, 0, 8], sizes = [8, 8, 8], strides = [1, 1, 1]} : vector<8x8x16xf32> to vector<8x8x8xf32>
    %8 = arith.maximumf %6, %7 : vector<8x8x8xf32>
    %cst = arith.constant 0.000000e+00 : f32
    %9 = vector.broadcast %cst : f32 to vector<1x16x8xf32>
    %cst_3 = arith.constant 0.000000e+00 : f32
    %10 = vector.broadcast %cst_3 : f32 to vector<8x1x8xf32>
    %c0_4 = arith.constant 0 : index
    %c0_5 = arith.constant 0 : index
    %c0_6 = arith.constant 0 : index
    %11 = vector.load %arg5[%c0_4, %c0_5, %c0_6] : memref<10x16x8xf32, #tpu.memory_space<vmem>>, vector<1x16x8xf32>
    tpu.vector_store %arg5[%c0_4, %c0_5, %c0_6], %9 {strides = array<i32>} : memref<10x16x8xf32, #tpu.memory_space<vmem>>, vector<1x16x8xf32>,
    %c9 = arith.constant 9 : index
    %c0_7 = arith.constant 0 : index
    %c0_8 = arith.constant 0 : index
    %12 = vector.load %arg5[%c9, %c0_7, %c0_8] : memref<10x16x8xf32, #tpu.memory_space<vmem>>, vector<1x16x8xf32>
    tpu.vector_store %arg5[%c9, %c0_7, %c0_8], %9 {strides = array<i32>} : memref<10x16x8xf32, #tpu.memory_space<vmem>>, vector<1x16x8xf32>,
    %c1 = arith.constant 1 : index
    %c0_9 = arith.constant 0 : index
    %c0_10 = arith.constant 0 : index
    %13 = vector.load %arg5[%c1, %c0_9, %c0_10] : memref<10x16x8xf32, #tpu.memory_space<vmem>>, vector<8x1x8xf32>
    tpu.vector_store %arg5[%c1, %c0_9, %c0_10], %10 {strides = array<i32>} : memref<10x16x8xf32, #tpu.memory_space<vmem>>, vector<8x1x8xf32>,
    %c1_11 = arith.constant 1 : index
    %c9_12 = arith.constant 9 : index
    %c0_13 = arith.constant 0 : index
    %14 = vector.load %arg5[%c1_11, %c9_12, %c0_13] : memref<10x16x8xf32, #tpu.memory_space<vmem>>, vector<8x1x8xf32>
    tpu.vector_store %arg5[%c1_11, %c9_12, %c0_13], %10 {strides = array<i32>} : memref<10x16x8xf32, #tpu.memory_space<vmem>>, vector<8x1x8xf32>,
    %c1_14 = arith.constant 1 : index
    %c1_15 = arith.constant 1 : index
    %c0_16 = arith.constant 0 : index
    %15 = vector.load %arg5[%c1_14, %c1_15, %c0_16] : memref<10x16x8xf32, #tpu.memory_space<vmem>>, vector<8x8x8xf32>
    tpu.vector_store %arg5[%c1_14, %c1_15, %c0_16], %8 {strides = array<i32>} : memref<10x16x8xf32, #tpu.memory_space<vmem>>, vector<8x8x8xf32>,
    %c0_17 = arith.constant 0 : index
    %c0_18 = arith.constant 0 : index
    %c0_19 = arith.constant 0 : index
    %16 = vector.load %arg5[%c0_17, %c0_18, %c0_19] : memref<10x16x8xf32, #tpu.memory_space<vmem>>, vector<8x8x8xf32>
    %17 = vector.shape_cast %16 : vector<8x8x8xf32> to vector<64x8xf32>
    %18 = arith.truncf %17 : vector<64x8xf32> to vector<64x8xbf16>
    %c0_20 = arith.constant 0 : index
    %c0_21 = arith.constant 0 : index
    %c0_22 = arith.constant 0 : index
    %19 = vector.load %arg2[%c0_20, %c0_21, %c0_22] : memref<9x8x8xbf16, #tpu.memory_space<vmem>>, vector<1x8x8xbf16>
    %20 = vector.shape_cast %19 : vector<1x8x8xbf16> to vector<8x8xbf16>
    %cst_23 = arith.constant dense<0.000000e+00> : vector<64x8xf32>
    %21 = tpu.matmul %18, %20, %cst_23 {dimension_numbers = #tpu.dot_dimension_numbers<[1], [0], [0], [1], [0, 0, 1, 1], [], []>} : vector<64x8xbf16>, vector<8x8xbf16>, vector<64x8xf32> -> vector<64x8xf32>
    %c0_24 = arith.constant 0 : index
    %c1_25 = arith.constant 1 : index
    %c0_26 = arith.constant 0 : index
    %22 = vector.load %arg5[%c0_24, %c1_25, %c0_26] : memref<10x16x8xf32, #tpu.memory_space<vmem>>, vector<8x8x8xf32>
    %23 = vector.shape_cast %22 : vector<8x8x8xf32> to vector<64x8xf32>
    %24 = arith.truncf %23 : vector<64x8xf32> to vector<64x8xbf16>
    %c1_27 = arith.constant 1 : index
    %c0_28 = arith.constant 0 : index
    %c0_29 = arith.constant 0 : index
    %25 = vector.load %arg2[%c1_27, %c0_28, %c0_29] : memref<9x8x8xbf16, #tpu.memory_space<vmem>>, vector<1x8x8xbf16>
    %26 = vector.shape_cast %25 : vector<1x8x8xbf16> to vector<8x8xbf16>
    %cst_30 = arith.constant dense<0.000000e+00> : vector<64x8xf32>
    %27 = tpu.matmul %24, %26, %cst_30 {dimension_numbers = #tpu.dot_dimension_numbers<[1], [0], [0], [1], [0, 0, 1, 1], [], []>} : vector<64x8xbf16>, vector<8x8xbf16>, vector<64x8xf32> -> vector<64x8xf32>
    %28 = arith.addf %21, %27 : vector<64x8xf32>
    %c0_31 = arith.constant 0 : index
    %c2 = arith.constant 2 : index
    %c0_32 = arith.constant 0 : index
    %29 = vector.load %arg5[%c0_31, %c2, %c0_32] : memref<10x16x8xf32, #tpu.memory_space<vmem>>, vector<8x8x8xf32>
    %30 = vector.shape_cast %29 : vector<8x8x8xf32> to vector<64x8xf32>
    %31 = arith.truncf %30 : vector<64x8xf32> to vector<64x8xbf16>
    %c2_33 = arith.constant 2 : index
    %c0_34 = arith.constant 0 : index
    %c0_35 = arith.constant 0 : index
    %32 = vector.load %arg2[%c2_33, %c0_34, %c0_35] : memref<9x8x8xbf16, #tpu.memory_space<vmem>>, vector<1x8x8xbf16>
    %33 = vector.shape_cast %32 : vector<1x8x8xbf16> to vector<8x8xbf16>
    %cst_36 = arith.constant dense<0.000000e+00> : vector<64x8xf32>
    %34 = tpu.matmul %31, %33, %cst_36 {dimension_numbers = #tpu.dot_dimension_numbers<[1], [0], [0], [1], [0, 0, 1, 1], [], []>} : vector<64x8xbf16>, vector<8x8xbf16>, vector<64x8xf32> -> vector<64x8xf32>
    %35 = arith.addf %28, %34 : vector<64x8xf32>
    %c1_37 = arith.constant 1 : index
    %c0_38 = arith.constant 0 : index
    %c0_39 = arith.constant 0 : index
    %36 = vector.load %arg5[%c1_37, %c0_38, %c0_39] : memref<10x16x8xf32, #tpu.memory_space<vmem>>, vector<8x8x8xf32>
    %37 = vector.shape_cast %36 : vector<8x8x8xf32> to vector<64x8xf32>
    %38 = arith.truncf %37 : vector<64x8xf32> to vector<64x8xbf16>
    %c3 = arith.constant 3 : index
    %c0_40 = arith.constant 0 : index
    %c0_41 = arith.constant 0 : index
    %39 = vector.load %arg2[%c3, %c0_40, %c0_41] : memref<9x8x8xbf16, #tpu.memory_space<vmem>>, vector<1x8x8xbf16>
    %40 = vector.shape_cast %39 : vector<1x8x8xbf16> to vector<8x8xbf16>
    %cst_42 = arith.constant dense<0.000000e+00> : vector<64x8xf32>
    %41 = tpu.matmul %38, %40, %cst_42 {dimension_numbers = #tpu.dot_dimension_numbers<[1], [0], [0], [1], [0, 0, 1, 1], [], []>} : vector<64x8xbf16>, vector<8x8xbf16>, vector<64x8xf32> -> vector<64x8xf32>
    %42 = arith.addf %35, %41 : vector<64x8xf32>
    %c1_43 = arith.constant 1 : index
    %c1_44 = arith.constant 1 : index
    %c0_45 = arith.constant 0 : index
    %43 = vector.load %arg5[%c1_43, %c1_44, %c0_45] : memref<10x16x8xf32, #tpu.memory_space<vmem>>, vector<8x8x8xf32>
    %44 = vector.shape_cast %43 : vector<8x8x8xf32> to vector<64x8xf32>
    %45 = arith.truncf %44 : vector<64x8xf32> to vector<64x8xbf16>
    %c4 = arith.constant 4 : index
    %c0_46 = arith.constant 0 : index
    %c0_47 = arith.constant 0 : index
    %46 = vector.load %arg2[%c4, %c0_46, %c0_47] : memref<9x8x8xbf16, #tpu.memory_space<vmem>>, vector<1x8x8xbf16>
    %47 = vector.shape_cast %46 : vector<1x8x8xbf16> to vector<8x8xbf16>
    %cst_48 = arith.constant dense<0.000000e+00> : vector<64x8xf32>
    %48 = tpu.matmul %45, %47, %cst_48 {dimension_numbers = #tpu.dot_dimension_numbers<[1], [0], [0], [1], [0, 0, 1, 1], [], []>} : vector<64x8xbf16>, vector<8x8xbf16>, vector<64x8xf32> -> vector<64x8xf32>
    %49 = arith.addf %42, %48 : vector<64x8xf32>
    %c1_49 = arith.constant 1 : index
    %c2_50 = arith.constant 2 : index
    %c0_51 = arith.constant 0 : index
    %50 = vector.load %arg5[%c1_49, %c2_50, %c0_51] : memref<10x16x8xf32, #tpu.memory_space<vmem>>, vector<8x8x8xf32>
    %51 = vector.shape_cast %50 : vector<8x8x8xf32> to vector<64x8xf32>
    %52 = arith.truncf %51 : vector<64x8xf32> to vector<64x8xbf16>
    %c5 = arith.constant 5 : index
    %c0_52 = arith.constant 0 : index
    %c0_53 = arith.constant 0 : index
    %53 = vector.load %arg2[%c5, %c0_52, %c0_53] : memref<9x8x8xbf16, #tpu.memory_space<vmem>>, vector<1x8x8xbf16>
    %54 = vector.shape_cast %53 : vector<1x8x8xbf16> to vector<8x8xbf16>
    %cst_54 = arith.constant dense<0.000000e+00> : vector<64x8xf32>
    %55 = tpu.matmul %52, %54, %cst_54 {dimension_numbers = #tpu.dot_dimension_numbers<[1], [0], [0], [1], [0, 0, 1, 1], [], []>} : vector<64x8xbf16>, vector<8x8xbf16>, vector<64x8xf32> -> vector<64x8xf32>
    %56 = arith.addf %49, %55 : vector<64x8xf32>
    %c2_55 = arith.constant 2 : index
    %c0_56 = arith.constant 0 : index
    %c0_57 = arith.constant 0 : index
    %57 = vector.load %arg5[%c2_55, %c0_56, %c0_57] : memref<10x16x8xf32, #tpu.memory_space<vmem>>, vector<8x8x8xf32>
    %58 = vector.shape_cast %57 : vector<8x8x8xf32> to vector<64x8xf32>
    %59 = arith.truncf %58 : vector<64x8xf32> to vector<64x8xbf16>
    %c6 = arith.constant 6 : index
    %c0_58 = arith.constant 0 : index
    %c0_59 = arith.constant 0 : index
    %60 = vector.load %arg2[%c6, %c0_58, %c0_59] : memref<9x8x8xbf16, #tpu.memory_space<vmem>>, vector<1x8x8xbf16>
    %61 = vector.shape_cast %60 : vector<1x8x8xbf16> to vector<8x8xbf16>
    %cst_60 = arith.constant dense<0.000000e+00> : vector<64x8xf32>
    %62 = tpu.matmul %59, %61, %cst_60 {dimension_numbers = #tpu.dot_dimension_numbers<[1], [0], [0], [1], [0, 0, 1, 1], [], []>} : vector<64x8xbf16>, vector<8x8xbf16>, vector<64x8xf32> -> vector<64x8xf32>
    %63 = arith.addf %56, %62 : vector<64x8xf32>
    %c2_61 = arith.constant 2 : index
    %c1_62 = arith.constant 1 : index
    %c0_63 = arith.constant 0 : index
    %64 = vector.load %arg5[%c2_61, %c1_62, %c0_63] : memref<10x16x8xf32, #tpu.memory_space<vmem>>, vector<8x8x8xf32>
    %65 = vector.shape_cast %64 : vector<8x8x8xf32> to vector<64x8xf32>
    %66 = arith.truncf %65 : vector<64x8xf32> to vector<64x8xbf16>
    %c7 = arith.constant 7 : index
    %c0_64 = arith.constant 0 : index
    %c0_65 = arith.constant 0 : index
    %67 = vector.load %arg2[%c7, %c0_64, %c0_65] : memref<9x8x8xbf16, #tpu.memory_space<vmem>>, vector<1x8x8xbf16>
    %68 = vector.shape_cast %67 : vector<1x8x8xbf16> to vector<8x8xbf16>
    %cst_66 = arith.constant dense<0.000000e+00> : vector<64x8xf32>
    %69 = tpu.matmul %66, %68, %cst_66 {dimension_numbers = #tpu.dot_dimension_numbers<[1], [0], [0], [1], [0, 0, 1, 1], [], []>} : vector<64x8xbf16>, vector<8x8xbf16>, vector<64x8xf32> -> vector<64x8xf32>
    %70 = arith.addf %63, %69 : vector<64x8xf32>
    %c2_67 = arith.constant 2 : index
    %c2_68 = arith.constant 2 : index
    %c0_69 = arith.constant 0 : index
    %71 = vector.load %arg5[%c2_67, %c2_68, %c0_69] : memref<10x16x8xf32, #tpu.memory_space<vmem>>, vector<8x8x8xf32>
    %72 = vector.shape_cast %71 : vector<8x8x8xf32> to vector<64x8xf32>
    %73 = arith.truncf %72 : vector<64x8xf32> to vector<64x8xbf16>
    %c8 = arith.constant 8 : index
    %c0_70 = arith.constant 0 : index
    %c0_71 = arith.constant 0 : index
    %74 = vector.load %arg2[%c8, %c0_70, %c0_71] : memref<9x8x8xbf16, #tpu.memory_space<vmem>>, vector<1x8x8xbf16>
    %75 = vector.shape_cast %74 : vector<1x8x8xbf16> to vector<8x8xbf16>
    %cst_72 = arith.constant dense<0.000000e+00> : vector<64x8xf32>
    %76 = tpu.matmul %73, %75, %cst_72 {dimension_numbers = #tpu.dot_dimension_numbers<[1], [0], [0], [1], [0, 0, 1, 1], [], []>} : vector<64x8xbf16>, vector<8x8xbf16>, vector<64x8xf32> -> vector<64x8xf32>
    %77 = arith.addf %70, %76 : vector<64x8xf32>
    %78 = vector.shape_cast %77 : vector<64x8xf32> to vector<8x8x8xf32>
    %79 = arith.truncf %78 : vector<8x8x8xf32> to vector<8x8x8xbf16>
    %c0_73 = arith.constant 0 : index
    %c0_74 = arith.constant 0 : index
    %c0_75 = arith.constant 0 : index
    %80 = vector.load %arg3[%c0_73, %c0_74, %c0_75] : memref<8x8x8xbf16, #tpu.memory_space<vmem>>, vector<8x8x8xbf16>
    tpu.vector_store %arg3[%c0_73, %c0_74, %c0_75], %79 {strides = array<i32>} : memref<8x8x8xbf16, #tpu.memory_space<vmem>>, vector<8x8x8xbf16>,
    %cst_76 = arith.constant dense<0.000000e+00> : vector<8xf32>
    %81 = vector.multi_reduction <add>, %77, %cst_76 [0] : vector<64x8xf32> to vector<8xf32>
    %82 = vector.shape_cast %81 : vector<8xf32> to vector<1x8xf32>
    %cst_77 = arith.constant 1.562500e-02 : f32
    %83 = vector.broadcast %cst_77 : f32 to vector<1x8xf32>
    %84 = arith.mulf %82, %83 : vector<1x8xf32>
    %85 = vector.broadcast %84 : vector<1x8xf32> to vector<64x8xf32>
    %86 = arith.subf %77, %85 : vector<64x8xf32>
    %c0_78 = arith.constant 0 : index
    %c0_79 = arith.constant 0 : index
    %c0_80 = arith.constant 0 : index
    %87 = vector.load %arg4[%c0_78, %c0_79, %c0_80] : memref<1x2x8xf32, #tpu.memory_space<vmem>>, vector<1x1x8xf32>
    %88 = vector.shape_cast %87 : vector<1x1x8xf32> to vector<1x8xf32>
    %89 = vector.shape_cast %84 : vector<1x8xf32> to vector<1x1x8xf32>
    tpu.vector_store %arg4[%c0_78, %c0_79, %c0_80], %89 {strides = array<i32>} : memref<1x2x8xf32, #tpu.memory_space<vmem>>, vector<1x1x8xf32>,
    %90 = arith.mulf %86, %86 : vector<64x8xf32>
    %cst_81 = arith.constant dense<0.000000e+00> : vector<8xf32>
    %91 = vector.multi_reduction <add>, %90, %cst_81 [0] : vector<64x8xf32> to vector<8xf32>
    %92 = vector.shape_cast %91 : vector<8xf32> to vector<1x8xf32>
    %c0_82 = arith.constant 0 : index
    %c1_83 = arith.constant 1 : index
    %c0_84 = arith.constant 0 : index
    %93 = vector.load %arg4[%c0_82, %c1_83, %c0_84] : memref<1x2x8xf32, #tpu.memory_space<vmem>>, vector<1x1x8xf32>
    %94 = vector.shape_cast %93 : vector<1x1x8xf32> to vector<1x8xf32>
    %95 = vector.shape_cast %92 : vector<1x8xf32> to vector<1x1x8xf32>
    tpu.vector_store %arg4[%c0_82, %c1_83, %c0_84], %95 {strides = array<i32>} : memref<1x2x8xf32, #tpu.memory_space<vmem>>, vector<1x1x8xf32>,
    return
  }
  func.func @transform_0(%arg0: i32) -> (i32, i32, i32, i32) {
    %c0_i32 = arith.constant 0 : i32
    %c0_i32_0 = arith.constant 0 : i32
    %c0_i32_1 = arith.constant 0 : i32
    %c0_i32_2 = arith.constant 0 : i32
    return %arg0, %c0_i32, %c0_i32_0, %c0_i32_1 : i32, i32, i32, i32
  }
  func.func @transform_1(%arg0: i32) -> (i32, i32, i32) {
    %c0_i32 = arith.constant 0 : i32
    %c0_i32_0 = arith.constant 0 : i32
    %c0_i32_1 = arith.constant 0 : i32
    %c0_i32_2 = arith.constant 0 : i32
    return %c0_i32, %c0_i32_0, %c0_i32_1 : i32, i32, i32
  }
  func.func @transform_2(%arg0: i32) -> (i32, i32, i32) {
    %c0_i32 = arith.constant 0 : i32
    %c0_i32_0 = arith.constant 0 : i32
    %c0_i32_1 = arith.constant 0 : i32
    return %arg0, %c0_i32, %c0_i32_0 : i32, i32, i32
  }
  func.func @transform_3(%arg0: i32) -> (i32, i32, i32) {
    %c0_i32 = arith.constant 0 : i32
    %c0_i32_0 = arith.constant 0 : i32
    %c0_i32_1 = arith.constant 0 : i32
    return %arg0, %c0_i32, %c0_i32_0 : i32, i32, i32
  }
}

module attributes {stable_mosaic.version = 11 : i64} {
  func.func @bn_relu_kernel(%arg0: i32, %arg1: memref<8x8x8xbf16, #tpu.memory_space<vmem>>, %arg2: memref<1x8xf32, #tpu.memory_space<vmem>>, %arg3: memref<1x8xf32, #tpu.memory_space<vmem>>, %arg4: memref<8x8x8xf32, #tpu.memory_space<vmem>>) attributes {dimension_semantics = [#tpu.dimension_semantics<parallel>], iteration_bounds = array<i64: 2>, scalar_prefetch = 0 : i64, scratch_operands = 0 : i64, tpu.core_type = #tpu.core_type<tc>, window_params = [{transform_indices = @transform_0, window_bounds = array<i64: 8, 8, 8>}, {pipeline_mode = #tpu.pipeline_mode<synchronous>, transform_indices = @transform_1, window_bounds = array<i64: 1, 8>}, {pipeline_mode = #tpu.pipeline_mode<synchronous>, transform_indices = @transform_2, window_bounds = array<i64: 1, 8>}, {transform_indices = @transform_3, window_bounds = array<i64: 8, 8, 8>}]} {
    %c0 = arith.constant 0 : index
    %c0_0 = arith.constant 0 : index
    %c0_1 = arith.constant 0 : index
    %0 = vector.load %arg1[%c0, %c0_0, %c0_1] : memref<8x8x8xbf16, #tpu.memory_space<vmem>>, vector<8x8x8xbf16>
    %1 = arith.extf %0 : vector<8x8x8xbf16> to vector<8x8x8xf32>
    %c0_2 = arith.constant 0 : index
    %c0_3 = arith.constant 0 : index
    %2 = vector.load %arg2[%c0_2, %c0_3] : memref<1x8xf32, #tpu.memory_space<vmem>>, vector<1x8xf32>
    %3 = vector.shape_cast %2 : vector<1x8xf32> to vector<1x1x8xf32>
    %4 = vector.broadcast %3 : vector<1x1x8xf32> to vector<8x8x8xf32>
    %5 = arith.mulf %1, %4 : vector<8x8x8xf32>
    %c0_4 = arith.constant 0 : index
    %c0_5 = arith.constant 0 : index
    %6 = vector.load %arg3[%c0_4, %c0_5] : memref<1x8xf32, #tpu.memory_space<vmem>>, vector<1x8xf32>
    %7 = vector.shape_cast %6 : vector<1x8xf32> to vector<1x1x8xf32>
    %8 = vector.broadcast %7 : vector<1x1x8xf32> to vector<8x8x8xf32>
    %9 = arith.addf %5, %8 : vector<8x8x8xf32>
    %cst = arith.constant 0.000000e+00 : f32
    %10 = vector.broadcast %cst : f32 to vector<8x8x8xf32>
    %11 = arith.maximumf %9, %10 : vector<8x8x8xf32>
    %c0_6 = arith.constant 0 : index
    %c0_7 = arith.constant 0 : index
    %c0_8 = arith.constant 0 : index
    %12 = vector.load %arg4[%c0_6, %c0_7, %c0_8] : memref<8x8x8xf32, #tpu.memory_space<vmem>>, vector<8x8x8xf32>
    tpu.vector_store %arg4[%c0_6, %c0_7, %c0_8], %11 {strides = array<i32>} : memref<8x8x8xf32, #tpu.memory_space<vmem>>, vector<8x8x8xf32>,
    return
  }
  func.func @transform_0(%arg0: i32) -> (i32, i32, i32) {
    %c0_i32 = arith.constant 0 : i32
    %c0_i32_0 = arith.constant 0 : i32
    %c0_i32_1 = arith.constant 0 : i32
    return %arg0, %c0_i32, %c0_i32_0 : i32, i32, i32
  }
  func.func @transform_1(%arg0: i32) -> (i32, i32) {
    %c0_i32 = arith.constant 0 : i32
    %c0_i32_0 = arith.constant 0 : i32
    %c0_i32_1 = arith.constant 0 : i32
    return %c0_i32, %c0_i32_0 : i32, i32
  }
  func.func @transform_2(%arg0: i32) -> (i32, i32) {
    %c0_i32 = arith.constant 0 : i32
    %c0_i32_0 = arith.constant 0 : i32
    %c0_i32_1 = arith.constant 0 : i32
    return %c0_i32, %c0_i32_0 : i32, i32
  }
  func.func @transform_3(%arg0: i32) -> (i32, i32, i32) {
    %c0_i32 = arith.constant 0 : i32
    %c0_i32_0 = arith.constant 0 : i32
    %c0_i32_1 = arith.constant 0 : i32
    return %arg0, %c0_i32, %c0_i32_0 : i32, i32, i32
  }
}

module attributes {stable_mosaic.version = 11 : i64} {
  func.func @bn_relu_conv2_kernel(%arg0: i32, %arg1: memref<8x8x8xbf16, #tpu.memory_space<vmem>>, %arg2: memref<1x8xf32, #tpu.memory_space<vmem>>, %arg3: memref<1x8xf32, #tpu.memory_space<vmem>>, %arg4: memref<9x8x8xbf16, #tpu.memory_space<vmem>>, %arg5: memref<8x8x8xbf16, #tpu.memory_space<vmem>>, %arg6: memref<1x2x8xf32, #tpu.memory_space<vmem>>, %arg7: memref<10x16x8xf32, #tpu.memory_space<vmem>>) attributes {dimension_semantics = [#tpu.dimension_semantics<parallel>], iteration_bounds = array<i64: 2>, scalar_prefetch = 0 : i64, scratch_operands = 1 : i64, tpu.core_type = #tpu.core_type<tc>, window_params = [{transform_indices = @transform_0, window_bounds = array<i64: 8, 8, 8>}, {pipeline_mode = #tpu.pipeline_mode<synchronous>, transform_indices = @transform_1, window_bounds = array<i64: 1, 8>}, {pipeline_mode = #tpu.pipeline_mode<synchronous>, transform_indices = @transform_2, window_bounds = array<i64: 1, 8>}, {pipeline_mode = #tpu.pipeline_mode<synchronous>, transform_indices = @transform_3, window_bounds = array<i64: 9, 8, 8>}, {transform_indices = @transform_4, window_bounds = array<i64: 8, 8, 8>}, {transform_indices = @transform_5, window_bounds = array<i64: 1, 2, 8>}]} {
    %c0 = arith.constant 0 : index
    %c0_0 = arith.constant 0 : index
    %c0_1 = arith.constant 0 : index
    %0 = vector.load %arg1[%c0, %c0_0, %c0_1] : memref<8x8x8xbf16, #tpu.memory_space<vmem>>, vector<8x8x8xbf16>
    %1 = arith.extf %0 : vector<8x8x8xbf16> to vector<8x8x8xf32>
    %c0_2 = arith.constant 0 : index
    %c0_3 = arith.constant 0 : index
    %2 = vector.load %arg2[%c0_2, %c0_3] : memref<1x8xf32, #tpu.memory_space<vmem>>, vector<1x8xf32>
    %3 = vector.shape_cast %2 : vector<1x8xf32> to vector<1x1x8xf32>
    %4 = vector.broadcast %3 : vector<1x1x8xf32> to vector<8x8x8xf32>
    %5 = arith.mulf %1, %4 : vector<8x8x8xf32>
    %c0_4 = arith.constant 0 : index
    %c0_5 = arith.constant 0 : index
    %6 = vector.load %arg3[%c0_4, %c0_5] : memref<1x8xf32, #tpu.memory_space<vmem>>, vector<1x8xf32>
    %7 = vector.shape_cast %6 : vector<1x8xf32> to vector<1x1x8xf32>
    %8 = vector.broadcast %7 : vector<1x1x8xf32> to vector<8x8x8xf32>
    %9 = arith.addf %5, %8 : vector<8x8x8xf32>
    %cst = arith.constant 0.000000e+00 : f32
    %10 = vector.broadcast %cst : f32 to vector<8x8x8xf32>
    %11 = arith.maximumf %9, %10 : vector<8x8x8xf32>
    %cst_6 = arith.constant 0.000000e+00 : f32
    %12 = vector.broadcast %cst_6 : f32 to vector<1x16x8xf32>
    %cst_7 = arith.constant 0.000000e+00 : f32
    %13 = vector.broadcast %cst_7 : f32 to vector<8x1x8xf32>
    %c0_8 = arith.constant 0 : index
    %c0_9 = arith.constant 0 : index
    %c0_10 = arith.constant 0 : index
    %14 = vector.load %arg7[%c0_8, %c0_9, %c0_10] : memref<10x16x8xf32, #tpu.memory_space<vmem>>, vector<1x16x8xf32>
    tpu.vector_store %arg7[%c0_8, %c0_9, %c0_10], %12 {strides = array<i32>} : memref<10x16x8xf32, #tpu.memory_space<vmem>>, vector<1x16x8xf32>,
    %c9 = arith.constant 9 : index
    %c0_11 = arith.constant 0 : index
    %c0_12 = arith.constant 0 : index
    %15 = vector.load %arg7[%c9, %c0_11, %c0_12] : memref<10x16x8xf32, #tpu.memory_space<vmem>>, vector<1x16x8xf32>
    tpu.vector_store %arg7[%c9, %c0_11, %c0_12], %12 {strides = array<i32>} : memref<10x16x8xf32, #tpu.memory_space<vmem>>, vector<1x16x8xf32>,
    %c1 = arith.constant 1 : index
    %c0_13 = arith.constant 0 : index
    %c0_14 = arith.constant 0 : index
    %16 = vector.load %arg7[%c1, %c0_13, %c0_14] : memref<10x16x8xf32, #tpu.memory_space<vmem>>, vector<8x1x8xf32>
    tpu.vector_store %arg7[%c1, %c0_13, %c0_14], %13 {strides = array<i32>} : memref<10x16x8xf32, #tpu.memory_space<vmem>>, vector<8x1x8xf32>,
    %c1_15 = arith.constant 1 : index
    %c9_16 = arith.constant 9 : index
    %c0_17 = arith.constant 0 : index
    %17 = vector.load %arg7[%c1_15, %c9_16, %c0_17] : memref<10x16x8xf32, #tpu.memory_space<vmem>>, vector<8x1x8xf32>
    tpu.vector_store %arg7[%c1_15, %c9_16, %c0_17], %13 {strides = array<i32>} : memref<10x16x8xf32, #tpu.memory_space<vmem>>, vector<8x1x8xf32>,
    %c1_18 = arith.constant 1 : index
    %c1_19 = arith.constant 1 : index
    %c0_20 = arith.constant 0 : index
    %18 = vector.load %arg7[%c1_18, %c1_19, %c0_20] : memref<10x16x8xf32, #tpu.memory_space<vmem>>, vector<8x8x8xf32>
    tpu.vector_store %arg7[%c1_18, %c1_19, %c0_20], %11 {strides = array<i32>} : memref<10x16x8xf32, #tpu.memory_space<vmem>>, vector<8x8x8xf32>,
    %c0_21 = arith.constant 0 : index
    %c0_22 = arith.constant 0 : index
    %c0_23 = arith.constant 0 : index
    %19 = vector.load %arg7[%c0_21, %c0_22, %c0_23] : memref<10x16x8xf32, #tpu.memory_space<vmem>>, vector<8x8x8xf32>
    %20 = vector.shape_cast %19 : vector<8x8x8xf32> to vector<64x8xf32>
    %21 = arith.truncf %20 : vector<64x8xf32> to vector<64x8xbf16>
    %c0_24 = arith.constant 0 : index
    %c0_25 = arith.constant 0 : index
    %c0_26 = arith.constant 0 : index
    %22 = vector.load %arg4[%c0_24, %c0_25, %c0_26] : memref<9x8x8xbf16, #tpu.memory_space<vmem>>, vector<1x8x8xbf16>
    %23 = vector.shape_cast %22 : vector<1x8x8xbf16> to vector<8x8xbf16>
    %cst_27 = arith.constant dense<0.000000e+00> : vector<64x8xf32>
    %24 = tpu.matmul %21, %23, %cst_27 {dimension_numbers = #tpu.dot_dimension_numbers<[1], [0], [0], [1], [0, 0, 1, 1], [], []>} : vector<64x8xbf16>, vector<8x8xbf16>, vector<64x8xf32> -> vector<64x8xf32>
    %c0_28 = arith.constant 0 : index
    %c1_29 = arith.constant 1 : index
    %c0_30 = arith.constant 0 : index
    %25 = vector.load %arg7[%c0_28, %c1_29, %c0_30] : memref<10x16x8xf32, #tpu.memory_space<vmem>>, vector<8x8x8xf32>
    %26 = vector.shape_cast %25 : vector<8x8x8xf32> to vector<64x8xf32>
    %27 = arith.truncf %26 : vector<64x8xf32> to vector<64x8xbf16>
    %c1_31 = arith.constant 1 : index
    %c0_32 = arith.constant 0 : index
    %c0_33 = arith.constant 0 : index
    %28 = vector.load %arg4[%c1_31, %c0_32, %c0_33] : memref<9x8x8xbf16, #tpu.memory_space<vmem>>, vector<1x8x8xbf16>
    %29 = vector.shape_cast %28 : vector<1x8x8xbf16> to vector<8x8xbf16>
    %cst_34 = arith.constant dense<0.000000e+00> : vector<64x8xf32>
    %30 = tpu.matmul %27, %29, %cst_34 {dimension_numbers = #tpu.dot_dimension_numbers<[1], [0], [0], [1], [0, 0, 1, 1], [], []>} : vector<64x8xbf16>, vector<8x8xbf16>, vector<64x8xf32> -> vector<64x8xf32>
    %31 = arith.addf %24, %30 : vector<64x8xf32>
    %c0_35 = arith.constant 0 : index
    %c2 = arith.constant 2 : index
    %c0_36 = arith.constant 0 : index
    %32 = vector.load %arg7[%c0_35, %c2, %c0_36] : memref<10x16x8xf32, #tpu.memory_space<vmem>>, vector<8x8x8xf32>
    %33 = vector.shape_cast %32 : vector<8x8x8xf32> to vector<64x8xf32>
    %34 = arith.truncf %33 : vector<64x8xf32> to vector<64x8xbf16>
    %c2_37 = arith.constant 2 : index
    %c0_38 = arith.constant 0 : index
    %c0_39 = arith.constant 0 : index
    %35 = vector.load %arg4[%c2_37, %c0_38, %c0_39] : memref<9x8x8xbf16, #tpu.memory_space<vmem>>, vector<1x8x8xbf16>
    %36 = vector.shape_cast %35 : vector<1x8x8xbf16> to vector<8x8xbf16>
    %cst_40 = arith.constant dense<0.000000e+00> : vector<64x8xf32>
    %37 = tpu.matmul %34, %36, %cst_40 {dimension_numbers = #tpu.dot_dimension_numbers<[1], [0], [0], [1], [0, 0, 1, 1], [], []>} : vector<64x8xbf16>, vector<8x8xbf16>, vector<64x8xf32> -> vector<64x8xf32>
    %38 = arith.addf %31, %37 : vector<64x8xf32>
    %c1_41 = arith.constant 1 : index
    %c0_42 = arith.constant 0 : index
    %c0_43 = arith.constant 0 : index
    %39 = vector.load %arg7[%c1_41, %c0_42, %c0_43] : memref<10x16x8xf32, #tpu.memory_space<vmem>>, vector<8x8x8xf32>
    %40 = vector.shape_cast %39 : vector<8x8x8xf32> to vector<64x8xf32>
    %41 = arith.truncf %40 : vector<64x8xf32> to vector<64x8xbf16>
    %c3 = arith.constant 3 : index
    %c0_44 = arith.constant 0 : index
    %c0_45 = arith.constant 0 : index
    %42 = vector.load %arg4[%c3, %c0_44, %c0_45] : memref<9x8x8xbf16, #tpu.memory_space<vmem>>, vector<1x8x8xbf16>
    %43 = vector.shape_cast %42 : vector<1x8x8xbf16> to vector<8x8xbf16>
    %cst_46 = arith.constant dense<0.000000e+00> : vector<64x8xf32>
    %44 = tpu.matmul %41, %43, %cst_46 {dimension_numbers = #tpu.dot_dimension_numbers<[1], [0], [0], [1], [0, 0, 1, 1], [], []>} : vector<64x8xbf16>, vector<8x8xbf16>, vector<64x8xf32> -> vector<64x8xf32>
    %45 = arith.addf %38, %44 : vector<64x8xf32>
    %c1_47 = arith.constant 1 : index
    %c1_48 = arith.constant 1 : index
    %c0_49 = arith.constant 0 : index
    %46 = vector.load %arg7[%c1_47, %c1_48, %c0_49] : memref<10x16x8xf32, #tpu.memory_space<vmem>>, vector<8x8x8xf32>
    %47 = vector.shape_cast %46 : vector<8x8x8xf32> to vector<64x8xf32>
    %48 = arith.truncf %47 : vector<64x8xf32> to vector<64x8xbf16>
    %c4 = arith.constant 4 : index
    %c0_50 = arith.constant 0 : index
    %c0_51 = arith.constant 0 : index
    %49 = vector.load %arg4[%c4, %c0_50, %c0_51] : memref<9x8x8xbf16, #tpu.memory_space<vmem>>, vector<1x8x8xbf16>
    %50 = vector.shape_cast %49 : vector<1x8x8xbf16> to vector<8x8xbf16>
    %cst_52 = arith.constant dense<0.000000e+00> : vector<64x8xf32>
    %51 = tpu.matmul %48, %50, %cst_52 {dimension_numbers = #tpu.dot_dimension_numbers<[1], [0], [0], [1], [0, 0, 1, 1], [], []>} : vector<64x8xbf16>, vector<8x8xbf16>, vector<64x8xf32> -> vector<64x8xf32>
    %52 = arith.addf %45, %51 : vector<64x8xf32>
    %c1_53 = arith.constant 1 : index
    %c2_54 = arith.constant 2 : index
    %c0_55 = arith.constant 0 : index
    %53 = vector.load %arg7[%c1_53, %c2_54, %c0_55] : memref<10x16x8xf32, #tpu.memory_space<vmem>>, vector<8x8x8xf32>
    %54 = vector.shape_cast %53 : vector<8x8x8xf32> to vector<64x8xf32>
    %55 = arith.truncf %54 : vector<64x8xf32> to vector<64x8xbf16>
    %c5 = arith.constant 5 : index
    %c0_56 = arith.constant 0 : index
    %c0_57 = arith.constant 0 : index
    %56 = vector.load %arg4[%c5, %c0_56, %c0_57] : memref<9x8x8xbf16, #tpu.memory_space<vmem>>, vector<1x8x8xbf16>
    %57 = vector.shape_cast %56 : vector<1x8x8xbf16> to vector<8x8xbf16>
    %cst_58 = arith.constant dense<0.000000e+00> : vector<64x8xf32>
    %58 = tpu.matmul %55, %57, %cst_58 {dimension_numbers = #tpu.dot_dimension_numbers<[1], [0], [0], [1], [0, 0, 1, 1], [], []>} : vector<64x8xbf16>, vector<8x8xbf16>, vector<64x8xf32> -> vector<64x8xf32>
    %59 = arith.addf %52, %58 : vector<64x8xf32>
    %c2_59 = arith.constant 2 : index
    %c0_60 = arith.constant 0 : index
    %c0_61 = arith.constant 0 : index
    %60 = vector.load %arg7[%c2_59, %c0_60, %c0_61] : memref<10x16x8xf32, #tpu.memory_space<vmem>>, vector<8x8x8xf32>
    %61 = vector.shape_cast %60 : vector<8x8x8xf32> to vector<64x8xf32>
    %62 = arith.truncf %61 : vector<64x8xf32> to vector<64x8xbf16>
    %c6 = arith.constant 6 : index
    %c0_62 = arith.constant 0 : index
    %c0_63 = arith.constant 0 : index
    %63 = vector.load %arg4[%c6, %c0_62, %c0_63] : memref<9x8x8xbf16, #tpu.memory_space<vmem>>, vector<1x8x8xbf16>
    %64 = vector.shape_cast %63 : vector<1x8x8xbf16> to vector<8x8xbf16>
    %cst_64 = arith.constant dense<0.000000e+00> : vector<64x8xf32>
    %65 = tpu.matmul %62, %64, %cst_64 {dimension_numbers = #tpu.dot_dimension_numbers<[1], [0], [0], [1], [0, 0, 1, 1], [], []>} : vector<64x8xbf16>, vector<8x8xbf16>, vector<64x8xf32> -> vector<64x8xf32>
    %66 = arith.addf %59, %65 : vector<64x8xf32>
    %c2_65 = arith.constant 2 : index
    %c1_66 = arith.constant 1 : index
    %c0_67 = arith.constant 0 : index
    %67 = vector.load %arg7[%c2_65, %c1_66, %c0_67] : memref<10x16x8xf32, #tpu.memory_space<vmem>>, vector<8x8x8xf32>
    %68 = vector.shape_cast %67 : vector<8x8x8xf32> to vector<64x8xf32>
    %69 = arith.truncf %68 : vector<64x8xf32> to vector<64x8xbf16>
    %c7 = arith.constant 7 : index
    %c0_68 = arith.constant 0 : index
    %c0_69 = arith.constant 0 : index
    %70 = vector.load %arg4[%c7, %c0_68, %c0_69] : memref<9x8x8xbf16, #tpu.memory_space<vmem>>, vector<1x8x8xbf16>
    %71 = vector.shape_cast %70 : vector<1x8x8xbf16> to vector<8x8xbf16>
    %cst_70 = arith.constant dense<0.000000e+00> : vector<64x8xf32>
    %72 = tpu.matmul %69, %71, %cst_70 {dimension_numbers = #tpu.dot_dimension_numbers<[1], [0], [0], [1], [0, 0, 1, 1], [], []>} : vector<64x8xbf16>, vector<8x8xbf16>, vector<64x8xf32> -> vector<64x8xf32>
    %73 = arith.addf %66, %72 : vector<64x8xf32>
    %c2_71 = arith.constant 2 : index
    %c2_72 = arith.constant 2 : index
    %c0_73 = arith.constant 0 : index
    %74 = vector.load %arg7[%c2_71, %c2_72, %c0_73] : memref<10x16x8xf32, #tpu.memory_space<vmem>>, vector<8x8x8xf32>
    %75 = vector.shape_cast %74 : vector<8x8x8xf32> to vector<64x8xf32>
    %76 = arith.truncf %75 : vector<64x8xf32> to vector<64x8xbf16>
    %c8 = arith.constant 8 : index
    %c0_74 = arith.constant 0 : index
    %c0_75 = arith.constant 0 : index
    %77 = vector.load %arg4[%c8, %c0_74, %c0_75] : memref<9x8x8xbf16, #tpu.memory_space<vmem>>, vector<1x8x8xbf16>
    %78 = vector.shape_cast %77 : vector<1x8x8xbf16> to vector<8x8xbf16>
    %cst_76 = arith.constant dense<0.000000e+00> : vector<64x8xf32>
    %79 = tpu.matmul %76, %78, %cst_76 {dimension_numbers = #tpu.dot_dimension_numbers<[1], [0], [0], [1], [0, 0, 1, 1], [], []>} : vector<64x8xbf16>, vector<8x8xbf16>, vector<64x8xf32> -> vector<64x8xf32>
    %80 = arith.addf %73, %79 : vector<64x8xf32>
    %81 = vector.shape_cast %80 : vector<64x8xf32> to vector<8x8x8xf32>
    %82 = arith.truncf %81 : vector<8x8x8xf32> to vector<8x8x8xbf16>
    %c0_77 = arith.constant 0 : index
    %c0_78 = arith.constant 0 : index
    %c0_79 = arith.constant 0 : index
    %83 = vector.load %arg5[%c0_77, %c0_78, %c0_79] : memref<8x8x8xbf16, #tpu.memory_space<vmem>>, vector<8x8x8xbf16>
    tpu.vector_store %arg5[%c0_77, %c0_78, %c0_79], %82 {strides = array<i32>} : memref<8x8x8xbf16, #tpu.memory_space<vmem>>, vector<8x8x8xbf16>,
    %cst_80 = arith.constant dense<0.000000e+00> : vector<8xf32>
    %84 = vector.multi_reduction <add>, %80, %cst_80 [0] : vector<64x8xf32> to vector<8xf32>
    %85 = vector.shape_cast %84 : vector<8xf32> to vector<1x8xf32>
    %cst_81 = arith.constant 1.562500e-02 : f32
    %86 = vector.broadcast %cst_81 : f32 to vector<1x8xf32>
    %87 = arith.mulf %85, %86 : vector<1x8xf32>
    %88 = vector.broadcast %87 : vector<1x8xf32> to vector<64x8xf32>
    %89 = arith.subf %80, %88 : vector<64x8xf32>
    %c0_82 = arith.constant 0 : index
    %c0_83 = arith.constant 0 : index
    %c0_84 = arith.constant 0 : index
    %90 = vector.load %arg6[%c0_82, %c0_83, %c0_84] : memref<1x2x8xf32, #tpu.memory_space<vmem>>, vector<1x1x8xf32>
    %91 = vector.shape_cast %90 : vector<1x1x8xf32> to vector<1x8xf32>
    %92 = vector.shape_cast %87 : vector<1x8xf32> to vector<1x1x8xf32>
    tpu.vector_store %arg6[%c0_82, %c0_83, %c0_84], %92 {strides = array<i32>} : memref<1x2x8xf32, #tpu.memory_space<vmem>>, vector<1x1x8xf32>,
    %93 = arith.mulf %89, %89 : vector<64x8xf32>
    %cst_85 = arith.constant dense<0.000000e+00> : vector<8xf32>
    %94 = vector.multi_reduction <add>, %93, %cst_85 [0] : vector<64x8xf32> to vector<8xf32>
    %95 = vector.shape_cast %94 : vector<8xf32> to vector<1x8xf32>
    %c0_86 = arith.constant 0 : index
    %c1_87 = arith.constant 1 : index
    %c0_88 = arith.constant 0 : index
    %96 = vector.load %arg6[%c0_86, %c1_87, %c0_88] : memref<1x2x8xf32, #tpu.memory_space<vmem>>, vector<1x1x8xf32>
    %97 = vector.shape_cast %96 : vector<1x1x8xf32> to vector<1x8xf32>
    %98 = vector.shape_cast %95 : vector<1x8xf32> to vector<1x1x8xf32>
    tpu.vector_store %arg6[%c0_86, %c1_87, %c0_88], %98 {strides = array<i32>} : memref<1x2x8xf32, #tpu.memory_space<vmem>>, vector<1x1x8xf32>,
    return
  }
  func.func @transform_0(%arg0: i32) -> (i32, i32, i32) {
    %c0_i32 = arith.constant 0 : i32
    %c0_i32_0 = arith.constant 0 : i32
    %c0_i32_1 = arith.constant 0 : i32
    return %arg0, %c0_i32, %c0_i32_0 : i32, i32, i32
  }
  func.func @transform_1(%arg0: i32) -> (i32, i32) {
    %c0_i32 = arith.constant 0 : i32
    %c0_i32_0 = arith.constant 0 : i32
    %c0_i32_1 = arith.constant 0 : i32
    return %c0_i32, %c0_i32_0 : i32, i32
  }
  func.func @transform_2(%arg0: i32) -> (i32, i32) {
    %c0_i32 = arith.constant 0 : i32
    %c0_i32_0 = arith.constant 0 : i32
    %c0_i32_1 = arith.constant 0 : i32
    return %c0_i32, %c0_i32_0 : i32, i32
  }
  func.func @transform_3(%arg0: i32) -> (i32, i32, i32) {
    %c0_i32 = arith.constant 0 : i32
    %c0_i32_0 = arith.constant 0 : i32
    %c0_i32_1 = arith.constant 0 : i32
    %c0_i32_2 = arith.constant 0 : i32
    return %c0_i32, %c0_i32_0, %c0_i32_1 : i32, i32, i32
  }
  func.func @transform_4(%arg0: i32) -> (i32, i32, i32) {
    %c0_i32 = arith.constant 0 : i32
    %c0_i32_0 = arith.constant 0 : i32
    %c0_i32_1 = arith.constant 0 : i32
    return %arg0, %c0_i32, %c0_i32_0 : i32, i32, i32
  }
  func.func @transform_5(%arg0: i32) -> (i32, i32, i32) {
    %c0_i32 = arith.constant 0 : i32
    %c0_i32_0 = arith.constant 0 : i32
    %c0_i32_1 = arith.constant 0 : i32
    return %arg0, %c0_i32, %c0_i32_0 : i32, i32, i32
  }
}

</mosaic_0001>

<llo_original>
// kernel: down_forward.5
$region0: #{down_forward.5}
  #allocation0 [shape = 'u32[]', space=smem, size = 0x4, offset = 0x4, fixed_abs, tag = 'smem constant byte address 0x4 - core index']
  #allocation1 [shape = 'u32[144,128]{1,0:T(1,128)}', space=vmem, size = 0x12000, scoped, tag = 'internal scratch']
  %s0 = inlined_call_operand.vmem [shape: bf16[16,8,8], index: 0, kind: input, shape index: {}]
  %s1 = inlined_call_operand.vmem [shape: f32[1,8], index: 1, kind: input, shape index: {}]
  %s2 = inlined_call_operand.vmem [shape: f32[1,8], index: 2, kind: input, shape index: {}]
  %s3 = inlined_call_operand.vmem [shape: f32[16,8,8], index: 3, kind: output, shape index: {}]
  %s4 = sld [smem:[#allocation0]]
  $region45: #{down_forward.5} parent=0
    _
  %s6 = ssub.s32 1, %s4
  %s7 = scalar_select 0, %s6, %s4
  loop: start=0, step=1, limit=4
  $region2: #{down_forward.5} parent=0 // loop_pre_header
    _
  $region3: #{down_forward.5} parent=0 // loop_header
    %s9 = sphi 0, %s13
    %p10 = scmp.ge.s32.totalorder %s9, 4
    %s19 = sphi 0, %s21
    %s22 = sphi 0, %s19
    %s23 = sphi 0, %s22
    %s39 = sphi 0, %s23
    %s43 = sphi 0, %s43
    %s45 = sphi 0, %s43
    %s46 = sphi 0, %s45
    %s60 = sphi 0, %s46
    %s64 = sphi 0, %s64
    %s66 = sphi 0, %s64
    %s67 = sphi 0, %s66
    %s81 = sphi 0, %s67
    %s87 = sphi 0, %s89
    %s90 = sphi 0, %s87
    %s91 = sphi 0, %s90
    %s107 = sphi 0, %s91
  $region4: #{down_forward.5} parent=0 // loop_header_branch
    %12 = sbr.rel (%p10) target = $region8
  $region5: #{down_forward.5} parent=0 // loop_body
    %s14 = ssub.s32 %s9, 1
    %s15 = ssub.s32 %s9, 2
    %s16 = sadd.s32 %s9, 1
    %s17 = ssub.s32 %s9, %s16
    %p18 = scmp.eq.s32.totalorder %s17, 0
    %s20 = sadd.s32 %s19, 1
    %s21 = scalar_select %p18, %s19, %s20
    %p24 = pneg %p18
    %p25 = scmp.eq.s32.totalorder %s9, 1
    %p26 = por %p24, %p25
    %p27 = scmp.ne.s32.totalorder %s19, %s22
    %p28 = scmp.eq.s32.totalorder %s9, 0
    %p29 = por %p27, %p28
    %p30 = scmp.ne.s32.totalorder %s19, %s22
    %p31 = scmp.eq.s32.totalorder %s14, 1
    %p32 = por %p30, %p31
    %p33 = scmp.ne.s32.totalorder %s22, %s23
    %p34 = scmp.eq.s32.totalorder %s14, 0
    %p35 = por %p33, %p34
    %p36 = scmp.ne.s32.totalorder %s22, %s23
    %p37 = scmp.eq.s32.totalorder %s15, 1
    %p38 = por %p36, %p37
    %p40 = scmp.ne.s32.totalorder %s23, %s39
    %p41 = scmp.eq.s32.totalorder %s15, 0
    %p42 = por %p40, %p41
    %s44 = sadd.s32 %s43, 1
    %p47 = scmp.eq.s32.totalorder %s9, 1
    %p48 = scmp.ne.s32.totalorder %s43, %s45
    %p49 = scmp.eq.s32.totalorder %s9, 0
    %p50 = por %p48, %p49
    %p51 = scmp.ne.s32.totalorder %s43, %s45
    %p52 = scmp.eq.s32.totalorder %s14, 1
    %p53 = por %p51, %p52
    %p54 = scmp.ne.s32.totalorder %s45, %s46
    %p55 = scmp.eq.s32.totalorder %s14, 0
    %p56 = por %p54, %p55
    %p57 = scmp.ne.s32.totalorder %s45, %s46
    %p58 = scmp.eq.s32.totalorder %s15, 1
    %p59 = por %p57, %p58
    %p61 = scmp.ne.s32.totalorder %s46, %s60
    %p62 = scmp.eq.s32.totalorder %s15, 0
    %p63 = por %p61, %p62
    %s65 = sadd.s32 %s64, 1
    %p68 = scmp.eq.s32.totalorder %s9, 1
    %p69 = scmp.ne.s32.totalorder %s64, %s66
    %p70 = scmp.eq.s32.totalorder %s9, 0
    %p71 = por %p69, %p70
    %p72 = scmp.ne.s32.totalorder %s64, %s66
    %p73 = scmp.eq.s32.totalorder %s14, 1
    %p74 = por %p72, %p73
    %p75 = scmp.ne.s32.totalorder %s66, %s67
    %p76 = scmp.eq.s32.totalorder %s14, 0
    %p77 = por %p75, %p76
    %p78 = scmp.ne.s32.totalorder %s66, %s67
    %p79 = scmp.eq.s32.totalorder %s15, 1
    %p80 = por %p78, %p79
    %p82 = scmp.ne.s32.totalorder %s67, %s81
    %p83 = scmp.eq.s32.totalorder %s15, 0
    %p84 = por %p82, %p83
    %s85 = ssub.s32 %s9, %s16
    %p86 = scmp.eq.s32.totalorder %s85, 0
    %s88 = sadd.s32 %s87, 1
    %s89 = scalar_select %p86, %s87, %s88
    %p92 = pneg %p86
    %p93 = scmp.eq.s32.totalorder %s9, 1
    %p94 = por %p92, %p93
    %p95 = scmp.ne.s32.totalorder %s87, %s90
    %p96 = scmp.eq.s32.totalorder %s9, 0
    %p97 = por %p95, %p96
    %p98 = scmp.ne.s32.totalorder %s87, %s90
    %p99 = scmp.eq.s32.totalorder %s14, 1
    %p100 = por %p98, %p99
    %p101 = scmp.ne.s32.totalorder %s90, %s91
    %p102 = scmp.eq.s32.totalorder %s14, 0
    %p103 = por %p101, %p102
    %p104 = scmp.ne.s32.totalorder %s90, %s91
    %p105 = scmp.eq.s32.totalorder %s15, 1
    %p106 = por %p104, %p105
    %p108 = scmp.ne.s32.totalorder %s91, %s107
    %p109 = scmp.eq.s32.totalorder %s15, 0
    %p110 = por %p108, %p109
    %p111 = scmp.le.s32.totalorder 1, %s9
    %p112 = scmp.lt.s32.totalorder %s9, 3
    %p113 = pnand %p111, %p112
    %p114 = pneg %p113
    // Predicated region
    $region9: #{down_forward.5} parent=5 // pred_check
      _
    $region10: #{down_forward.5} parent=5 // pred_check_branch
      %116 = sbr.rel (%p113) target = $region12
    $region11: #{down_forward.5} parent=5 // pred_region
      %s117 = ssub.s32 %s9, 1
      // Predicated region
      $region13: #{down_forward.5} parent=11 // pred_check
        %p118 = pneg %p56
      $region14: #{down_forward.5} parent=11 // pred_check_branch
        %120 = sbr.rel (%p118) target = $region16
      $region15: #{down_forward.5} parent=11 // pred_region
        _
      $region16: #{down_forward.5} parent=11 // pred_fallthru
        _
      // Predicated region
      $region17: #{down_forward.5} parent=11 // pred_check
        %p121 = pneg %p77
      $region18: #{down_forward.5} parent=11 // pred_check_branch
        %123 = sbr.rel (%p121) target = $region20
      $region19: #{down_forward.5} parent=11 // pred_region
        _
      $region20: #{down_forward.5} parent=11 // pred_fallthru
        _
    $region12: #{down_forward.5} parent=5 // pred_fallthru
      _
    %p124 = scmp.lt.s32.totalorder %s9, 2
    // Predicated region
    $region21: #{down_forward.5} parent=5 // pred_check
      %p125 = pneg %p124
    $region22: #{down_forward.5} parent=5 // pred_check_branch
      %127 = sbr.rel (%p125) target = $region24
    $region23: #{down_forward.5} parent=5 // pred_region
      // Predicated region
      $region25: #{down_forward.5} parent=23 // pred_check
        %p128 = pneg %p29
      $region26: #{down_forward.5} parent=23 // pred_check_branch
        %130 = sbr.rel (%p128) target = $region28
      $region27: #{down_forward.5} parent=23 // pred_region
        %s131 = smul.u32 8, %s9
        %p132 = scmp.lt.s32.totalorder %s131, 15
        %s133 = scalar_select %p132, %s131, 15
        %s134 = smul.addr %s133, 4
        %s135 = scalar_lea.vmem %s0, %s134
        %s136 = smul.u32 8, %s9
      $region28: #{down_forward.5} parent=23 // pred_fallthru
        _
    $region24: #{down_forward.5} parent=5 // pred_fallthru
      _
    %p137 = scmp.le.s32.totalorder 1, %s9
    %p138 = scmp.lt.s32.totalorder %s9, 3
    %p139 = pnand %p137, %p138
    %p140 = pneg %p139
    // Predicated region
    $region29: #{down_forward.5} parent=5 // pred_check
      _
    $region30: #{down_forward.5} parent=5 // pred_check_branch
      %142 = sbr.rel (%p139) target = $region32
    $region31: #{down_forward.5} parent=5 // pred_region
      %s143 = ssub.s32 %s9, 1
      %s144 = smul.u32 8, %s14
      %p145 = scmp.lt.s32.totalorder %s144, 15
      %s146 = scalar_select %p145, %s144, 15
      %s147 = smul.addr %s146, 4
      %s148 = scalar_lea.vmem %s0, %s147
      %p149 = pneg %p35
      %p150 = pneg %p32
      %p151 = pneg %p56
      %p152 = pneg %p53
      %p153 = pneg %p77
      %p154 = pneg %p74
      %p155 = pneg %p103
      %p156 = pneg %p100
      %s157 = smul.u32 8, %s14
      %p158 = scmp.lt.s32.totalorder %s157, 15
      %s159 = scalar_select %p158, %s157, 15
      %s160 = smul.addr %s159, 8
      %s161 = scalar_lea.vmem %s3, %s160
      %s162 = smul.u32 8, %s14
      %p163 = scmp.lt.s32.totalorder %s162, 15
      %s164 = scalar_select %p163, %s162, 15
      %s165 = smul.addr %s164, 4
      %s166 = scalar_lea.vmem %s0, %s165
      %s167 = smul.u32 8, %s14
      %s168 = smul.u32 8, %s14
      %p169 = scmp.lt.s32.totalorder %s168, 15
      %s170 = scalar_select %p169, %s168, 15
      %s171 = smul.addr %s170, 8
      %s172 = scalar_lea.vmem %s3, %s171
      %s173 = smul.u32 8, %s14
      %v174 = vld [vmem:[%s166] sm:$0xf]
      %v175 = vld [vmem:[%s166 + $0x4] sm:$0xf]
      %v176 = vld [vmem:[%s166 + $0x8] sm:$0xf]
      %v177 = vld [vmem:[%s166 + $0xc] sm:$0xf]
      %v178 = vld [vmem:[%s166 + $0x10] sm:$0xf]
      %v179 = vld [vmem:[%s166 + $0x14] sm:$0xf]
      %v180 = vld [vmem:[%s166 + $0x18] sm:$0xf]
      %v181 = vld [vmem:[%s166 + $0x1c] sm:$0xf]
      %v182 = vunpack.c.l.bf16 %v174
      %v183 = vunpack.c.l.bf16 %v175
      %v184 = vunpack.c.l.bf16 %v176
      %v185 = vunpack.c.l.bf16 %v177
      %v186 = vunpack.c.l.bf16 %v178
      %v187 = vunpack.c.l.bf16 %v179
      %v188 = vunpack.c.l.bf16 %v180
      %v189 = vunpack.c.l.bf16 %v181
      %v190 = vld [vmem:[%s1] sm:$0x1]
      %v192 = vlaneseq
      %v193 = vshrl.u32 %v192, 7
      %v194 = vsub.s32 0, %v193
      %v195 = vrot.slane %v190, %v194
      %v197 = vmul.f32 %v182, %v195
      %v198 = vmul.f32 %v183, %v195
      %v199 = vmul.f32 %v184, %v195
      %v200 = vmul.f32 %v185, %v195
      %v201 = vmul.f32 %v186, %v195
      %v202 = vmul.f32 %v187, %v195
      %v203 = vmul.f32 %v188, %v195
      %v204 = vmul.f32 %v189, %v195
      %v205 = vld [vmem:[%s2] sm:$0x1]
      %v207 = vlaneseq
      %v208 = vshrl.u32 %v207, 7
      %v209 = vsub.s32 0, %v208
      %v210 = vrot.slane %v205, %v209
      %v212 = vadd.f32 %v197, %v210
      %v213 = vadd.f32 %v198, %v210
      %v214 = vadd.f32 %v199, %v210
      %v215 = vadd.f32 %v200, %v210
      %v216 = vadd.f32 %v201, %v210
      %v217 = vadd.f32 %v202, %v210
      %v218 = vadd.f32 %v203, %v210
      %v219 = vadd.f32 %v204, %v210
      %v220 = vmax.f32 %v212, 0.0
      %v221 = vmax.f32 %v213, 0.0
      %v222 = vmax.f32 %v214, 0.0
      %v223 = vmax.f32 %v215, 0.0
      %v224 = vmax.f32 %v216, 0.0
      %v225 = vmax.f32 %v217, 0.0
      %v226 = vmax.f32 %v218, 0.0
      %v227 = vmax.f32 %v219, 0.0
      %vm228 = vcmask 64512
      %229 = vst.msk [vmem:[%s172] sm:$0xff] %vm228, %v220
      %230 = vst.msk [vmem:[%s172 + $0x8] sm:$0xff] %vm228, %v221
      %231 = vst.msk [vmem:[%s172 + $0x10] sm:$0xff] %vm228, %v222
      %232 = vst.msk [vmem:[%s172 + $0x18] sm:$0xff] %vm228, %v223
      %233 = vst.msk [vmem:[%s172 + $0x20] sm:$0xff] %vm228, %v224
      %234 = vst.msk [vmem:[%s172 + $0x28] sm:$0xff] %vm228, %v225
      %235 = vst.msk [vmem:[%s172 + $0x30] sm:$0xff] %vm228, %v226
      %236 = vst.msk [vmem:[%s172 + $0x38] sm:$0xff] %vm228, %v227
      %s237 = smul.u32 8, %s14
      %p238 = scmp.lt.s32.totalorder %s237, 15
      %s239 = scalar_select %p238, %s237, 15
      %s240 = smul.addr %s239, 8
      %s241 = scalar_lea.vmem %s3, %s240
      // Predicated region
      $region33: #{down_forward.5} parent=31 // pred_check
        %p242 = pneg %p100
      $region34: #{down_forward.5} parent=31 // pred_check_branch
        %244 = sbr.rel (%p242) target = $region36
      $region35: #{down_forward.5} parent=31 // pred_region
        %s245 = smul.u32 8, %s14
      $region36: #{down_forward.5} parent=31 // pred_fallthru
        _
    $region32: #{down_forward.5} parent=5 // pred_fallthru
      _
    %p246 = scmp.le.s32.totalorder 2, %s9
    // Predicated region
    $region37: #{down_forward.5} parent=5 // pred_check
      %p247 = pneg %p246
    $region38: #{down_forward.5} parent=5 // pred_check_branch
      %249 = sbr.rel (%p247) target = $region40
    $region39: #{down_forward.5} parent=5 // pred_region
      %s250 = ssub.s32 %s9, 2
      // Predicated region
      $region41: #{down_forward.5} parent=39 // pred_check
        %p251 = pneg %p106
      $region42: #{down_forward.5} parent=39 // pred_check_branch
        %253 = sbr.rel (%p251) target = $region44
      $region43: #{down_forward.5} parent=39 // pred_region
        %s254 = smul.u32 8, %s15
        %p255 = scmp.lt.s32.totalorder %s254, 15
        %s256 = scalar_select %p255, %s254, 15
        %s257 = smul.addr %s256, 8
        %s258 = scalar_lea.vmem %s3, %s257
      $region44: #{down_forward.5} parent=39 // pred_fallthru
        _
    $region40: #{down_forward.5} parent=5 // pred_fallthru
      _
  $region6: #{down_forward.5} parent=0 // loop_footer
    %s13 = sadd.s32 1, %s9
  $region7: #{down_forward.5} parent=0 // loop_footer_branch
    %8 = sbr.rel target = $region3
  $region8: #{down_forward.5} parent=0 // loop_exit
    _

// kernel: down_forward.3
$region0: #{down_forward.3}
  #allocation0 [shape = 'u32[]', space=smem, size = 0x4, offset = 0x4, fixed_abs, tag = 'smem constant byte address 0x4 - core index']
  #allocation1 [shape = 'u32[144,128]{1,0:T(1,128)}', space=vmem, size = 0x12000, scoped, tag = 'internal scratch']
  #allocation2 [shape = 'f32[10,16,8]{2,1,0:T(8,128)}', space=vmem, size = 0x14000, scoped, tag = 'scratch operand']
  %s0 = inlined_call_operand.vmem [shape: f32[16,2,8,16], index: 0, kind: input, shape index: {}]
  %s1 = inlined_call_operand.vmem [shape: bf16[9,8,8], index: 1, kind: input, shape index: {}]
  %s2 = inlined_call_operand.vmem [shape: bf16[16,8,8], index: 2, kind: output, shape index: {0}]
  %s3 = inlined_call_operand.vmem [shape: f32[2,2,8], index: 3, kind: output, shape index: {1}]
  %4 = xla_tuple %s2, %s3
  %s5 = sld [smem:[#allocation0]]
  $region49: #{down_forward.3} parent=0
    _
  %s7 = ssub.s32 1, %s5
  %s8 = scalar_select 0, %s7, %s5
  loop: start=0, step=1, limit=4
  $region2: #{down_forward.3} parent=0 // loop_pre_header
    _
  $region3: #{down_forward.3} parent=0 // loop_header
    %s10 = sphi 0, %s14
    %p11 = scmp.ge.s32.totalorder %s10, 4
    %s20 = sphi 0, %s22
    %s23 = sphi 0, %s20
    %s24 = sphi 0, %s23
    %s40 = sphi 0, %s24
    %s44 = sphi 0, %s44
    %s46 = sphi 0, %s44
    %s47 = sphi 0, %s46
    %s61 = sphi 0, %s47
    %s67 = sphi 0, %s69
    %s70 = sphi 0, %s67
    %s71 = sphi 0, %s70
    %s87 = sphi 0, %s71
    %s93 = sphi 0, %s95
    %s96 = sphi 0, %s93
    %s97 = sphi 0, %s96
    %s113 = sphi 0, %s97
  $region4: #{down_forward.3} parent=0 // loop_header_branch
    %13 = sbr.rel (%p11) target = $region8
  $region5: #{down_forward.3} parent=0 // loop_body
    %s15 = ssub.s32 %s10, 1
    %s16 = ssub.s32 %s10, 2
    %s17 = sadd.s32 %s10, 1
    %s18 = ssub.s32 %s10, %s17
    %p19 = scmp.eq.s32.totalorder %s18, 0
    %s21 = sadd.s32 %s20, 1
    %s22 = scalar_select %p19, %s20, %s21
    %p25 = pneg %p19
    %p26 = scmp.eq.s32.totalorder %s10, 1
    %p27 = por %p25, %p26
    %p28 = scmp.ne.s32.totalorder %s20, %s23
    %p29 = scmp.eq.s32.totalorder %s10, 0
    %p30 = por %p28, %p29
    %p31 = scmp.ne.s32.totalorder %s20, %s23
    %p32 = scmp.eq.s32.totalorder %s15, 1
    %p33 = por %p31, %p32
    %p34 = scmp.ne.s32.totalorder %s23, %s24
    %p35 = scmp.eq.s32.totalorder %s15, 0
    %p36 = por %p34, %p35
    %p37 = scmp.ne.s32.totalorder %s23, %s24
    %p38 = scmp.eq.s32.totalorder %s16, 1
    %p39 = por %p37, %p38
    %p41 = scmp.ne.s32.totalorder %s24, %s40
    %p42 = scmp.eq.s32.totalorder %s16, 0
    %p43 = por %p41, %p42
    %s45 = sadd.s32 %s44, 1
    %p48 = scmp.eq.s32.totalorder %s10, 1
    %p49 = scmp.ne.s32.totalorder %s44, %s46
    %p50 = scmp.eq.s32.totalorder %s10, 0
    %p51 = por %p49, %p50
    %p52 = scmp.ne.s32.totalorder %s44, %s46
    %p53 = scmp.eq.s32.totalorder %s15, 1
    %p54 = por %p52, %p53
    %p55 = scmp.ne.s32.totalorder %s46, %s47
    %p56 = scmp.eq.s32.totalorder %s15, 0
    %p57 = por %p55, %p56
    %p58 = scmp.ne.s32.totalorder %s46, %s47
    %p59 = scmp.eq.s32.totalorder %s16, 1
    %p60 = por %p58, %p59
    %p62 = scmp.ne.s32.totalorder %s47, %s61
    %p63 = scmp.eq.s32.totalorder %s16, 0
    %p64 = por %p62, %p63
    %s65 = ssub.s32 %s10, %s17
    %p66 = scmp.eq.s32.totalorder %s65, 0
    %s68 = sadd.s32 %s67, 1
    %s69 = scalar_select %p66, %s67, %s68
    %p72 = pneg %p66
    %p73 = scmp.eq.s32.totalorder %s10, 1
    %p74 = por %p72, %p73
    %p75 = scmp.ne.s32.totalorder %s67, %s70
    %p76 = scmp.eq.s32.totalorder %s10, 0
    %p77 = por %p75, %p76
    %p78 = scmp.ne.s32.totalorder %s67, %s70
    %p79 = scmp.eq.s32.totalorder %s15, 1
    %p80 = por %p78, %p79
    %p81 = scmp.ne.s32.totalorder %s70, %s71
    %p82 = scmp.eq.s32.totalorder %s15, 0
    %p83 = por %p81, %p82
    %p84 = scmp.ne.s32.totalorder %s70, %s71
    %p85 = scmp.eq.s32.totalorder %s16, 1
    %p86 = por %p84, %p85
    %p88 = scmp.ne.s32.totalorder %s71, %s87
    %p89 = scmp.eq.s32.totalorder %s16, 0
    %p90 = por %p88, %p89
    %s91 = ssub.s32 %s10, %s17
    %p92 = scmp.eq.s32.totalorder %s91, 0
    %s94 = sadd.s32 %s93, 1
    %s95 = scalar_select %p92, %s93, %s94
    %p98 = pneg %p92
    %p99 = scmp.eq.s32.totalorder %s10, 1
    %p100 = por %p98, %p99
    %p101 = scmp.ne.s32.totalorder %s93, %s96
    %p102 = scmp.eq.s32.totalorder %s10, 0
    %p103 = por %p101, %p102
    %p104 = scmp.ne.s32.totalorder %s93, %s96
    %p105 = scmp.eq.s32.totalorder %s15, 1
    %p106 = por %p104, %p105
    %p107 = scmp.ne.s32.totalorder %s96, %s97
    %p108 = scmp.eq.s32.totalorder %s15, 0
    %p109 = por %p107, %p108
    %p110 = scmp.ne.s32.totalorder %s96, %s97
    %p111 = scmp.eq.s32.totalorder %s16, 1
    %p112 = por %p110, %p111
    %p114 = scmp.ne.s32.totalorder %s97, %s113
    %p115 = scmp.eq.s32.totalorder %s16, 0
    %p116 = por %p114, %p115
    %p117 = scmp.le.s32.totalorder 1, %s10
    %p118 = scmp.lt.s32.totalorder %s10, 3
    %p119 = pnand %p117, %p118
    %p120 = pneg %p119
    // Predicated region
    $region9: #{down_forward.3} parent=5 // pred_check
      _
    $region10: #{down_forward.3} parent=5 // pred_check_branch
      %122 = sbr.rel (%p119) target = $region12
    $region11: #{down_forward.3} parent=5 // pred_region
      %s123 = ssub.s32 %s10, 1
      // Predicated region
      $region13: #{down_forward.3} parent=11 // pred_check
        %p124 = pneg %p57
      $region14: #{down_forward.3} parent=11 // pred_check_branch
        %126 = sbr.rel (%p124) target = $region16
      $region15: #{down_forward.3} parent=11 // pred_region
        _
      $region16: #{down_forward.3} parent=11 // pred_fallthru
        _
    $region12: #{down_forward.3} parent=5 // pred_fallthru
      _
    %p127 = scmp.lt.s32.totalorder %s10, 2
    // Predicated region
    $region17: #{down_forward.3} parent=5 // pred_check
      %p128 = pneg %p127
    $region18: #{down_forward.3} parent=5 // pred_check_branch
      %130 = sbr.rel (%p128) target = $region20
    $region19: #{down_forward.3} parent=5 // pred_region
      // Predicated region
      $region21: #{down_forward.3} parent=19 // pred_check
        %p131 = pneg %p30
      $region22: #{down_forward.3} parent=19 // pred_check_branch
        %133 = sbr.rel (%p131) target = $region24
      $region23: #{down_forward.3} parent=19 // pred_region
        %s134 = smul.u32 8, %s10
        %p135 = scmp.lt.s32.totalorder %s134, 15
        %s136 = scalar_select %p135, %s134, 15
        %s137 = smul.addr %s136, 2
        %s138 = smul.addr %s137, 8
        %s139 = scalar_lea.vmem %s0, %s138
        %s140 = smul.u32 8, %s10
      $region24: #{down_forward.3} parent=19 // pred_fallthru
        _
    $region20: #{down_forward.3} parent=5 // pred_fallthru
      _
    %p141 = scmp.le.s32.totalorder 1, %s10
    %p142 = scmp.lt.s32.totalorder %s10, 3
    %p143 = pnand %p141, %p142
    %p144 = pneg %p143
    // Predicated region
    $region25: #{down_forward.3} parent=5 // pred_check
      _
    $region26: #{down_forward.3} parent=5 // pred_check_branch
      %146 = sbr.rel (%p143) target = $region28
    $region27: #{down_forward.3} parent=5 // pred_region
      %s147 = ssub.s32 %s10, 1
      %s148 = smul.u32 8, %s15
      %p149 = scmp.lt.s32.totalorder %s148, 15
      %s150 = scalar_select %p149, %s148, 15
      %s151 = smul.addr %s150, 2
      %s152 = smul.addr %s151, 8
      %s153 = scalar_lea.vmem %s0, %s152
      %p154 = pneg %p36
      %p155 = pneg %p33
      %p156 = pneg %p57
      %p157 = pneg %p54
      %p158 = pneg %p83
      %p159 = pneg %p80
      %s160 = smul.u32 8, %s15
      %p161 = scmp.lt.s32.totalorder %s160, 15
      %s162 = scalar_select %p161, %s160, 15
      %s163 = smul.addr %s162, 4
      %s164 = scalar_lea.vmem %s2, %s163
      %p165 = pneg %p109
      %p166 = pneg %p106
      %p167 = scmp.lt.s32.totalorder %s15, 1
      %s168 = scalar_select %p167, %s15, 1
      %s169 = smul.addr %s168, 2
      %s170 = scalar_lea.vmem %s3, %s169
      %s171 = smul.u32 8, %s15
      %p172 = scmp.lt.s32.totalorder %s171, 15
      %s173 = scalar_select %p172, %s171, 15
      %s174 = smul.addr %s173, 2
      %s175 = smul.addr %s174, 8
      %s176 = scalar_lea.vmem %s0, %s175
      %s177 = smul.u32 8, %s15
      %s178 = smul.u32 8, %s15
      %p179 = scmp.lt.s32.totalorder %s178, 15
      %s180 = scalar_select %p179, %s178, 15
      %s181 = smul.addr %s180, 4
      %s182 = scalar_lea.vmem %s2, %s181
      %s183 = smul.u32 8, %s15
      %p184 = scmp.lt.s32.totalorder %s15, 1
      %s185 = scalar_select %p184, %s15, 1
      %s186 = smul.addr %s185, 2
      %s187 = scalar_lea.vmem %s3, %s186
      %v189 = vld [vmem:[%s176] sm:$0xff]
      %v190 = vld [vmem:[%s176 + $0x8] sm:$0xff]
      %v191 = vld [vmem:[%s176 + $0x10] sm:$0xff]
      %v192 = vld [vmem:[%s176 + $0x18] sm:$0xff]
      %v193 = vld [vmem:[%s176 + $0x20] sm:$0xff]
      %v194 = vld [vmem:[%s176 + $0x28] sm:$0xff]
      %v195 = vld [vmem:[%s176 + $0x30] sm:$0xff]
      %v196 = vld [vmem:[%s176 + $0x38] sm:$0xff]
      %v197 = vld [vmem:[%s176 + $0x40] sm:$0xff]
      %v198 = vld [vmem:[%s176 + $0x48] sm:$0xff]
      %v199 = vld [vmem:[%s176 + $0x50] sm:$0xff]
      %v200 = vld [vmem:[%s176 + $0x58] sm:$0xff]
      %v201 = vld [vmem:[%s176 + $0x60] sm:$0xff]
      %v202 = vld [vmem:[%s176 + $0x68] sm:$0xff]
      %v203 = vld [vmem:[%s176 + $0x70] sm:$0xff]
      %v204 = vld [vmem:[%s176 + $0x78] sm:$0xff]
      %v205 = vmax.f32 %v189, %v190
      %v206 = vmax.f32 %v191, %v192
      %v207 = vmax.f32 %v193, %v194
      %v208 = vmax.f32 %v195, %v196
      %v209 = vmax.f32 %v197, %v198
      %v210 = vmax.f32 %v199, %v200
      %v211 = vmax.f32 %v201, %v202
      %v212 = vmax.f32 %v203, %v204
      %221 = vrot.lane.b32.xlu0 %v205, 120
      %v222 = vpop.permute.xlu0 %221
      %223 = vrot.lane.b32.xlu0 %v206, 120
      %v224 = vpop.permute.xlu0 %223
      %225 = vrot.lane.b32.xlu0 %v207, 120
      %v226 = vpop.permute.xlu0 %225
      %227 = vrot.lane.b32.xlu0 %v208, 120
      %v228 = vpop.permute.xlu0 %227
      %229 = vrot.lane.b32.xlu0 %v209, 120
      %v230 = vpop.permute.xlu0 %229
      %231 = vrot.lane.b32.xlu0 %v210, 120
      %v232 = vpop.permute.xlu0 %231
      %233 = vrot.lane.b32.xlu0 %v211, 120
      %v234 = vpop.permute.xlu0 %233
      %235 = vrot.lane.b32.xlu0 %v212, 120
      %v236 = vpop.permute.xlu0 %235
      %v245 = vmax.f32 %v205, %v222
      %v246 = vmax.f32 %v206, %v224
      %v247 = vmax.f32 %v207, %v226
      %v248 = vmax.f32 %v208, %v228
      %v249 = vmax.f32 %v209, %v230
      %v250 = vmax.f32 %v210, %v232
      %v251 = vmax.f32 %v211, %v234
      %v252 = vmax.f32 %v212, %v236
      %vm253 = vcmask 64512
      %254 = vst.msk [vmem:[#allocation2] sm:$0xff] %vm253, 0.0
      %255 = vst.msk [vmem:[#allocation2 + $0x8] sm:$0xff] %vm253, 0.0
      %s256 = scalar_lea.vmem [#allocation2], 144
      %257 = vst.msk [vmem:[%s256] sm:$0xff] %vm253, 0.0
      %258 = vst.msk [vmem:[%s256 + $0x8] sm:$0xff] %vm253, 0.0
      %s259 = scalar_lea.vmem [#allocation2], 16
      %vm260 = vcmask 57344
      %261 = vst.msk [vmem:[%s259] sm:$0x1] %vm260, 0.0
      %262 = vst.msk [vmem:[%s259 + $0x10] sm:$0x1] %vm260, 0.0
      %263 = vst.msk [vmem:[%s259 + $0x20] sm:$0x1] %vm260, 0.0
      %264 = vst.msk [vmem:[%s259 + $0x30] sm:$0x1] %vm260, 0.0
      %265 = vst.msk [vmem:[%s259 + $0x40] sm:$0x1] %vm260, 0.0
      %266 = vst.msk [vmem:[%s259 + $0x50] sm:$0x1] %vm260, 0.0
      %267 = vst.msk [vmem:[%s259 + $0x60] sm:$0x1] %vm260, 0.0
      %268 = vst.msk [vmem:[%s259 + $0x70] sm:$0x1] %vm260, 0.0
      %269 = vst.msk [vmem:[%s259 + $0x9] sm:$0x1] %vm260, 0.0
      %270 = vst.msk [vmem:[%s259 + $0x19] sm:$0x1] %vm260, 0.0
      %271 = vst.msk [vmem:[%s259 + $0x29] sm:$0x1] %vm260, 0.0
      %272 = vst.msk [vmem:[%s259 + $0x39] sm:$0x1] %vm260, 0.0
      %273 = vst.msk [vmem:[%s259 + $0x49] sm:$0x1] %vm260, 0.0
      %274 = vst.msk [vmem:[%s259 + $0x59] sm:$0x1] %vm260, 0.0
      %275 = vst.msk [vmem:[%s259 + $0x69] sm:$0x1] %vm260, 0.0
      %276 = vst.msk [vmem:[%s259 + $0x79] sm:$0x1] %vm260, 0.0
      %277 = vst.msk [vmem:[%s259 + $0x1] sm:$0xff] %vm253, %v245
      %278 = vst.msk [vmem:[%s259 + $0x11] sm:$0xff] %vm253, %v246
      %279 = vst.msk [vmem:[%s259 + $0x21] sm:$0xff] %vm253, %v247
      %280 = vst.msk [vmem:[%s259 + $0x31] sm:$0xff] %vm253, %v248
      %281 = vst.msk [vmem:[%s259 + $0x41] sm:$0xff] %vm253, %v249
      %282 = vst.msk [vmem:[%s259 + $0x51] sm:$0xff] %vm253, %v250
      %283 = vst.msk [vmem:[%s259 + $0x61] sm:$0xff] %vm253, %v251
      %284 = vst.msk [vmem:[%s259 + $0x71] sm:$0xff] %vm253, %v252
      %v285 = vld [vmem:[#allocation2] sm:$0xff]
      %v286 = vld [vmem:[#allocation2 + $0x10] sm:$0xff]
      %v287 = vld [vmem:[#allocation2 + $0x20] sm:$0xff]
      %v288 = vld [vmem:[#allocation2 + $0x30] sm:$0xff]
      %v289 = vld [vmem:[#allocation2 + $0x40] sm:$0xff]
      %v290 = vld [vmem:[#allocation2 + $0x50] sm:$0xff]
      %v291 = vld [vmem:[#allocation2 + $0x60] sm:$0xff]
      %v292 = vld [vmem:[#allocation2 + $0x70] sm:$0xff]
      %v293 = vpack.c.bf16 %v286, %v285
      %v294 = vpack.c.bf16 %v288, %v287
      %v295 = vpack.c.bf16 %v290, %v289
      %v296 = vpack.c.bf16 %v292, %v291
      %v297 = vld [vmem:[%s1] sm:$0xf]
      %v298 = vld [vmem:[#allocation2 + $0x1] sm:$0xff]
      %v299 = vld [vmem:[#allocation2 + $0x11] sm:$0xff]
      %v300 = vld [vmem:[#allocation2 + $0x21] sm:$0xff]
      %v301 = vld [vmem:[#allocation2 + $0x31] sm:$0xff]
      %v302 = vld [vmem:[#allocation2 + $0x41] sm:$0xff]
      %v303 = vld [vmem:[#allocation2 + $0x51] sm:$0xff]
      %v304 = vld [vmem:[#allocation2 + $0x61] sm:$0xff]
      %v305 = vld [vmem:[#allocation2 + $0x71] sm:$0xff]
      %v306 = vpack.c.bf16 %v299, %v298
      %v307 = vpack.c.bf16 %v301, %v300
      %v308 = vpack.c.bf16 %v303, %v302
      %v309 = vpack.c.bf16 %v305, %v304
      %s310 = scalar_lea.vmem %s1, 4
      %v311 = vld [vmem:[%s310] sm:$0xf]
      %v313 = vsel %vm253, %v306, 0
      %v316 = vsel %vm253, %v307, 0
      %v319 = vsel %vm253, %v308, 0
      %v322 = vsel %vm253, %v309, 0
      %vm324 = vcmask 1043456
      %v326 = vsel %vm324, %v311, 0
      %328 = vmatprep.subr.bf16.mxu0 0
      %329 = vmatpush1.bf16.msra.mxu0 %v326
      %330 = vmatprep.subr.bf16.mxu0 0
      %331 = vmatpush1.bf16.msra.mxu0 0
      %332 = vmatprep.subr.bf16.mxu0 0
      %333 = vmatpush1.bf16.msra.mxu0 0
      %334 = vmatprep.subr.bf16.mxu0 0
      %335 = vmatpush1.bf16.msra.mxu0 0
      %336 = vmatprep.subr.bf16.mxu0 0
      %337 = vmatpush1.bf16.msra.mxu0 0
      %338 = vmatprep.subr.bf16.mxu0 0
      %339 = vmatpush1.bf16.msra.mxu0 0
      %340 = vmatprep.subr.bf16.mxu0 0
      %341 = vmatpush1.bf16.msra.mxu0 0
      %342 = vmatprep.subr.bf16.mxu0 0
      %343 = vmatpush1.bf16.msra.mxu0 0
      %344 = vmatprep.subr.bf16.mxu0 0
      %345 = vmatpush1.bf16.msra.mxu0 0
      %346 = vmatprep.subr.bf16.mxu0 0
      %347 = vmatpush1.bf16.msra.mxu0 0
      %348 = vmatprep.subr.bf16.mxu0 0
      %349 = vmatpush1.bf16.msra.mxu0 0
      %350 = vmatprep.subr.bf16.mxu0 0
      %351 = vmatpush1.bf16.msra.mxu0 0
      %352 = vmatprep.subr.bf16.mxu0 0
      %353 = vmatpush1.bf16.msra.mxu0 0
      %354 = vmatprep.subr.bf16.mxu0 0
      %355 = vmatpush1.bf16.msra.mxu0 0
      %356 = vmatprep.subr.bf16.mxu0 0
      %357 = vmatpush1.bf16.msra.mxu0 0
      %358 = vmatprep.subr.bf16.mxu0 0
      %359 = vmatpush1.bf16.msra.mxu0 0
      %360 = vmatprep.mubr.bf16.mxu0 0
      %361 = vmatmul.mubr.bf16.gmra.mrb[0].mxu0 %v313
      %v362 = vpop.f32.mrb[0].mxu0
      %v363 = vadd.f32 0.0, %v362
      %v364 = vpop.f32.mrb[0].mxu0
      %v365 = vpop.f32.mrb[0].mxu0
      %v366 = vadd.f32 0.0, %v365
      %v367 = vpop.f32.mrb[0].mxu0
      %368 = vmatprep.mubr.bf16.mxu0 0
      %369 = vmatmul.mubr.bf16.gmra.mrb[0].mxu0 %v316
      %v370 = vpop.f32.mrb[0].mxu0
      %v371 = vadd.f32 0.0, %v370
      %v372 = vpop.f32.mrb[0].mxu0
      %v373 = vpop.f32.mrb[0].mxu0
      %v374 = vadd.f32 0.0, %v373
      %v375 = vpop.f32.mrb[0].mxu0
      %376 = vmatprep.mubr.bf16.mxu0 0
      %377 = vmatmul.mubr.bf16.gmra.mrb[0].mxu0 %v319
      %v378 = vpop.f32.mrb[0].mxu0
      %v379 = vadd.f32 0.0, %v378
      %v380 = vpop.f32.mrb[0].mxu0
      %v381 = vpop.f32.mrb[0].mxu0
      %v382 = vadd.f32 0.0, %v381
      %v383 = vpop.f32.mrb[0].mxu0
      %384 = vmatprep.mubr.bf16.mxu0 0
      %385 = vmatmul.mubr.bf16.gmra.mrb[0].mxu0 %v322
      %v386 = vpop.f32.mrb[0].mxu0
      %v387 = vadd.f32 0.0, %v386
      %v388 = vpop.f32.mrb[0].mxu0
      %v389 = vpop.f32.mrb[0].mxu0
      %v390 = vadd.f32 0.0, %v389
      %v391 = vpop.f32.mrb[0].mxu0
      %392 = vdwg.mxu0
      %v394 = vsel %vm253, %v293, 0
      %v397 = vsel %vm253, %v294, 0
      %v400 = vsel %vm253, %v295, 0
      %v403 = vsel %vm253, %v296, 0
      %v406 = vsel %vm324, %v297, 0
      %408 = vmatprep.subr.bf16.mxu0 0
      %409 = vmatpush1.bf16.msra.mxu0 %v406
      %410 = vmatprep.subr.bf16.mxu0 0
      %411 = vmatpush1.bf16.msra.mxu0 0
      %412 = vmatprep.subr.bf16.mxu0 0
      %413 = vmatpush1.bf16.msra.mxu0 0
      %414 = vmatprep.subr.bf16.mxu0 0
      %415 = vmatpush1.bf16.msra.mxu0 0
      %416 = vmatprep.subr.bf16.mxu0 0
      %417 = vmatpush1.bf16.msra.mxu0 0
      %418 = vmatprep.subr.bf16.mxu0 0
      %419 = vmatpush1.bf16.msra.mxu0 0
      %420 = vmatprep.subr.bf16.mxu0 0
      %421 = vmatpush1.bf16.msra.mxu0 0
      %422 = vmatprep.subr.bf16.mxu0 0
      %423 = vmatpush1.bf16.msra.mxu0 0
      %424 = vmatprep.subr.bf16.mxu0 0
      %425 = vmatpush1.bf16.msra.mxu0 0
      %426 = vmatprep.subr.bf16.mxu0 0
      %427 = vmatpush1.bf16.msra.mxu0 0
      %428 = vmatprep.subr.bf16.mxu0 0
      %429 = vmatpush1.bf16.msra.mxu0 0
      %430 = vmatprep.subr.bf16.mxu0 0
      %431 = vmatpush1.bf16.msra.mxu0 0
      %432 = vmatprep.subr.bf16.mxu0 0
      %433 = vmatpush1.bf16.msra.mxu0 0
      %434 = vmatprep.subr.bf16.mxu0 0
      %435 = vmatpush1.bf16.msra.mxu0 0
      %436 = vmatprep.subr.bf16.mxu0 0
      %437 = vmatpush1.bf16.msra.mxu0 0
      %438 = vmatprep.subr.bf16.mxu0 0
      %439 = vmatpush1.bf16.msra.mxu0 0
      %440 = vmatprep.mubr.bf16.mxu0 0
      %441 = vmatmul.mubr.bf16.gmra.mrb[0].mxu0 %v394
      %v442 = vpop.f32.mrb[0].mxu0
      %v443 = vadd.f32 %v363, %v442
      %v444 = vpop.f32.mrb[0].mxu0
      %v445 = vpop.f32.mrb[0].mxu0
      %v446 = vadd.f32 %v366, %v445
      %v447 = vpop.f32.mrb[0].mxu0
      %448 = vmatprep.mubr.bf16.mxu0 0
      %449 = vmatmul.mubr.bf16.gmra.mrb[0].mxu0 %v397
      %v450 = vpop.f32.mrb[0].mxu0
      %v451 = vadd.f32 %v371, %v450
      %v452 = vpop.f32.mrb[0].mxu0
      %v453 = vpop.f32.mrb[0].mxu0
      %v454 = vadd.f32 %v374, %v453
      %v455 = vpop.f32.mrb[0].mxu0
      %456 = vmatprep.mubr.bf16.mxu0 0
      %457 = vmatmul.mubr.bf16.gmra.mrb[0].mxu0 %v400
      %v458 = vpop.f32.mrb[0].mxu0
      %v459 = vadd.f32 %v379, %v458
      %v460 = vpop.f32.mrb[0].mxu0
      %v461 = vpop.f32.mrb[0].mxu0
      %v462 = vadd.f32 %v382, %v461
      %v463 = vpop.f32.mrb[0].mxu0
      %464 = vmatprep.mubr.bf16.mxu0 0
      %465 = vmatmul.mubr.bf16.gmra.mrb[0].mxu0 %v403
      %v466 = vpop.f32.mrb[0].mxu0
      %v467 = vadd.f32 %v387, %v466
      %v468 = vpop.f32.mrb[0].mxu0
      %v469 = vpop.f32.mrb[0].mxu0
      %v470 = vadd.f32 %v390, %v469
      %v471 = vpop.f32.mrb[0].mxu0
      %472 = vdwg.mxu0
      %v473 = vld [vmem:[#allocation2 + $0x2] sm:$0xff]
      %v474 = vld [vmem:[#allocation2 + $0x12] sm:$0xff]
      %v475 = vld [vmem:[#allocation2 + $0x22] sm:$0xff]
      %v476 = vld [vmem:[#allocation2 + $0x32] sm:$0xff]
      %v477 = vld [vmem:[#allocation2 + $0x42] sm:$0xff]
      %v478 = vld [vmem:[#allocation2 + $0x52] sm:$0xff]
      %v479 = vld [vmem:[#allocation2 + $0x62] sm:$0xff]
      %v480 = vld [vmem:[#allocation2 + $0x72] sm:$0xff]
      %v481 = vpack.c.bf16 %v474, %v473
      %v482 = vpack.c.bf16 %v476, %v475
      %v483 = vpack.c.bf16 %v478, %v477
      %v484 = vpack.c.bf16 %v480, %v479
      %s485 = scalar_lea.vmem %s1, 8
      %v486 = vld [vmem:[%s485] sm:$0xf]
      %v488 = vsel %vm253, %v481, 0
      %v491 = vsel %vm253, %v482, 0
      %v494 = vsel %vm253, %v483, 0
      %v497 = vsel %vm253, %v484, 0
      %v500 = vsel %vm324, %v486, 0
      %502 = vmatprep.subr.bf16.mxu0 0
      %503 = vmatpush1.bf16.msra.mxu0 %v500
      %504 = vmatprep.subr.bf16.mxu0 0
      %505 = vmatpush1.bf16.msra.mxu0 0
      %506 = vmatprep.subr.bf16.mxu0 0
      %507 = vmatpush1.bf16.msra.mxu0 0
      %508 = vmatprep.subr.bf16.mxu0 0
      %509 = vmatpush1.bf16.msra.mxu0 0
      %510 = vmatprep.subr.bf16.mxu0 0
      %511 = vmatpush1.bf16.msra.mxu0 0
      %512 = vmatprep.subr.bf16.mxu0 0
      %513 = vmatpush1.bf16.msra.mxu0 0
      %514 = vmatprep.subr.bf16.mxu0 0
      %515 = vmatpush1.bf16.msra.mxu0 0
      %516 = vmatprep.subr.bf16.mxu0 0
      %517 = vmatpush1.bf16.msra.mxu0 0
      %518 = vmatprep.subr.bf16.mxu0 0
      %519 = vmatpush1.bf16.msra.mxu0 0
      %520 = vmatprep.subr.bf16.mxu0 0
      %521 = vmatpush1.bf16.msra.mxu0 0
      %522 = vmatprep.subr.bf16.mxu0 0
      %523 = vmatpush1.bf16.msra.mxu0 0
      %524 = vmatprep.subr.bf16.mxu0 0
      %525 = vmatpush1.bf16.msra.mxu0 0
      %526 = vmatprep.subr.bf16.mxu0 0
      %527 = vmatpush1.bf16.msra.mxu0 0
      %528 = vmatprep.subr.bf16.mxu0 0
      %529 = vmatpush1.bf16.msra.mxu0 0
      %530 = vmatprep.subr.bf16.mxu0 0
      %531 = vmatpush1.bf16.msra.mxu0 0
      %532 = vmatprep.subr.bf16.mxu0 0
      %533 = vmatpush1.bf16.msra.mxu0 0
      %534 = vmatprep.mubr.bf16.mxu0 0
      %535 = vmatmul.mubr.bf16.gmra.mrb[0].mxu0 %v488
      %v536 = vpop.f32.mrb[0].mxu0
      %v537 = vadd.f32 0.0, %v536
      %v538 = vpop.f32.mrb[0].mxu0
      %v539 = vpop.f32.mrb[0].mxu0
      %v540 = vadd.f32 0.0, %v539
      %v541 = vpop.f32.mrb[0].mxu0
      %542 = vmatprep.mubr.bf16.mxu0 0
      %543 = vmatmul.mubr.bf16.gmra.mrb[0].mxu0 %v491
      %v544 = vpop.f32.mrb[0].mxu0
      %v545 = vadd.f32 0.0, %v544
      %v546 = vpop.f32.mrb[0].mxu0
      %v547 = vpop.f32.mrb[0].mxu0
      %v548 = vadd.f32 0.0, %v547
      %v549 = vpop.f32.mrb[0].mxu0
      %550 = vmatprep.mubr.bf16.mxu0 0
      %551 = vmatmul.mubr.bf16.gmra.mrb[0].mxu0 %v494
      %v552 = vpop.f32.mrb[0].mxu0
      %v553 = vadd.f32 0.0, %v552
      %v554 = vpop.f32.mrb[0].mxu0
      %v555 = vpop.f32.mrb[0].mxu0
      %v556 = vadd.f32 0.0, %v555
      %v557 = vpop.f32.mrb[0].mxu0
      %558 = vmatprep.mubr.bf16.mxu0 0
      %559 = vmatmul.mubr.bf16.gmra.mrb[0].mxu0 %v497
      %v560 = vpop.f32.mrb[0].mxu0
      %v561 = vadd.f32 0.0, %v560
      %v562 = vpop.f32.mrb[0].mxu0
      %v563 = vpop.f32.mrb[0].mxu0
      %v564 = vadd.f32 0.0, %v563
      %v565 = vpop.f32.mrb[0].mxu0
      %566 = vdwg.mxu0
      %v567 = vadd.f32 %v443, %v537
      %v568 = vadd.f32 %v446, %v540
      %v569 = vadd.f32 %v451, %v545
      %v570 = vadd.f32 %v454, %v548
      %v571 = vadd.f32 %v459, %v553
      %v572 = vadd.f32 %v462, %v556
      %v573 = vadd.f32 %v467, %v561
      %v574 = vadd.f32 %v470, %v564
      %v575 = vld [vmem:[%s259] sm:$0xff]
      %v576 = vld [vmem:[%s259 + $0x10] sm:$0xff]
      %v577 = vld [vmem:[%s259 + $0x20] sm:$0xff]
      %v578 = vld [vmem:[%s259 + $0x30] sm:$0xff]
      %v579 = vld [vmem:[%s259 + $0x40] sm:$0xff]
      %v580 = vld [vmem:[%s259 + $0x50] sm:$0xff]
      %v581 = vld [vmem:[%s259 + $0x60] sm:$0xff]
      %v582 = vld [vmem:[%s259 + $0x70] sm:$0xff]
      %v583 = vpack.c.bf16 %v576, %v575
      %v584 = vpack.c.bf16 %v578, %v577
      %v585 = vpack.c.bf16 %v580, %v579
      %v586 = vpack.c.bf16 %v582, %v581
      %s587 = scalar_lea.vmem %s1, 12
      %v588 = vld [vmem:[%s587] sm:$0xf]
      %v590 = vsel %vm253, %v583, 0
      %v593 = vsel %vm253, %v584, 0
      %v596 = vsel %vm253, %v585, 0
      %v599 = vsel %vm253, %v586, 0
      %v602 = vsel %vm324, %v588, 0
      %604 = vmatprep.subr.bf16.mxu0 0
      %605 = vmatpush1.bf16.msra.mxu0 %v602
      %606 = vmatprep.subr.bf16.mxu0 0
      %607 = vmatpush1.bf16.msra.mxu0 0
      %608 = vmatprep.subr.bf16.mxu0 0
      %609 = vmatpush1.bf16.msra.mxu0 0
      %610 = vmatprep.subr.bf16.mxu0 0
      %611 = vmatpush1.bf16.msra.mxu0 0
      %612 = vmatprep.subr.bf16.mxu0 0
      %613 = vmatpush1.bf16.msra.mxu0 0
      %614 = vmatprep.subr.bf16.mxu0 0
      %615 = vmatpush1.bf16.msra.mxu0 0
      %616 = vmatprep.subr.bf16.mxu0 0
      %617 = vmatpush1.bf16.msra.mxu0 0
      %618 = vmatprep.subr.bf16.mxu0 0
      %619 = vmatpush1.bf16.msra.mxu0 0
      %620 = vmatprep.subr.bf16.mxu0 0
      %621 = vmatpush1.bf16.msra.mxu0 0
      %622 = vmatprep.subr.bf16.mxu0 0
      %623 = vmatpush1.bf16.msra.mxu0 0
      %624 = vmatprep.subr.bf16.mxu0 0
      %625 = vmatpush1.bf16.msra.mxu0 0
      %626 = vmatprep.subr.bf16.mxu0 0
      %627 = vmatpush1.bf16.msra.mxu0 0
      %628 = vmatprep.subr.bf16.mxu0 0
      %629 = vmatpush1.bf16.msra.mxu0 0
      %630 = vmatprep.subr.bf16.mxu0 0
      %631 = vmatpush1.bf16.msra.mxu0 0
      %632 = vmatprep.subr.bf16.mxu0 0
      %633 = vmatpush1.bf16.msra.mxu0 0
      %634 = vmatprep.subr.bf16.mxu0 0
      %635 = vmatpush1.bf16.msra.mxu0 0
      %636 = vmatprep.mubr.bf16.mxu0 0
      %637 = vmatmul.mubr.bf16.gmra.mrb[0].mxu0 %v590
      %v638 = vpop.f32.mrb[0].mxu0
      %v639 = vadd.f32 0.0, %v638
      %v640 = vpop.f32.mrb[0].mxu0
      %v641 = vpop.f32.mrb[0].mxu0
      %v642 = vadd.f32 0.0, %v641
      %v643 = vpop.f32.mrb[0].mxu0
      %644 = vmatprep.mubr.bf16.mxu0 0
      %645 = vmatmul.mubr.bf16.gmra.mrb[0].mxu0 %v593
      %v646 = vpop.f32.mrb[0].mxu0
      %v647 = vadd.f32 0.0, %v646
      %v648 = vpop.f32.mrb[0].mxu0
      %v649 = vpop.f32.mrb[0].mxu0
      %v650 = vadd.f32 0.0, %v649
      %v651 = vpop.f32.mrb[0].mxu0
      %652 = vmatprep.mubr.bf16.mxu0 0
      %653 = vmatmul.mubr.bf16.gmra.mrb[0].mxu0 %v596
      %v654 = vpop.f32.mrb[0].mxu0
      %v655 = vadd.f32 0.0, %v654
      %v656 = vpop.f32.mrb[0].mxu0
      %v657 = vpop.f32.mrb[0].mxu0
      %v658 = vadd.f32 0.0, %v657
      %v659 = vpop.f32.mrb[0].mxu0
      %660 = vmatprep.mubr.bf16.mxu0 0
      %661 = vmatmul.mubr.bf16.gmra.mrb[0].mxu0 %v599
      %v662 = vpop.f32.mrb[0].mxu0
      %v663 = vadd.f32 0.0, %v662
      %v664 = vpop.f32.mrb[0].mxu0
      %v665 = vpop.f32.mrb[0].mxu0
      %v666 = vadd.f32 0.0, %v665
      %v667 = vpop.f32.mrb[0].mxu0
      %668 = vdwg.mxu0
      %v669 = vadd.f32 %v567, %v639
      %v670 = vadd.f32 %v568, %v642
      %v671 = vadd.f32 %v569, %v647
      %v672 = vadd.f32 %v570, %v650
      %v673 = vadd.f32 %v571, %v655
      %v674 = vadd.f32 %v572, %v658
      %v675 = vadd.f32 %v573, %v663
      %v676 = vadd.f32 %v574, %v666
      %v677 = vld [vmem:[%s259 + $0x1] sm:$0xff]
      %v678 = vld [vmem:[%s259 + $0x11] sm:$0xff]
      %v679 = vld [vmem:[%s259 + $0x21] sm:$0xff]
      %v680 = vld [vmem:[%s259 + $0x31] sm:$0xff]
      %v681 = vld [vmem:[%s259 + $0x41] sm:$0xff]
      %v682 = vld [vmem:[%s259 + $0x51] sm:$0xff]
      %v683 = vld [vmem:[%s259 + $0x61] sm:$0xff]
      %v684 = vld [vmem:[%s259 + $0x71] sm:$0xff]
      %v685 = vpack.c.bf16 %v678, %v677
      %v686 = vpack.c.bf16 %v680, %v679
      %v687 = vpack.c.bf16 %v682, %v681
      %v688 = vpack.c.bf16 %v684, %v683
      %s689 = scalar_lea.vmem %s1, 16
      %v690 = vld [vmem:[%s689] sm:$0xf]
      %v692 = vsel %vm253, %v685, 0
      %v695 = vsel %vm253, %v686, 0
      %v698 = vsel %vm253, %v687, 0
      %v701 = vsel %vm253, %v688, 0
      %v704 = vsel %vm324, %v690, 0
      %706 = vmatprep.subr.bf16.mxu0 0
      %707 = vmatpush1.bf16.msra.mxu0 %v704
      %708 = vmatprep.subr.bf16.mxu0 0
      %709 = vmatpush1.bf16.msra.mxu0 0
      %710 = vmatprep.subr.bf16.mxu0 0
      %711 = vmatpush1.bf16.msra.mxu0 0
      %712 = vmatprep.subr.bf16.mxu0 0
      %713 = vmatpush1.bf16.msra.mxu0 0
      %714 = vmatprep.subr.bf16.mxu0 0
      %715 = vmatpush1.bf16.msra.mxu0 0
      %716 = vmatprep.subr.bf16.mxu0 0
      %717 = vmatpush1.bf16.msra.mxu0 0
      %718 = vmatprep.subr.bf16.mxu0 0
      %719 = vmatpush1.bf16.msra.mxu0 0
      %720 = vmatprep.subr.bf16.mxu0 0
      %721 = vmatpush1.bf16.msra.mxu0 0
      %722 = vmatprep.subr.bf16.mxu0 0
      %723 = vmatpush1.bf16.msra.mxu0 0
      %724 = vmatprep.subr.bf16.mxu0 0
      %725 = vmatpush1.bf16.msra.mxu0 0
      %726 = vmatprep.subr.bf16.mxu0 0
      %727 = vmatpush1.bf16.msra.mxu0 0
      %728 = vmatprep.subr.bf16.mxu0 0
      %729 = vmatpush1.bf16.msra.mxu0 0
      %730 = vmatprep.subr.bf16.mxu0 0
      %731 = vmatpush1.bf16.msra.mxu0 0
      %732 = vmatprep.subr.bf16.mxu0 0
      %733 = vmatpush1.bf16.msra.mxu0 0
      %734 = vmatprep.subr.bf16.mxu0 0
      %735 = vmatpush1.bf16.msra.mxu0 0
      %736 = vmatprep.subr.bf16.mxu0 0
      %737 = vmatpush1.bf16.msra.mxu0 0
      %738 = vmatprep.mubr.bf16.mxu0 0
      %739 = vmatmul.mubr.bf16.gmra.mrb[0].mxu0 %v692
      %v740 = vpop.f32.mrb[0].mxu0
      %v741 = vadd.f32 0.0, %v740
      %v742 = vpop.f32.mrb[0].mxu0
      %v743 = vpop.f32.mrb[0].mxu0
      %v744 = vadd.f32 0.0, %v743
      %v745 = vpop.f32.mrb[0].mxu0
      %746 = vmatprep.mubr.bf16.mxu0 0
      %747 = vmatmul.mubr.bf16.gmra.mrb[0].mxu0 %v695
      %v748 = vpop.f32.mrb[0].mxu0
      %v749 = vadd.f32 0.0, %v748
      %v750 = vpop.f32.mrb[0].mxu0
      %v751 = vpop.f32.mrb[0].mxu0
      %v752 = vadd.f32 0.0, %v751
      %v753 = vpop.f32.mrb[0].mxu0
      %754 = vmatprep.mubr.bf16.mxu0 0
      %755 = vmatmul.mubr.bf16.gmra.mrb[0].mxu0 %v698
      %v756 = vpop.f32.mrb[0].mxu0
      %v757 = vadd.f32 0.0, %v756
      %v758 = vpop.f32.mrb[0].mxu0
      %v759 = vpop.f32.mrb[0].mxu0
      %v760 = vadd.f32 0.0, %v759
      %v761 = vpop.f32.mrb[0].mxu0
      %762 = vmatprep.mubr.bf16.mxu0 0
      %763 = vmatmul.mubr.bf16.gmra.mrb[0].mxu0 %v701
      %v764 = vpop.f32.mrb[0].mxu0
      %v765 = vadd.f32 0.0, %v764
      %v766 = vpop.f32.mrb[0].mxu0
      %v767 = vpop.f32.mrb[0].mxu0
      %v768 = vadd.f32 0.0, %v767
      %v769 = vpop.f32.mrb[0].mxu0
      %770 = vdwg.mxu0
      %v771 = vadd.f32 %v669, %v741
      %v772 = vadd.f32 %v670, %v744
      %v773 = vadd.f32 %v671, %v749
      %v774 = vadd.f32 %v672, %v752
      %v775 = vadd.f32 %v673, %v757
      %v776 = vadd.f32 %v674, %v760
      %v777 = vadd.f32 %v675, %v765
      %v778 = vadd.f32 %v676, %v768
      %v779 = vld [vmem:[%s259 + $0x2] sm:$0xff]
      %v780 = vld [vmem:[%s259 + $0x12] sm:$0xff]
      %v781 = vld [vmem:[%s259 + $0x22] sm:$0xff]
      %v782 = vld [vmem:[%s259 + $0x32] sm:$0xff]
      %v783 = vld [vmem:[%s259 + $0x42] sm:$0xff]
      %v784 = vld [vmem:[%s259 + $0x52] sm:$0xff]
      %v785 = vld [vmem:[%s259 + $0x62] sm:$0xff]
      %v786 = vld [vmem:[%s259 + $0x72] sm:$0xff]
      %v787 = vpack.c.bf16 %v780, %v779
      %v788 = vpack.c.bf16 %v782, %v781
      %v789 = vpack.c.bf16 %v784, %v783
      %v790 = vpack.c.bf16 %v786, %v785
      %s791 = scalar_lea.vmem %s1, 20
      %v792 = vld [vmem:[%s791] sm:$0xf]
      %v794 = vsel %vm253, %v787, 0
      %v797 = vsel %vm253, %v788, 0
      %v800 = vsel %vm253, %v789, 0
      %v803 = vsel %vm253, %v790, 0
      %v806 = vsel %vm324, %v792, 0
      %808 = vmatprep.subr.bf16.mxu0 0
      %809 = vmatpush1.bf16.msra.mxu0 %v806
      %810 = vmatprep.subr.bf16.mxu0 0
      %811 = vmatpush1.bf16.msra.mxu0 0
      %812 = vmatprep.subr.bf16.mxu0 0
      %813 = vmatpush1.bf16.msra.mxu0 0
      %814 = vmatprep.subr.bf16.mxu0 0
      %815 = vmatpush1.bf16.msra.mxu0 0
      %816 = vmatprep.subr.bf16.mxu0 0
      %817 = vmatpush1.bf16.msra.mxu0 0
      %818 = vmatprep.subr.bf16.mxu0 0
      %819 = vmatpush1.bf16.msra.mxu0 0
      %820 = vmatprep.subr.bf16.mxu0 0
      %821 = vmatpush1.bf16.msra.mxu0 0
      %822 = vmatprep.subr.bf16.mxu0 0
      %823 = vmatpush1.bf16.msra.mxu0 0
      %824 = vmatprep.subr.bf16.mxu0 0
      %825 = vmatpush1.bf16.msra.mxu0 0
      %826 = vmatprep.subr.bf16.mxu0 0
      %827 = vmatpush1.bf16.msra.mxu0 0
      %828 = vmatprep.subr.bf16.mxu0 0
      %829 = vmatpush1.bf16.msra.mxu0 0
      %830 = vmatprep.subr.bf16.mxu0 0
      %831 = vmatpush1.bf16.msra.mxu0 0
      %832 = vmatprep.subr.bf16.mxu0 0
      %833 = vmatpush1.bf16.msra.mxu0 0
      %834 = vmatprep.subr.bf16.mxu0 0
      %835 = vmatpush1.bf16.msra.mxu0 0
      %836 = vmatprep.subr.bf16.mxu0 0
      %837 = vmatpush1.bf16.msra.mxu0 0
      %838 = vmatprep.subr.bf16.mxu0 0
      %839 = vmatpush1.bf16.msra.mxu0 0
      %840 = vmatprep.mubr.bf16.mxu0 0
      %841 = vmatmul.mubr.bf16.gmra.mrb[0].mxu0 %v794
      %v842 = vpop.f32.mrb[0].mxu0
      %v843 = vadd.f32 0.0, %v842
      %v844 = vpop.f32.mrb[0].mxu0
      %v845 = vpop.f32.mrb[0].mxu0
      %v846 = vadd.f32 0.0, %v845
      %v847 = vpop.f32.mrb[0].mxu0
      %848 = vmatprep.mubr.bf16.mxu0 0
      %849 = vmatmul.mubr.bf16.gmra.mrb[0].mxu0 %v797
      %v850 = vpop.f32.mrb[0].mxu0
      %v851 = vadd.f32 0.0, %v850
      %v852 = vpop.f32.mrb[0].mxu0
      %v853 = vpop.f32.mrb[0].mxu0
      %v854 = vadd.f32 0.0, %v853
      %v855 = vpop.f32.mrb[0].mxu0
      %856 = vmatprep.mubr.bf16.mxu0 0
      %857 = vmatmul.mubr.bf16.gmra.mrb[0].mxu0 %v800
      %v858 = vpop.f32.mrb[0].mxu0
      %v859 = vadd.f32 0.0, %v858
      %v860 = vpop.f32.mrb[0].mxu0
      %v861 = vpop.f32.mrb[0].mxu0
      %v862 = vadd.f32 0.0, %v861
      %v863 = vpop.f32.mrb[0].mxu0
      %864 = vmatprep.mubr.bf16.mxu0 0
      %865 = vmatmul.mubr.bf16.gmra.mrb[0].mxu0 %v803
      %v866 = vpop.f32.mrb[0].mxu0
      %v867 = vadd.f32 0.0, %v866
      %v868 = vpop.f32.mrb[0].mxu0
      %v869 = vpop.f32.mrb[0].mxu0
      %v870 = vadd.f32 0.0, %v869
      %v871 = vpop.f32.mrb[0].mxu0
      %872 = vdwg.mxu0
      %v873 = vadd.f32 %v771, %v843
      %v874 = vadd.f32 %v772, %v846
      %v875 = vadd.f32 %v773, %v851
      %v876 = vadd.f32 %v774, %v854
      %v877 = vadd.f32 %v775, %v859
      %v878 = vadd.f32 %v776, %v862
      %v879 = vadd.f32 %v777, %v867
      %v880 = vadd.f32 %v778, %v870
      %s881 = scalar_lea.vmem [#allocation2], 32
      %v882 = vld [vmem:[%s881] sm:$0xff]
      %v883 = vld [vmem:[%s881 + $0x10] sm:$0xff]
      %v884 = vld [vmem:[%s881 + $0x20] sm:$0xff]
      %v885 = vld [vmem:[%s881 + $0x30] sm:$0xff]
      %v886 = vld [vmem:[%s881 + $0x40] sm:$0xff]
      %v887 = vld [vmem:[%s881 + $0x50] sm:$0xff]
      %v888 = vld [vmem:[%s881 + $0x60] sm:$0xff]
      %v889 = vld [vmem:[%s881 + $0x70] sm:$0xff]
      %v890 = vpack.c.bf16 %v883, %v882
      %v891 = vpack.c.bf16 %v885, %v884
      %v892 = vpack.c.bf16 %v887, %v886
      %v893 = vpack.c.bf16 %v889, %v888
      %s894 = scalar_lea.vmem %s1, 24
      %v895 = vld [vmem:[%s894] sm:$0xf]
      %v897 = vsel %vm253, %v890, 0
      %v900 = vsel %vm253, %v891, 0
      %v903 = vsel %vm253, %v892, 0
      %v906 = vsel %vm253, %v893, 0
      %v909 = vsel %vm324, %v895, 0
      %911 = vmatprep.subr.bf16.mxu0 0
      %912 = vmatpush1.bf16.msra.mxu0 %v909
      %913 = vmatprep.subr.bf16.mxu0 0
      %914 = vmatpush1.bf16.msra.mxu0 0
      %915 = vmatprep.subr.bf16.mxu0 0
      %916 = vmatpush1.bf16.msra.mxu0 0
      %917 = vmatprep.subr.bf16.mxu0 0
      %918 = vmatpush1.bf16.msra.mxu0 0
      %919 = vmatprep.subr.bf16.mxu0 0
      %920 = vmatpush1.bf16.msra.mxu0 0
      %921 = vmatprep.subr.bf16.mxu0 0
      %922 = vmatpush1.bf16.msra.mxu0 0
      %923 = vmatprep.subr.bf16.mxu0 0
      %924 = vmatpush1.bf16.msra.mxu0 0
      %925 = vmatprep.subr.bf16.mxu0 0
      %926 = vmatpush1.bf16.msra.mxu0 0
      %927 = vmatprep.subr.bf16.mxu0 0
      %928 = vmatpush1.bf16.msra.mxu0 0
      %929 = vmatprep.subr.bf16.mxu0 0
      %930 = vmatpush1.bf16.msra.mxu0 0
      %931 = vmatprep.subr.bf16.mxu0 0
      %932 = vmatpush1.bf16.msra.mxu0 0
      %933 = vmatprep.subr.bf16.mxu0 0
      %934 = vmatpush1.bf16.msra.mxu0 0
      %935 = vmatprep.subr.bf16.mxu0 0
      %936 = vmatpush1.bf16.msra.mxu0 0
      %937 = vmatprep.subr.bf16.mxu0 0
      %938 = vmatpush1.bf16.msra.mxu0 0
      %939 = vmatprep.subr.bf16.mxu0 0
      %940 = vmatpush1.bf16.msra.mxu0 0
      %941 = vmatprep.subr.bf16.mxu0 0
      %942 = vmatpush1.bf16.msra.mxu0 0
      %943 = vmatprep.mubr.bf16.mxu0 0
      %944 = vmatmul.mubr.bf16.gmra.mrb[0].mxu0 %v897
      %v945 = vpop.f32.mrb[0].mxu0
      %v946 = vadd.f32 0.0, %v945
      %v947 = vpop.f32.mrb[0].mxu0
      %v948 = vpop.f32.mrb[0].mxu0
      %v949 = vadd.f32 0.0, %v948
      %v950 = vpop.f32.mrb[0].mxu0
      %951 = vmatprep.mubr.bf16.mxu0 0
      %952 = vmatmul.mubr.bf16.gmra.mrb[0].mxu0 %v900
      %v953 = vpop.f32.mrb[0].mxu0
      %v954 = vadd.f32 0.0, %v953
      %v955 = vpop.f32.mrb[0].mxu0
      %v956 = vpop.f32.mrb[0].mxu0
      %v957 = vadd.f32 0.0, %v956
      %v958 = vpop.f32.mrb[0].mxu0
      %959 = vmatprep.mubr.bf16.mxu0 0
      %960 = vmatmul.mubr.bf16.gmra.mrb[0].mxu0 %v903
      %v961 = vpop.f32.mrb[0].mxu0
      %v962 = vadd.f32 0.0, %v961
      %v963 = vpop.f32.mrb[0].mxu0
      %v964 = vpop.f32.mrb[0].mxu0
      %v965 = vadd.f32 0.0, %v964
      %v966 = vpop.f32.mrb[0].mxu0
      %967 = vmatprep.mubr.bf16.mxu0 0
      %968 = vmatmul.mubr.bf16.gmra.mrb[0].mxu0 %v906
      %v969 = vpop.f32.mrb[0].mxu0
      %v970 = vadd.f32 0.0, %v969
      %v971 = vpop.f32.mrb[0].mxu0
      %v972 = vpop.f32.mrb[0].mxu0
      %v973 = vadd.f32 0.0, %v972
      %v974 = vpop.f32.mrb[0].mxu0
      %975 = vdwg.mxu0
      %v976 = vadd.f32 %v873, %v946
      %v977 = vadd.f32 %v874, %v949
      %v978 = vadd.f32 %v875, %v954
      %v979 = vadd.f32 %v876, %v957
      %v980 = vadd.f32 %v877, %v962
      %v981 = vadd.f32 %v878, %v965
      %v982 = vadd.f32 %v879, %v970
      %v983 = vadd.f32 %v880, %v973
      %v984 = vld [vmem:[%s881 + $0x1] sm:$0xff]
      %v985 = vld [vmem:[%s881 + $0x11] sm:$0xff]
      %v986 = vld [vmem:[%s881 + $0x21] sm:$0xff]
      %v987 = vld [vmem:[%s881 + $0x31] sm:$0xff]
      %v988 = vld [vmem:[%s881 + $0x41] sm:$0xff]
      %v989 = vld [vmem:[%s881 + $0x51] sm:$0xff]
      %v990 = vld [vmem:[%s881 + $0x61] sm:$0xff]
      %v991 = vld [vmem:[%s881 + $0x71] sm:$0xff]
      %v992 = vpack.c.bf16 %v985, %v984
      %v993 = vpack.c.bf16 %v987, %v986
      %v994 = vpack.c.bf16 %v989, %v988
      %v995 = vpack.c.bf16 %v991, %v990
      %s996 = scalar_lea.vmem %s1, 28
      %v997 = vld [vmem:[%s996] sm:$0xf]
      %v999 = vsel %vm253, %v992, 0
      %v1002 = vsel %vm253, %v993, 0
      %v1005 = vsel %vm253, %v994, 0
      %v1008 = vsel %vm253, %v995, 0
      %v1011 = vsel %vm324, %v997, 0
      %1013 = vmatprep.subr.bf16.mxu0 0
      %1014 = vmatpush1.bf16.msra.mxu0 %v1011
      %1015 = vmatprep.subr.bf16.mxu0 0
      %1016 = vmatpush1.bf16.msra.mxu0 0
      %1017 = vmatprep.subr.bf16.mxu0 0
      %1018 = vmatpush1.bf16.msra.mxu0 0
      %1019 = vmatprep.subr.bf16.mxu0 0
      %1020 = vmatpush1.bf16.msra.mxu0 0
      %1021 = vmatprep.subr.bf16.mxu0 0
      %1022 = vmatpush1.bf16.msra.mxu0 0
      %1023 = vmatprep.subr.bf16.mxu0 0
      %1024 = vmatpush1.bf16.msra.mxu0 0
      %1025 = vmatprep.subr.bf16.mxu0 0
      %1026 = vmatpush1.bf16.msra.mxu0 0
      %1027 = vmatprep.subr.bf16.mxu0 0
      %1028 = vmatpush1.bf16.msra.mxu0 0
      %1029 = vmatprep.subr.bf16.mxu0 0
      %1030 = vmatpush1.bf16.msra.mxu0 0
      %1031 = vmatprep.subr.bf16.mxu0 0
      %1032 = vmatpush1.bf16.msra.mxu0 0
      %1033 = vmatprep.subr.bf16.mxu0 0
      %1034 = vmatpush1.bf16.msra.mxu0 0
      %1035 = vmatprep.subr.bf16.mxu0 0
      %1036 = vmatpush1.bf16.msra.mxu0 0
      %1037 = vmatprep.subr.bf16.mxu0 0
      %1038 = vmatpush1.bf16.msra.mxu0 0
      %1039 = vmatprep.subr.bf16.mxu0 0
      %1040 = vmatpush1.bf16.msra.mxu0 0
      %1041 = vmatprep.subr.bf16.mxu0 0
      %1042 = vmatpush1.bf16.msra.mxu0 0
      %1043 = vmatprep.subr.bf16.mxu0 0
      %1044 = vmatpush1.bf16.msra.mxu0 0
      %1045 = vmatprep.mubr.bf16.mxu0 0
      %1046 = vmatmul.mubr.bf16.gmra.mrb[0].mxu0 %v999
      %v1047 = vpop.f32.mrb[0].mxu0
      %v1048 = vadd.f32 0.0, %v1047
      %v1049 = vpop.f32.mrb[0].mxu0
      %v1050 = vpop.f32.mrb[0].mxu0
      %v1051 = vadd.f32 0.0, %v1050
      %v1052 = vpop.f32.mrb[0].mxu0
      %1053 = vmatprep.mubr.bf16.mxu0 0
      %1054 = vmatmul.mubr.bf16.gmra.mrb[0].mxu0 %v1002
      %v1055 = vpop.f32.mrb[0].mxu0
      %v1056 = vadd.f32 0.0, %v1055
      %v1057 = vpop.f32.mrb[0].mxu0
      %v1058 = vpop.f32.mrb[0].mxu0
      %v1059 = vadd.f32 0.0, %v1058
      %v1060 = vpop.f32.mrb[0].mxu0
      %1061 = vmatprep.mubr.bf16.mxu0 0
      %1062 = vmatmul.mubr.bf16.gmra.mrb[0].mxu0 %v1005
      %v1063 = vpop.f32.mrb[0].mxu0
      %v1064 = vadd.f32 0.0, %v1063
      %v1065 = vpop.f32.mrb[0].mxu0
      %v1066 = vpop.f32.mrb[0].mxu0
      %v1067 = vadd.f32 0.0, %v1066
      %v1068 = vpop.f32.mrb[0].mxu0
      %1069 = vmatprep.mubr.bf16.mxu0 0
      %1070 = vmatmul.mubr.bf16.gmra.mrb[0].mxu0 %v1008
      %v1071 = vpop.f32.mrb[0].mxu0
      %v1072 = vadd.f32 0.0, %v1071
      %v1073 = vpop.f32.mrb[0].mxu0
      %v1074 = vpop.f32.mrb[0].mxu0
      %v1075 = vadd.f32 0.0, %v1074
      %v1076 = vpop.f32.mrb[0].mxu0
      %1077 = vdwg.mxu0
      %v1078 = vadd.f32 %v976, %v1048
      %v1079 = vadd.f32 %v977, %v1051
      %v1080 = vadd.f32 %v978, %v1056
      %v1081 = vadd.f32 %v979, %v1059
      %v1082 = vadd.f32 %v980, %v1064
      %v1083 = vadd.f32 %v981, %v1067
      %v1084 = vadd.f32 %v982, %v1072
      %v1085 = vadd.f32 %v983, %v1075
      %v1086 = vld [vmem:[%s881 + $0x2] sm:$0xff]
      %v1087 = vld [vmem:[%s881 + $0x12] sm:$0xff]
      %v1088 = vld [vmem:[%s881 + $0x22] sm:$0xff]
      %v1089 = vld [vmem:[%s881 + $0x32] sm:$0xff]
      %v1090 = vld [vmem:[%s881 + $0x42] sm:$0xff]
      %v1091 = vld [vmem:[%s881 + $0x52] sm:$0xff]
      %v1092 = vld [vmem:[%s881 + $0x62] sm:$0xff]
      %v1093 = vld [vmem:[%s881 + $0x72] sm:$0xff]
      %v1094 = vpack.c.bf16 %v1087, %v1086
      %v1095 = vpack.c.bf16 %v1089, %v1088
      %v1096 = vpack.c.bf16 %v1091, %v1090
      %v1097 = vpack.c.bf16 %v1093, %v1092
      %s1098 = scalar_lea.vmem %s1, 32
      %v1099 = vld [vmem:[%s1098] sm:$0xf]
      %v1101 = vsel %vm253, %v1094, 0
      %v1104 = vsel %vm253, %v1095, 0
      %v1107 = vsel %vm253, %v1096, 0
      %v1110 = vsel %vm253, %v1097, 0
      %v1113 = vsel %vm324, %v1099, 0
      %1115 = vmatprep.subr.bf16.mxu0 0
      %1116 = vmatpush1.bf16.msra.mxu0 %v1113
      %1117 = vmatprep.subr.bf16.mxu0 0
      %1118 = vmatpush1.bf16.msra.mxu0 0
      %1119 = vmatprep.subr.bf16.mxu0 0
      %1120 = vmatpush1.bf16.msra.mxu0 0
      %1121 = vmatprep.subr.bf16.mxu0 0
      %1122 = vmatpush1.bf16.msra.mxu0 0
      %1123 = vmatprep.subr.bf16.mxu0 0
      %1124 = vmatpush1.bf16.msra.mxu0 0
      %1125 = vmatprep.subr.bf16.mxu0 0
      %1126 = vmatpush1.bf16.msra.mxu0 0
      %1127 = vmatprep.subr.bf16.mxu0 0
      %1128 = vmatpush1.bf16.msra.mxu0 0
      %1129 = vmatprep.subr.bf16.mxu0 0
      %1130 = vmatpush1.bf16.msra.mxu0 0
      %1131 = vmatprep.subr.bf16.mxu0 0
      %1132 = vmatpush1.bf16.msra.mxu0 0
      %1133 = vmatprep.subr.bf16.mxu0 0
      %1134 = vmatpush1.bf16.msra.mxu0 0
      %1135 = vmatprep.subr.bf16.mxu0 0
      %1136 = vmatpush1.bf16.msra.mxu0 0
      %1137 = vmatprep.subr.bf16.mxu0 0
      %1138 = vmatpush1.bf16.msra.mxu0 0
      %1139 = vmatprep.subr.bf16.mxu0 0
      %1140 = vmatpush1.bf16.msra.mxu0 0
      %1141 = vmatprep.subr.bf16.mxu0 0
      %1142 = vmatpush1.bf16.msra.mxu0 0
      %1143 = vmatprep.subr.bf16.mxu0 0
      %1144 = vmatpush1.bf16.msra.mxu0 0
      %1145 = vmatprep.subr.bf16.mxu0 0
      %1146 = vmatpush1.bf16.msra.mxu0 0
      %1147 = vmatprep.mubr.bf16.mxu0 0
      %1148 = vmatmul.mubr.bf16.gmra.mrb[0].mxu0 %v1101
      %v1149 = vpop.f32.mrb[0].mxu0
      %v1150 = vadd.f32 0.0, %v1149
      %v1151 = vpop.f32.mrb[0].mxu0
      %v1152 = vpop.f32.mrb[0].mxu0
      %v1153 = vadd.f32 0.0, %v1152
      %v1154 = vpop.f32.mrb[0].mxu0
      %1155 = vmatprep.mubr.bf16.mxu0 0
      %1156 = vmatmul.mubr.bf16.gmra.mrb[0].mxu0 %v1104
      %v1157 = vpop.f32.mrb[0].mxu0
      %v1158 = vadd.f32 0.0, %v1157
      %v1159 = vpop.f32.mrb[0].mxu0
      %v1160 = vpop.f32.mrb[0].mxu0
      %v1161 = vadd.f32 0.0, %v1160
      %v1162 = vpop.f32.mrb[0].mxu0
      %1163 = vmatprep.mubr.bf16.mxu0 0
      %1164 = vmatmul.mubr.bf16.gmra.mrb[0].mxu0 %v1107
      %v1165 = vpop.f32.mrb[0].mxu0
      %v1166 = vadd.f32 0.0, %v1165
      %v1167 = vpop.f32.mrb[0].mxu0
      %v1168 = vpop.f32.mrb[0].mxu0
      %v1169 = vadd.f32 0.0, %v1168
      %v1170 = vpop.f32.mrb[0].mxu0
      %1171 = vmatprep.mubr.bf16.mxu0 0
      %1172 = vmatmul.mubr.bf16.gmra.mrb[0].mxu0 %v1110
      %v1173 = vpop.f32.mrb[0].mxu0
      %v1174 = vadd.f32 0.0, %v1173
      %v1175 = vpop.f32.mrb[0].mxu0
      %v1176 = vpop.f32.mrb[0].mxu0
      %v1177 = vadd.f32 0.0, %v1176
      %v1178 = vpop.f32.mrb[0].mxu0
      %1179 = vdwg.mxu0
      %v1180 = vadd.f32 %v1078, %v1150
      %v1181 = vadd.f32 %v1079, %v1153
      %v1182 = vadd.f32 %v1080, %v1158
      %v1183 = vadd.f32 %v1081, %v1161
      %v1184 = vadd.f32 %v1082, %v1166
      %v1185 = vadd.f32 %v1083, %v1169
      %v1186 = vadd.f32 %v1084, %v1174
      %v1187 = vadd.f32 %v1085, %v1177
      %v1188 = vpack.c.bf16 %v1180, %v1180
      %v1189 = vpack.c.bf16 %v1181, %v1181
      %v1190 = vpack.c.bf16 %v1182, %v1182
      %v1191 = vpack.c.bf16 %v1183, %v1183
      %v1192 = vpack.c.bf16 %v1184, %v1184
      %v1193 = vpack.c.bf16 %v1185, %v1185
      %v1194 = vpack.c.bf16 %v1186, %v1186
      %v1195 = vpack.c.bf16 %v1187, %v1187
      %vm1196 = vcmask 60416
      %1197 = vst.msk [vmem:[%s182] sm:$0xf] %vm1196, %v1188
      %1198 = vst.msk [vmem:[%s182 + $0x4] sm:$0xf] %vm1196, %v1189
      %1199 = vst.msk [vmem:[%s182 + $0x8] sm:$0xf] %vm1196, %v1190
      %1200 = vst.msk [vmem:[%s182 + $0xc] sm:$0xf] %vm1196, %v1191
      %1201 = vst.msk [vmem:[%s182 + $0x10] sm:$0xf] %vm1196, %v1192
      %1202 = vst.msk [vmem:[%s182 + $0x14] sm:$0xf] %vm1196, %v1193
      %1203 = vst.msk [vmem:[%s182 + $0x18] sm:$0xf] %vm1196, %v1194
      %1204 = vst.msk [vmem:[%s182 + $0x1c] sm:$0xf] %vm1196, %v1195
      %v1205 = vsel %vm253, %v1180, 0.0
      %v1206 = vsel %vm253, %v1181, 0.0
      %v1207 = vadd.f32 %v1205, %v1206
      %v1208 = vsel %vm253, %v1182, 0.0
      %v1209 = vadd.f32 %v1207, %v1208
      %v1210 = vsel %vm253, %v1183, 0.0
      %v1211 = vadd.f32 %v1209, %v1210
      %v1212 = vsel %vm253, %v1184, 0.0
      %v1213 = vadd.f32 %v1211, %v1212
      %v1214 = vsel %vm253, %v1185, 0.0
      %v1215 = vadd.f32 %v1213, %v1214
      %v1216 = vsel %vm253, %v1186, 0.0
      %v1217 = vadd.f32 %v1215, %v1216
      %v1218 = vsel %vm253, %v1187, 0.0
      %v1219 = vadd.f32 %v1217, %v1218
      %v1220 = vrot.slane %v1219, 4
      %v1221 = vadd.f32 %v1219, %v1220
      %v1222 = vrot.slane %v1221, 2
      %v1223 = vadd.f32 %v1221, %v1222
      %v1224 = vrot.slane %v1223, 1
      %v1225 = vadd.f32 %v1223, %v1224
      %v1226 = vmul.f32 %v1225, 0.015625
      %v1227 = vsub.f32 %v1180, %v1226
      %v1228 = vsub.f32 %v1181, %v1226
      %v1229 = vsub.f32 %v1182, %v1226
      %v1230 = vsub.f32 %v1183, %v1226
      %v1231 = vsub.f32 %v1184, %v1226
      %v1232 = vsub.f32 %v1185, %v1226
      %v1233 = vsub.f32 %v1186, %v1226
      %v1234 = vsub.f32 %v1187, %v1226
      %1235 = vst.msk [vmem:[%s187] sm:$0x1] %vm260, %v1226
      %v1236 = vmul.f32 %v1227, %v1227
      %v1237 = vmul.f32 %v1228, %v1228
      %v1238 = vmul.f32 %v1229, %v1229
      %v1239 = vmul.f32 %v1230, %v1230
      %v1240 = vmul.f32 %v1231, %v1231
      %v1241 = vmul.f32 %v1232, %v1232
      %v1242 = vmul.f32 %v1233, %v1233
      %v1243 = vmul.f32 %v1234, %v1234
      %v1244 = vsel %vm253, %v1236, 0.0
      %v1245 = vsel %vm253, %v1237, 0.0
      %v1246 = vadd.f32 %v1244, %v1245
      %v1247 = vsel %vm253, %v1238, 0.0
      %v1248 = vadd.f32 %v1246, %v1247
      %v1249 = vsel %vm253, %v1239, 0.0
      %v1250 = vadd.f32 %v1248, %v1249
      %v1251 = vsel %vm253, %v1240, 0.0
      %v1252 = vadd.f32 %v1250, %v1251
      %v1253 = vsel %vm253, %v1241, 0.0
      %v1254 = vadd.f32 %v1252, %v1253
      %v1255 = vsel %vm253, %v1242, 0.0
      %v1256 = vadd.f32 %v1254, %v1255
      %v1257 = vsel %vm253, %v1243, 0.0
      %v1258 = vadd.f32 %v1256, %v1257
      %v1259 = vrot.slane %v1258, 4
      %v1260 = vadd.f32 %v1258, %v1259
      %v1261 = vrot.slane %v1260, 2
      %v1262 = vadd.f32 %v1260, %v1261
      %v1263 = vrot.slane %v1262, 1
      %v1264 = vadd.f32 %v1262, %v1263
      %1265 = vst.msk [vmem:[%s187 + $0x1] sm:$0x1] %vm260, %v1264
      %s1266 = smul.u32 8, %s15
      %p1267 = scmp.lt.s32.totalorder %s1266, 15
      %s1268 = scalar_select %p1267, %s1266, 15
      %s1269 = smul.addr %s1268, 4
      %s1270 = scalar_lea.vmem %s2, %s1269
      %p1271 = scmp.lt.s32.totalorder %s15, 1
      %s1272 = scalar_select %p1271, %s15, 1
      %s1273 = smul.addr %s1272, 2
      %s1274 = scalar_lea.vmem %s3, %s1273
      // Predicated region
      $region29: #{down_forward.3} parent=27 // pred_check
        %p1275 = pneg %p80
      $region30: #{down_forward.3} parent=27 // pred_check_branch
        %1277 = sbr.rel (%p1275) target = $region32
      $region31: #{down_forward.3} parent=27 // pred_region
        %s1278 = smul.u32 8, %s15
      $region32: #{down_forward.3} parent=27 // pred_fallthru
        _
      // Predicated region
      $region33: #{down_forward.3} parent=27 // pred_check
        %p1279 = pneg %p106
      $region34: #{down_forward.3} parent=27 // pred_check_branch
        %1281 = sbr.rel (%p1279) target = $region36
      $region35: #{down_forward.3} parent=27 // pred_region
        _
      $region36: #{down_forward.3} parent=27 // pred_fallthru
        _
    $region28: #{down_forward.3} parent=5 // pred_fallthru
      _
    %p1282 = scmp.le.s32.totalorder 2, %s10
    // Predicated region
    $region37: #{down_forward.3} parent=5 // pred_check
      %p1283 = pneg %p1282
    $region38: #{down_forward.3} parent=5 // pred_check_branch
      %1285 = sbr.rel (%p1283) target = $region40
    $region39: #{down_forward.3} parent=5 // pred_region
      %s1286 = ssub.s32 %s10, 2
      // Predicated region
      $region41: #{down_forward.3} parent=39 // pred_check
        %p1287 = pneg %p86
      $region42: #{down_forward.3} parent=39 // pred_check_branch
        %1289 = sbr.rel (%p1287) target = $region44
      $region43: #{down_forward.3} parent=39 // pred_region
        %s1290 = smul.u32 8, %s16
        %p1291 = scmp.lt.s32.totalorder %s1290, 15
        %s1292 = scalar_select %p1291, %s1290, 15
        %s1293 = smul.addr %s1292, 4
        %s1294 = scalar_lea.vmem %s2, %s1293
      $region44: #{down_forward.3} parent=39 // pred_fallthru
        _
      // Predicated region
      $region45: #{down_forward.3} parent=39 // pred_check
        %p1295 = pneg %p112
      $region46: #{down_forward.3} parent=39 // pred_check_branch
        %1297 = sbr.rel (%p1295) target = $region48
      $region47: #{down_forward.3} parent=39 // pred_region
        %p1298 = scmp.lt.s32.totalorder %s16, 1
        %s1299 = scalar_select %p1298, %s16, 1
        %s1300 = smul.addr %s1299, 2
        %s1301 = scalar_lea.vmem %s3, %s1300
      $region48: #{down_forward.3} parent=39 // pred_fallthru
        _
    $region40: #{down_forward.3} parent=5 // pred_fallthru
      _
  $region6: #{down_forward.3} parent=0 // loop_footer
    %s14 = sadd.s32 1, %s10
  $region7: #{down_forward.3} parent=0 // loop_footer_branch
    %9 = sbr.rel target = $region3
  $region8: #{down_forward.3} parent=0 // loop_exit
    _

// kernel: down_forward.4
$region0: #{down_forward.4}
  #allocation0 [shape = 'u32[]', space=smem, size = 0x4, offset = 0x4, fixed_abs, tag = 'smem constant byte address 0x4 - core index']
  #allocation1 [shape = 'u32[144,128]{1,0:T(1,128)}', space=vmem, size = 0x12000, scoped, tag = 'internal scratch']
  #allocation2 [shape = 'f32[10,16,8]{2,1,0:T(8,128)}', space=vmem, size = 0x14000, scoped, tag = 'scratch operand']
  %s0 = inlined_call_operand.vmem [shape: bf16[16,8,8], index: 0, kind: input, shape index: {}]
  %s1 = inlined_call_operand.vmem [shape: f32[1,8], index: 1, kind: input, shape index: {}]
  %s2 = inlined_call_operand.vmem [shape: f32[1,8], index: 2, kind: input, shape index: {}]
  %s3 = inlined_call_operand.vmem [shape: bf16[9,8,8], index: 3, kind: input, shape index: {}]
  %s4 = inlined_call_operand.vmem [shape: bf16[16,8,8], index: 4, kind: output, shape index: {0}]
  %s5 = inlined_call_operand.vmem [shape: f32[2,2,8], index: 5, kind: output, shape index: {1}]
  %6 = xla_tuple %s4, %s5
  %s7 = sld [smem:[#allocation0]]
  $region57: #{down_forward.4} parent=0
    _
  %s9 = ssub.s32 1, %s7
  %s10 = scalar_select 0, %s9, %s7
  loop: start=0, step=1, limit=4
  $region2: #{down_forward.4} parent=0 // loop_pre_header
    _
  $region3: #{down_forward.4} parent=0 // loop_header
    %s12 = sphi 0, %s16
    %p13 = scmp.ge.s32.totalorder %s12, 4
    %s22 = sphi 0, %s24
    %s25 = sphi 0, %s22
    %s26 = sphi 0, %s25
    %s42 = sphi 0, %s26
    %s46 = sphi 0, %s46
    %s48 = sphi 0, %s46
    %s49 = sphi 0, %s48
    %s63 = sphi 0, %s49
    %s67 = sphi 0, %s67
    %s69 = sphi 0, %s67
    %s70 = sphi 0, %s69
    %s84 = sphi 0, %s70
    %s88 = sphi 0, %s88
    %s90 = sphi 0, %s88
    %s91 = sphi 0, %s90
    %s105 = sphi 0, %s91
    %s111 = sphi 0, %s113
    %s114 = sphi 0, %s111
    %s115 = sphi 0, %s114
    %s131 = sphi 0, %s115
    %s137 = sphi 0, %s139
    %s140 = sphi 0, %s137
    %s141 = sphi 0, %s140
    %s157 = sphi 0, %s141
  $region4: #{down_forward.4} parent=0 // loop_header_branch
    %15 = sbr.rel (%p13) target = $region8
  $region5: #{down_forward.4} parent=0 // loop_body
    %s17 = ssub.s32 %s12, 1
    %s18 = ssub.s32 %s12, 2
    %s19 = sadd.s32 %s12, 1
    %s20 = ssub.s32 %s12, %s19
    %p21 = scmp.eq.s32.totalorder %s20, 0
    %s23 = sadd.s32 %s22, 1
    %s24 = scalar_select %p21, %s22, %s23
    %p27 = pneg %p21
    %p28 = scmp.eq.s32.totalorder %s12, 1
    %p29 = por %p27, %p28
    %p30 = scmp.ne.s32.totalorder %s22, %s25
    %p31 = scmp.eq.s32.totalorder %s12, 0
    %p32 = por %p30, %p31
    %p33 = scmp.ne.s32.totalorder %s22, %s25
    %p34 = scmp.eq.s32.totalorder %s17, 1
    %p35 = por %p33, %p34
    %p36 = scmp.ne.s32.totalorder %s25, %s26
    %p37 = scmp.eq.s32.totalorder %s17, 0
    %p38 = por %p36, %p37
    %p39 = scmp.ne.s32.totalorder %s25, %s26
    %p40 = scmp.eq.s32.totalorder %s18, 1
    %p41 = por %p39, %p40
    %p43 = scmp.ne.s32.totalorder %s26, %s42
    %p44 = scmp.eq.s32.totalorder %s18, 0
    %p45 = por %p43, %p44
    %s47 = sadd.s32 %s46, 1
    %p50 = scmp.eq.s32.totalorder %s12, 1
    %p51 = scmp.ne.s32.totalorder %s46, %s48
    %p52 = scmp.eq.s32.totalorder %s12, 0
    %p53 = por %p51, %p52
    %p54 = scmp.ne.s32.totalorder %s46, %s48
    %p55 = scmp.eq.s32.totalorder %s17, 1
    %p56 = por %p54, %p55
    %p57 = scmp.ne.s32.totalorder %s48, %s49
    %p58 = scmp.eq.s32.totalorder %s17, 0
    %p59 = por %p57, %p58
    %p60 = scmp.ne.s32.totalorder %s48, %s49
    %p61 = scmp.eq.s32.totalorder %s18, 1
    %p62 = por %p60, %p61
    %p64 = scmp.ne.s32.totalorder %s49, %s63
    %p65 = scmp.eq.s32.totalorder %s18, 0
    %p66 = por %p64, %p65
    %s68 = sadd.s32 %s67, 1
    %p71 = scmp.eq.s32.totalorder %s12, 1
    %p72 = scmp.ne.s32.totalorder %s67, %s69
    %p73 = scmp.eq.s32.totalorder %s12, 0
    %p74 = por %p72, %p73
    %p75 = scmp.ne.s32.totalorder %s67, %s69
    %p76 = scmp.eq.s32.totalorder %s17, 1
    %p77 = por %p75, %p76
    %p78 = scmp.ne.s32.totalorder %s69, %s70
    %p79 = scmp.eq.s32.totalorder %s17, 0
    %p80 = por %p78, %p79
    %p81 = scmp.ne.s32.totalorder %s69, %s70
    %p82 = scmp.eq.s32.totalorder %s18, 1
    %p83 = por %p81, %p82
    %p85 = scmp.ne.s32.totalorder %s70, %s84
    %p86 = scmp.eq.s32.totalorder %s18, 0
    %p87 = por %p85, %p86
    %s89 = sadd.s32 %s88, 1
    %p92 = scmp.eq.s32.totalorder %s12, 1
    %p93 = scmp.ne.s32.totalorder %s88, %s90
    %p94 = scmp.eq.s32.totalorder %s12, 0
    %p95 = por %p93, %p94
    %p96 = scmp.ne.s32.totalorder %s88, %s90
    %p97 = scmp.eq.s32.totalorder %s17, 1
    %p98 = por %p96, %p97
    %p99 = scmp.ne.s32.totalorder %s90, %s91
    %p100 = scmp.eq.s32.totalorder %s17, 0
    %p101 = por %p99, %p100
    %p102 = scmp.ne.s32.totalorder %s90, %s91
    %p103 = scmp.eq.s32.totalorder %s18, 1
    %p104 = por %p102, %p103
    %p106 = scmp.ne.s32.totalorder %s91, %s105
    %p107 = scmp.eq.s32.totalorder %s18, 0
    %p108 = por %p106, %p107
    %s109 = ssub.s32 %s12, %s19
    %p110 = scmp.eq.s32.totalorder %s109, 0
    %s112 = sadd.s32 %s111, 1
    %s113 = scalar_select %p110, %s111, %s112
    %p116 = pneg %p110
    %p117 = scmp.eq.s32.totalorder %s12, 1
    %p118 = por %p116, %p117
    %p119 = scmp.ne.s32.totalorder %s111, %s114
    %p120 = scmp.eq.s32.totalorder %s12, 0
    %p121 = por %p119, %p120
    %p122 = scmp.ne.s32.totalorder %s111, %s114
    %p123 = scmp.eq.s32.totalorder %s17, 1
    %p124 = por %p122, %p123
    %p125 = scmp.ne.s32.totalorder %s114, %s115
    %p126 = scmp.eq.s32.totalorder %s17, 0
    %p127 = por %p125, %p126
    %p128 = scmp.ne.s32.totalorder %s114, %s115
    %p129 = scmp.eq.s32.totalorder %s18, 1
    %p130 = por %p128, %p129
    %p132 = scmp.ne.s32.totalorder %s115, %s131
    %p133 = scmp.eq.s32.totalorder %s18, 0
    %p134 = por %p132, %p133
    %s135 = ssub.s32 %s12, %s19
    %p136 = scmp.eq.s32.totalorder %s135, 0
    %s138 = sadd.s32 %s137, 1
    %s139 = scalar_select %p136, %s137, %s138
    %p142 = pneg %p136
    %p143 = scmp.eq.s32.totalorder %s12, 1
    %p144 = por %p142, %p143
    %p145 = scmp.ne.s32.totalorder %s137, %s140
    %p146 = scmp.eq.s32.totalorder %s12, 0
    %p147 = por %p145, %p146
    %p148 = scmp.ne.s32.totalorder %s137, %s140
    %p149 = scmp.eq.s32.totalorder %s17, 1
    %p150 = por %p148, %p149
    %p151 = scmp.ne.s32.totalorder %s140, %s141
    %p152 = scmp.eq.s32.totalorder %s17, 0
    %p153 = por %p151, %p152
    %p154 = scmp.ne.s32.totalorder %s140, %s141
    %p155 = scmp.eq.s32.totalorder %s18, 1
    %p156 = por %p154, %p155
    %p158 = scmp.ne.s32.totalorder %s141, %s157
    %p159 = scmp.eq.s32.totalorder %s18, 0
    %p160 = por %p158, %p159
    %p161 = scmp.le.s32.totalorder 1, %s12
    %p162 = scmp.lt.s32.totalorder %s12, 3
    %p163 = pnand %p161, %p162
    %p164 = pneg %p163
    // Predicated region
    $region9: #{down_forward.4} parent=5 // pred_check
      _
    $region10: #{down_forward.4} parent=5 // pred_check_branch
      %166 = sbr.rel (%p163) target = $region12
    $region11: #{down_forward.4} parent=5 // pred_region
      %s167 = ssub.s32 %s12, 1
      // Predicated region
      $region13: #{down_forward.4} parent=11 // pred_check
        %p168 = pneg %p59
      $region14: #{down_forward.4} parent=11 // pred_check_branch
        %170 = sbr.rel (%p168) target = $region16
      $region15: #{down_forward.4} parent=11 // pred_region
        _
      $region16: #{down_forward.4} parent=11 // pred_fallthru
        _
      // Predicated region
      $region17: #{down_forward.4} parent=11 // pred_check
        %p171 = pneg %p80
      $region18: #{down_forward.4} parent=11 // pred_check_branch
        %173 = sbr.rel (%p171) target = $region20
      $region19: #{down_forward.4} parent=11 // pred_region
        _
      $region20: #{down_forward.4} parent=11 // pred_fallthru
        _
      // Predicated region
      $region21: #{down_forward.4} parent=11 // pred_check
        %p174 = pneg %p101
      $region22: #{down_forward.4} parent=11 // pred_check_branch
        %176 = sbr.rel (%p174) target = $region24
      $region23: #{down_forward.4} parent=11 // pred_region
        _
      $region24: #{down_forward.4} parent=11 // pred_fallthru
        _
    $region12: #{down_forward.4} parent=5 // pred_fallthru
      _
    %p177 = scmp.lt.s32.totalorder %s12, 2
    // Predicated region
    $region25: #{down_forward.4} parent=5 // pred_check
      %p178 = pneg %p177
    $region26: #{down_forward.4} parent=5 // pred_check_branch
      %180 = sbr.rel (%p178) target = $region28
    $region27: #{down_forward.4} parent=5 // pred_region
      // Predicated region
      $region29: #{down_forward.4} parent=27 // pred_check
        %p181 = pneg %p32
      $region30: #{down_forward.4} parent=27 // pred_check_branch
        %183 = sbr.rel (%p181) target = $region32
      $region31: #{down_forward.4} parent=27 // pred_region
        %s184 = smul.u32 8, %s12
        %p185 = scmp.lt.s32.totalorder %s184, 15
        %s186 = scalar_select %p185, %s184, 15
        %s187 = smul.addr %s186, 4
        %s188 = scalar_lea.vmem %s0, %s187
        %s189 = smul.u32 8, %s12
      $region32: #{down_forward.4} parent=27 // pred_fallthru
        _
    $region28: #{down_forward.4} parent=5 // pred_fallthru
      _
    %p190 = scmp.le.s32.totalorder 1, %s12
    %p191 = scmp.lt.s32.totalorder %s12, 3
    %p192 = pnand %p190, %p191
    %p193 = pneg %p192
    // Predicated region
    $region33: #{down_forward.4} parent=5 // pred_check
      _
    $region34: #{down_forward.4} parent=5 // pred_check_branch
      %195 = sbr.rel (%p192) target = $region36
    $region35: #{down_forward.4} parent=5 // pred_region
      %s196 = ssub.s32 %s12, 1
      %s197 = smul.u32 8, %s17
      %p198 = scmp.lt.s32.totalorder %s197, 15
      %s199 = scalar_select %p198, %s197, 15
      %s200 = smul.addr %s199, 4
      %s201 = scalar_lea.vmem %s0, %s200
      %p202 = pneg %p38
      %p203 = pneg %p35
      %p204 = pneg %p59
      %p205 = pneg %p56
      %p206 = pneg %p80
      %p207 = pneg %p77
      %p208 = pneg %p101
      %p209 = pneg %p98
      %p210 = pneg %p127
      %p211 = pneg %p124
      %s212 = smul.u32 8, %s17
      %p213 = scmp.lt.s32.totalorder %s212, 15
      %s214 = scalar_select %p213, %s212, 15
      %s215 = smul.addr %s214, 4
      %s216 = scalar_lea.vmem %s4, %s215
      %p217 = pneg %p153
      %p218 = pneg %p150
      %p219 = scmp.lt.s32.totalorder %s17, 1
      %s220 = scalar_select %p219, %s17, 1
      %s221 = smul.addr %s220, 2
      %s222 = scalar_lea.vmem %s5, %s221
      %s223 = smul.u32 8, %s17
      %p224 = scmp.lt.s32.totalorder %s223, 15
      %s225 = scalar_select %p224, %s223, 15
      %s226 = smul.addr %s225, 4
      %s227 = scalar_lea.vmem %s0, %s226
      %s228 = smul.u32 8, %s17
      %s229 = smul.u32 8, %s17
      %p230 = scmp.lt.s32.totalorder %s229, 15
      %s231 = scalar_select %p230, %s229, 15
      %s232 = smul.addr %s231, 4
      %s233 = scalar_lea.vmem %s4, %s232
      %s234 = smul.u32 8, %s17
      %p235 = scmp.lt.s32.totalorder %s17, 1
      %s236 = scalar_select %p235, %s17, 1
      %s237 = smul.addr %s236, 2
      %s238 = scalar_lea.vmem %s5, %s237
      %v240 = vld [vmem:[%s227] sm:$0xf]
      %v241 = vld [vmem:[%s227 + $0x4] sm:$0xf]
      %v242 = vld [vmem:[%s227 + $0x8] sm:$0xf]
      %v243 = vld [vmem:[%s227 + $0xc] sm:$0xf]
      %v244 = vld [vmem:[%s227 + $0x10] sm:$0xf]
      %v245 = vld [vmem:[%s227 + $0x14] sm:$0xf]
      %v246 = vld [vmem:[%s227 + $0x18] sm:$0xf]
      %v247 = vld [vmem:[%s227 + $0x1c] sm:$0xf]
      %v248 = vunpack.c.l.bf16 %v240
      %v249 = vunpack.c.l.bf16 %v241
      %v250 = vunpack.c.l.bf16 %v242
      %v251 = vunpack.c.l.bf16 %v243
      %v252 = vunpack.c.l.bf16 %v244
      %v253 = vunpack.c.l.bf16 %v245
      %v254 = vunpack.c.l.bf16 %v246
      %v255 = vunpack.c.l.bf16 %v247
      %v256 = vld [vmem:[%s1] sm:$0x1]
      %v258 = vlaneseq
      %v259 = vshrl.u32 %v258, 7
      %v260 = vsub.s32 0, %v259
      %v261 = vrot.slane %v256, %v260
      %v263 = vmul.f32 %v248, %v261
      %v264 = vmul.f32 %v249, %v261
      %v265 = vmul.f32 %v250, %v261
      %v266 = vmul.f32 %v251, %v261
      %v267 = vmul.f32 %v252, %v261
      %v268 = vmul.f32 %v253, %v261
      %v269 = vmul.f32 %v254, %v261
      %v270 = vmul.f32 %v255, %v261
      %v271 = vld [vmem:[%s2] sm:$0x1]
      %v273 = vlaneseq
      %v274 = vshrl.u32 %v273, 7
      %v275 = vsub.s32 0, %v274
      %v276 = vrot.slane %v271, %v275
      %v278 = vadd.f32 %v263, %v276
      %v279 = vadd.f32 %v264, %v276
      %v280 = vadd.f32 %v265, %v276
      %v281 = vadd.f32 %v266, %v276
      %v282 = vadd.f32 %v267, %v276
      %v283 = vadd.f32 %v268, %v276
      %v284 = vadd.f32 %v269, %v276
      %v285 = vadd.f32 %v270, %v276
      %v286 = vmax.f32 %v278, 0.0
      %v287 = vmax.f32 %v279, 0.0
      %v288 = vmax.f32 %v280, 0.0
      %v289 = vmax.f32 %v281, 0.0
      %v290 = vmax.f32 %v282, 0.0
      %v291 = vmax.f32 %v283, 0.0
      %v292 = vmax.f32 %v284, 0.0
      %v293 = vmax.f32 %v285, 0.0
      %vm294 = vcmask 64512
      %295 = vst.msk [vmem:[#allocation2] sm:$0xff] %vm294, 0.0
      %296 = vst.msk [vmem:[#allocation2 + $0x8] sm:$0xff] %vm294, 0.0
      %s297 = scalar_lea.vmem [#allocation2], 144
      %298 = vst.msk [vmem:[%s297] sm:$0xff] %vm294, 0.0
      %299 = vst.msk [vmem:[%s297 + $0x8] sm:$0xff] %vm294, 0.0
      %s300 = scalar_lea.vmem [#allocation2], 16
      %vm301 = vcmask 57344
      %302 = vst.msk [vmem:[%s300] sm:$0x1] %vm301, 0.0
      %303 = vst.msk [vmem:[%s300 + $0x10] sm:$0x1] %vm301, 0.0
      %304 = vst.msk [vmem:[%s300 + $0x20] sm:$0x1] %vm301, 0.0
      %305 = vst.msk [vmem:[%s300 + $0x30] sm:$0x1] %vm301, 0.0
      %306 = vst.msk [vmem:[%s300 + $0x40] sm:$0x1] %vm301, 0.0
      %307 = vst.msk [vmem:[%s300 + $0x50] sm:$0x1] %vm301, 0.0
      %308 = vst.msk [vmem:[%s300 + $0x60] sm:$0x1] %vm301, 0.0
      %309 = vst.msk [vmem:[%s300 + $0x70] sm:$0x1] %vm301, 0.0
      %310 = vst.msk [vmem:[%s300 + $0x9] sm:$0x1] %vm301, 0.0
      %311 = vst.msk [vmem:[%s300 + $0x19] sm:$0x1] %vm301, 0.0
      %312 = vst.msk [vmem:[%s300 + $0x29] sm:$0x1] %vm301, 0.0
      %313 = vst.msk [vmem:[%s300 + $0x39] sm:$0x1] %vm301, 0.0
      %314 = vst.msk [vmem:[%s300 + $0x49] sm:$0x1] %vm301, 0.0
      %315 = vst.msk [vmem:[%s300 + $0x59] sm:$0x1] %vm301, 0.0
      %316 = vst.msk [vmem:[%s300 + $0x69] sm:$0x1] %vm301, 0.0
      %317 = vst.msk [vmem:[%s300 + $0x79] sm:$0x1] %vm301, 0.0
      %318 = vst.msk [vmem:[%s300 + $0x1] sm:$0xff] %vm294, %v286
      %319 = vst.msk [vmem:[%s300 + $0x11] sm:$0xff] %vm294, %v287
      %320 = vst.msk [vmem:[%s300 + $0x21] sm:$0xff] %vm294, %v288
      %321 = vst.msk [vmem:[%s300 + $0x31] sm:$0xff] %vm294, %v289
      %322 = vst.msk [vmem:[%s300 + $0x41] sm:$0xff] %vm294, %v290
      %323 = vst.msk [vmem:[%s300 + $0x51] sm:$0xff] %vm294, %v291
      %324 = vst.msk [vmem:[%s300 + $0x61] sm:$0xff] %vm294, %v292
      %325 = vst.msk [vmem:[%s300 + $0x71] sm:$0xff] %vm294, %v293
      %v326 = vld [vmem:[#allocation2] sm:$0xff]
      %v327 = vld [vmem:[#allocation2 + $0x10] sm:$0xff]
      %v328 = vld [vmem:[#allocation2 + $0x20] sm:$0xff]
      %v329 = vld [vmem:[#allocation2 + $0x30] sm:$0xff]
      %v330 = vld [vmem:[#allocation2 + $0x40] sm:$0xff]
      %v331 = vld [vmem:[#allocation2 + $0x50] sm:$0xff]
      %v332 = vld [vmem:[#allocation2 + $0x60] sm:$0xff]
      %v333 = vld [vmem:[#allocation2 + $0x70] sm:$0xff]
      %v334 = vpack.c.bf16 %v327, %v326
      %v335 = vpack.c.bf16 %v329, %v328
      %v336 = vpack.c.bf16 %v331, %v330
      %v337 = vpack.c.bf16 %v333, %v332
      %v338 = vld [vmem:[%s3] sm:$0xf]
      %v339 = vld [vmem:[#allocation2 + $0x1] sm:$0xff]
      %v340 = vld [vmem:[#allocation2 + $0x11] sm:$0xff]
      %v341 = vld [vmem:[#allocation2 + $0x21] sm:$0xff]
      %v342 = vld [vmem:[#allocation2 + $0x31] sm:$0xff]
      %v343 = vld [vmem:[#allocation2 + $0x41] sm:$0xff]
      %v344 = vld [vmem:[#allocation2 + $0x51] sm:$0xff]
      %v345 = vld [vmem:[#allocation2 + $0x61] sm:$0xff]
      %v346 = vld [vmem:[#allocation2 + $0x71] sm:$0xff]
      %v347 = vpack.c.bf16 %v340, %v339
      %v348 = vpack.c.bf16 %v342, %v341
      %v349 = vpack.c.bf16 %v344, %v343
      %v350 = vpack.c.bf16 %v346, %v345
      %s351 = scalar_lea.vmem %s3, 4
      %v352 = vld [vmem:[%s351] sm:$0xf]
      %v354 = vsel %vm294, %v347, 0
      %v357 = vsel %vm294, %v348, 0
      %v360 = vsel %vm294, %v349, 0
      %v363 = vsel %vm294, %v350, 0
      %vm365 = vcmask 1043456
      %v367 = vsel %vm365, %v352, 0
      %369 = vmatprep.subr.bf16.mxu0 0
      %370 = vmatpush1.bf16.msra.mxu0 %v367
      %371 = vmatprep.subr.bf16.mxu0 0
      %372 = vmatpush1.bf16.msra.mxu0 0
      %373 = vmatprep.subr.bf16.mxu0 0
      %374 = vmatpush1.bf16.msra.mxu0 0
      %375 = vmatprep.subr.bf16.mxu0 0
      %376 = vmatpush1.bf16.msra.mxu0 0
      %377 = vmatprep.subr.bf16.mxu0 0
      %378 = vmatpush1.bf16.msra.mxu0 0
      %379 = vmatprep.subr.bf16.mxu0 0
      %380 = vmatpush1.bf16.msra.mxu0 0
      %381 = vmatprep.subr.bf16.mxu0 0
      %382 = vmatpush1.bf16.msra.mxu0 0
      %383 = vmatprep.subr.bf16.mxu0 0
      %384 = vmatpush1.bf16.msra.mxu0 0
      %385 = vmatprep.subr.bf16.mxu0 0
      %386 = vmatpush1.bf16.msra.mxu0 0
      %387 = vmatprep.subr.bf16.mxu0 0
      %388 = vmatpush1.bf16.msra.mxu0 0
      %389 = vmatprep.subr.bf16.mxu0 0
      %390 = vmatpush1.bf16.msra.mxu0 0
      %391 = vmatprep.subr.bf16.mxu0 0
      %392 = vmatpush1.bf16.msra.mxu0 0
      %393 = vmatprep.subr.bf16.mxu0 0
      %394 = vmatpush1.bf16.msra.mxu0 0
      %395 = vmatprep.subr.bf16.mxu0 0
      %396 = vmatpush1.bf16.msra.mxu0 0
      %397 = vmatprep.subr.bf16.mxu0 0
      %398 = vmatpush1.bf16.msra.mxu0 0
      %399 = vmatprep.subr.bf16.mxu0 0
      %400 = vmatpush1.bf16.msra.mxu0 0
      %401 = vmatprep.mubr.bf16.mxu0 0
      %402 = vmatmul.mubr.bf16.gmra.mrb[0].mxu0 %v354
      %v403 = vpop.f32.mrb[0].mxu0
      %v404 = vadd.f32 0.0, %v403
      %v405 = vpop.f32.mrb[0].mxu0
      %v406 = vpop.f32.mrb[0].mxu0
      %v407 = vadd.f32 0.0, %v406
      %v408 = vpop.f32.mrb[0].mxu0
      %409 = vmatprep.mubr.bf16.mxu0 0
      %410 = vmatmul.mubr.bf16.gmra.mrb[0].mxu0 %v357
      %v411 = vpop.f32.mrb[0].mxu0
      %v412 = vadd.f32 0.0, %v411
      %v413 = vpop.f32.mrb[0].mxu0
      %v414 = vpop.f32.mrb[0].mxu0
      %v415 = vadd.f32 0.0, %v414
      %v416 = vpop.f32.mrb[0].mxu0
      %417 = vmatprep.mubr.bf16.mxu0 0
      %418 = vmatmul.mubr.bf16.gmra.mrb[0].mxu0 %v360
      %v419 = vpop.f32.mrb[0].mxu0
      %v420 = vadd.f32 0.0, %v419
      %v421 = vpop.f32.mrb[0].mxu0
      %v422 = vpop.f32.mrb[0].mxu0
      %v423 = vadd.f32 0.0, %v422
      %v424 = vpop.f32.mrb[0].mxu0
      %425 = vmatprep.mubr.bf16.mxu0 0
      %426 = vmatmul.mubr.bf16.gmra.mrb[0].mxu0 %v363
      %v427 = vpop.f32.mrb[0].mxu0
      %v428 = vadd.f32 0.0, %v427
      %v429 = vpop.f32.mrb[0].mxu0
      %v430 = vpop.f32.mrb[0].mxu0
      %v431 = vadd.f32 0.0, %v430
      %v432 = vpop.f32.mrb[0].mxu0
      %433 = vdwg.mxu0
      %v435 = vsel %vm294, %v334, 0
      %v438 = vsel %vm294, %v335, 0
      %v441 = vsel %vm294, %v336, 0
      %v444 = vsel %vm294, %v337, 0
      %v447 = vsel %vm365, %v338, 0
      %449 = vmatprep.subr.bf16.mxu0 0
      %450 = vmatpush1.bf16.msra.mxu0 %v447
      %451 = vmatprep.subr.bf16.mxu0 0
      %452 = vmatpush1.bf16.msra.mxu0 0
      %453 = vmatprep.subr.bf16.mxu0 0
      %454 = vmatpush1.bf16.msra.mxu0 0
      %455 = vmatprep.subr.bf16.mxu0 0
      %456 = vmatpush1.bf16.msra.mxu0 0
      %457 = vmatprep.subr.bf16.mxu0 0
      %458 = vmatpush1.bf16.msra.mxu0 0
      %459 = vmatprep.subr.bf16.mxu0 0
      %460 = vmatpush1.bf16.msra.mxu0 0
      %461 = vmatprep.subr.bf16.mxu0 0
      %462 = vmatpush1.bf16.msra.mxu0 0
      %463 = vmatprep.subr.bf16.mxu0 0
      %464 = vmatpush1.bf16.msra.mxu0 0
      %465 = vmatprep.subr.bf16.mxu0 0
      %466 = vmatpush1.bf16.msra.mxu0 0
      %467 = vmatprep.subr.bf16.mxu0 0
      %468 = vmatpush1.bf16.msra.mxu0 0
      %469 = vmatprep.subr.bf16.mxu0 0
      %470 = vmatpush1.bf16.msra.mxu0 0
      %471 = vmatprep.subr.bf16.mxu0 0
      %472 = vmatpush1.bf16.msra.mxu0 0
      %473 = vmatprep.subr.bf16.mxu0 0
      %474 = vmatpush1.bf16.msra.mxu0 0
      %475 = vmatprep.subr.bf16.mxu0 0
      %476 = vmatpush1.bf16.msra.mxu0 0
      %477 = vmatprep.subr.bf16.mxu0 0
      %478 = vmatpush1.bf16.msra.mxu0 0
      %479 = vmatprep.subr.bf16.mxu0 0
      %480 = vmatpush1.bf16.msra.mxu0 0
      %481 = vmatprep.mubr.bf16.mxu0 0
      %482 = vmatmul.mubr.bf16.gmra.mrb[0].mxu0 %v435
      %v483 = vpop.f32.mrb[0].mxu0
      %v484 = vadd.f32 %v404, %v483
      %v485 = vpop.f32.mrb[0].mxu0
      %v486 = vpop.f32.mrb[0].mxu0
      %v487 = vadd.f32 %v407, %v486
      %v488 = vpop.f32.mrb[0].mxu0
      %489 = vmatprep.mubr.bf16.mxu0 0
      %490 = vmatmul.mubr.bf16.gmra.mrb[0].mxu0 %v438
      %v491 = vpop.f32.mrb[0].mxu0
      %v492 = vadd.f32 %v412, %v491
      %v493 = vpop.f32.mrb[0].mxu0
      %v494 = vpop.f32.mrb[0].mxu0
      %v495 = vadd.f32 %v415, %v494
      %v496 = vpop.f32.mrb[0].mxu0
      %497 = vmatprep.mubr.bf16.mxu0 0
      %498 = vmatmul.mubr.bf16.gmra.mrb[0].mxu0 %v441
      %v499 = vpop.f32.mrb[0].mxu0
      %v500 = vadd.f32 %v420, %v499
      %v501 = vpop.f32.mrb[0].mxu0
      %v502 = vpop.f32.mrb[0].mxu0
      %v503 = vadd.f32 %v423, %v502
      %v504 = vpop.f32.mrb[0].mxu0
      %505 = vmatprep.mubr.bf16.mxu0 0
      %506 = vmatmul.mubr.bf16.gmra.mrb[0].mxu0 %v444
      %v507 = vpop.f32.mrb[0].mxu0
      %v508 = vadd.f32 %v428, %v507
      %v509 = vpop.f32.mrb[0].mxu0
      %v510 = vpop.f32.mrb[0].mxu0
      %v511 = vadd.f32 %v431, %v510
      %v512 = vpop.f32.mrb[0].mxu0
      %513 = vdwg.mxu0
      %v514 = vld [vmem:[#allocation2 + $0x2] sm:$0xff]
      %v515 = vld [vmem:[#allocation2 + $0x12] sm:$0xff]
      %v516 = vld [vmem:[#allocation2 + $0x22] sm:$0xff]
      %v517 = vld [vmem:[#allocation2 + $0x32] sm:$0xff]
      %v518 = vld [vmem:[#allocation2 + $0x42] sm:$0xff]
      %v519 = vld [vmem:[#allocation2 + $0x52] sm:$0xff]
      %v520 = vld [vmem:[#allocation2 + $0x62] sm:$0xff]
      %v521 = vld [vmem:[#allocation2 + $0x72] sm:$0xff]
      %v522 = vpack.c.bf16 %v515, %v514
      %v523 = vpack.c.bf16 %v517, %v516
      %v524 = vpack.c.bf16 %v519, %v518
      %v525 = vpack.c.bf16 %v521, %v520
      %s526 = scalar_lea.vmem %s3, 8
      %v527 = vld [vmem:[%s526] sm:$0xf]
      %v529 = vsel %vm294, %v522, 0
      %v532 = vsel %vm294, %v523, 0
      %v535 = vsel %vm294, %v524, 0
      %v538 = vsel %vm294, %v525, 0
      %v541 = vsel %vm365, %v527, 0
      %543 = vmatprep.subr.bf16.mxu0 0
      %544 = vmatpush1.bf16.msra.mxu0 %v541
      %545 = vmatprep.subr.bf16.mxu0 0
      %546 = vmatpush1.bf16.msra.mxu0 0
      %547 = vmatprep.subr.bf16.mxu0 0
      %548 = vmatpush1.bf16.msra.mxu0 0
      %549 = vmatprep.subr.bf16.mxu0 0
      %550 = vmatpush1.bf16.msra.mxu0 0
      %551 = vmatprep.subr.bf16.mxu0 0
      %552 = vmatpush1.bf16.msra.mxu0 0
      %553 = vmatprep.subr.bf16.mxu0 0
      %554 = vmatpush1.bf16.msra.mxu0 0
      %555 = vmatprep.subr.bf16.mxu0 0
      %556 = vmatpush1.bf16.msra.mxu0 0
      %557 = vmatprep.subr.bf16.mxu0 0
      %558 = vmatpush1.bf16.msra.mxu0 0
      %559 = vmatprep.subr.bf16.mxu0 0
      %560 = vmatpush1.bf16.msra.mxu0 0
      %561 = vmatprep.subr.bf16.mxu0 0
      %562 = vmatpush1.bf16.msra.mxu0 0
      %563 = vmatprep.subr.bf16.mxu0 0
      %564 = vmatpush1.bf16.msra.mxu0 0
      %565 = vmatprep.subr.bf16.mxu0 0
      %566 = vmatpush1.bf16.msra.mxu0 0
      %567 = vmatprep.subr.bf16.mxu0 0
      %568 = vmatpush1.bf16.msra.mxu0 0
      %569 = vmatprep.subr.bf16.mxu0 0
      %570 = vmatpush1.bf16.msra.mxu0 0
      %571 = vmatprep.subr.bf16.mxu0 0
      %572 = vmatpush1.bf16.msra.mxu0 0
      %573 = vmatprep.subr.bf16.mxu0 0
      %574 = vmatpush1.bf16.msra.mxu0 0
      %575 = vmatprep.mubr.bf16.mxu0 0
      %576 = vmatmul.mubr.bf16.gmra.mrb[0].mxu0 %v529
      %v577 = vpop.f32.mrb[0].mxu0
      %v578 = vadd.f32 0.0, %v577
      %v579 = vpop.f32.mrb[0].mxu0
      %v580 = vpop.f32.mrb[0].mxu0
      %v581 = vadd.f32 0.0, %v580
      %v582 = vpop.f32.mrb[0].mxu0
      %583 = vmatprep.mubr.bf16.mxu0 0
      %584 = vmatmul.mubr.bf16.gmra.mrb[0].mxu0 %v532
      %v585 = vpop.f32.mrb[0].mxu0
      %v586 = vadd.f32 0.0, %v585
      %v587 = vpop.f32.mrb[0].mxu0
      %v588 = vpop.f32.mrb[0].mxu0
      %v589 = vadd.f32 0.0, %v588
      %v590 = vpop.f32.mrb[0].mxu0
      %591 = vmatprep.mubr.bf16.mxu0 0
      %592 = vmatmul.mubr.bf16.gmra.mrb[0].mxu0 %v535
      %v593 = vpop.f32.mrb[0].mxu0
      %v594 = vadd.f32 0.0, %v593
      %v595 = vpop.f32.mrb[0].mxu0
      %v596 = vpop.f32.mrb[0].mxu0
      %v597 = vadd.f32 0.0, %v596
      %v598 = vpop.f32.mrb[0].mxu0
      %599 = vmatprep.mubr.bf16.mxu0 0
      %600 = vmatmul.mubr.bf16.gmra.mrb[0].mxu0 %v538
      %v601 = vpop.f32.mrb[0].mxu0
      %v602 = vadd.f32 0.0, %v601
      %v603 = vpop.f32.mrb[0].mxu0
      %v604 = vpop.f32.mrb[0].mxu0
      %v605 = vadd.f32 0.0, %v604
      %v606 = vpop.f32.mrb[0].mxu0
      %607 = vdwg.mxu0
      %v608 = vadd.f32 %v484, %v578
      %v609 = vadd.f32 %v487, %v581
      %v610 = vadd.f32 %v492, %v586
      %v611 = vadd.f32 %v495, %v589
      %v612 = vadd.f32 %v500, %v594
      %v613 = vadd.f32 %v503, %v597
      %v614 = vadd.f32 %v508, %v602
      %v615 = vadd.f32 %v511, %v605
      %v616 = vld [vmem:[%s300] sm:$0xff]
      %v617 = vld [vmem:[%s300 + $0x10] sm:$0xff]
      %v618 = vld [vmem:[%s300 + $0x20] sm:$0xff]
      %v619 = vld [vmem:[%s300 + $0x30] sm:$0xff]
      %v620 = vld [vmem:[%s300 + $0x40] sm:$0xff]
      %v621 = vld [vmem:[%s300 + $0x50] sm:$0xff]
      %v622 = vld [vmem:[%s300 + $0x60] sm:$0xff]
      %v623 = vld [vmem:[%s300 + $0x70] sm:$0xff]
      %v624 = vpack.c.bf16 %v617, %v616
      %v625 = vpack.c.bf16 %v619, %v618
      %v626 = vpack.c.bf16 %v621, %v620
      %v627 = vpack.c.bf16 %v623, %v622
      %s628 = scalar_lea.vmem %s3, 12
      %v629 = vld [vmem:[%s628] sm:$0xf]
      %v631 = vsel %vm294, %v624, 0
      %v634 = vsel %vm294, %v625, 0
      %v637 = vsel %vm294, %v626, 0
      %v640 = vsel %vm294, %v627, 0
      %v643 = vsel %vm365, %v629, 0
      %645 = vmatprep.subr.bf16.mxu0 0
      %646 = vmatpush1.bf16.msra.mxu0 %v643
      %647 = vmatprep.subr.bf16.mxu0 0
      %648 = vmatpush1.bf16.msra.mxu0 0
      %649 = vmatprep.subr.bf16.mxu0 0
      %650 = vmatpush1.bf16.msra.mxu0 0
      %651 = vmatprep.subr.bf16.mxu0 0
      %652 = vmatpush1.bf16.msra.mxu0 0
      %653 = vmatprep.subr.bf16.mxu0 0
      %654 = vmatpush1.bf16.msra.mxu0 0
      %655 = vmatprep.subr.bf16.mxu0 0
      %656 = vmatpush1.bf16.msra.mxu0 0
      %657 = vmatprep.subr.bf16.mxu0 0
      %658 = vmatpush1.bf16.msra.mxu0 0
      %659 = vmatprep.subr.bf16.mxu0 0
      %660 = vmatpush1.bf16.msra.mxu0 0
      %661 = vmatprep.subr.bf16.mxu0 0
      %662 = vmatpush1.bf16.msra.mxu0 0
      %663 = vmatprep.subr.bf16.mxu0 0
      %664 = vmatpush1.bf16.msra.mxu0 0
      %665 = vmatprep.subr.bf16.mxu0 0
      %666 = vmatpush1.bf16.msra.mxu0 0
      %667 = vmatprep.subr.bf16.mxu0 0
      %668 = vmatpush1.bf16.msra.mxu0 0
      %669 = vmatprep.subr.bf16.mxu0 0
      %670 = vmatpush1.bf16.msra.mxu0 0
      %671 = vmatprep.subr.bf16.mxu0 0
      %672 = vmatpush1.bf16.msra.mxu0 0
      %673 = vmatprep.subr.bf16.mxu0 0
      %674 = vmatpush1.bf16.msra.mxu0 0
      %675 = vmatprep.subr.bf16.mxu0 0
      %676 = vmatpush1.bf16.msra.mxu0 0
      %677 = vmatprep.mubr.bf16.mxu0 0
      %678 = vmatmul.mubr.bf16.gmra.mrb[0].mxu0 %v631
      %v679 = vpop.f32.mrb[0].mxu0
      %v680 = vadd.f32 0.0, %v679
      %v681 = vpop.f32.mrb[0].mxu0
      %v682 = vpop.f32.mrb[0].mxu0
      %v683 = vadd.f32 0.0, %v682
      %v684 = vpop.f32.mrb[0].mxu0
      %685 = vmatprep.mubr.bf16.mxu0 0
      %686 = vmatmul.mubr.bf16.gmra.mrb[0].mxu0 %v634
      %v687 = vpop.f32.mrb[0].mxu0
      %v688 = vadd.f32 0.0, %v687
      %v689 = vpop.f32.mrb[0].mxu0
      %v690 = vpop.f32.mrb[0].mxu0
      %v691 = vadd.f32 0.0, %v690
      %v692 = vpop.f32.mrb[0].mxu0
      %693 = vmatprep.mubr.bf16.mxu0 0
      %694 = vmatmul.mubr.bf16.gmra.mrb[0].mxu0 %v637
      %v695 = vpop.f32.mrb[0].mxu0
      %v696 = vadd.f32 0.0, %v695
      %v697 = vpop.f32.mrb[0].mxu0
      %v698 = vpop.f32.mrb[0].mxu0
      %v699 = vadd.f32 0.0, %v698
      %v700 = vpop.f32.mrb[0].mxu0
      %701 = vmatprep.mubr.bf16.mxu0 0
      %702 = vmatmul.mubr.bf16.gmra.mrb[0].mxu0 %v640
      %v703 = vpop.f32.mrb[0].mxu0
      %v704 = vadd.f32 0.0, %v703
      %v705 = vpop.f32.mrb[0].mxu0
      %v706 = vpop.f32.mrb[0].mxu0
      %v707 = vadd.f32 0.0, %v706
      %v708 = vpop.f32.mrb[0].mxu0
      %709 = vdwg.mxu0
      %v710 = vadd.f32 %v608, %v680
      %v711 = vadd.f32 %v609, %v683
      %v712 = vadd.f32 %v610, %v688
      %v713 = vadd.f32 %v611, %v691
      %v714 = vadd.f32 %v612, %v696
      %v715 = vadd.f32 %v613, %v699
      %v716 = vadd.f32 %v614, %v704
      %v717 = vadd.f32 %v615, %v707
      %v718 = vld [vmem:[%s300 + $0x1] sm:$0xff]
      %v719 = vld [vmem:[%s300 + $0x11] sm:$0xff]
      %v720 = vld [vmem:[%s300 + $0x21] sm:$0xff]
      %v721 = vld [vmem:[%s300 + $0x31] sm:$0xff]
      %v722 = vld [vmem:[%s300 + $0x41] sm:$0xff]
      %v723 = vld [vmem:[%s300 + $0x51] sm:$0xff]
      %v724 = vld [vmem:[%s300 + $0x61] sm:$0xff]
      %v725 = vld [vmem:[%s300 + $0x71] sm:$0xff]
      %v726 = vpack.c.bf16 %v719, %v718
      %v727 = vpack.c.bf16 %v721, %v720
      %v728 = vpack.c.bf16 %v723, %v722
      %v729 = vpack.c.bf16 %v725, %v724
      %s730 = scalar_lea.vmem %s3, 16
      %v731 = vld [vmem:[%s730] sm:$0xf]
      %v733 = vsel %vm294, %v726, 0
      %v736 = vsel %vm294, %v727, 0
      %v739 = vsel %vm294, %v728, 0
      %v742 = vsel %vm294, %v729, 0
      %v745 = vsel %vm365, %v731, 0
      %747 = vmatprep.subr.bf16.mxu0 0
      %748 = vmatpush1.bf16.msra.mxu0 %v745
      %749 = vmatprep.subr.bf16.mxu0 0
      %750 = vmatpush1.bf16.msra.mxu0 0
      %751 = vmatprep.subr.bf16.mxu0 0
      %752 = vmatpush1.bf16.msra.mxu0 0
      %753 = vmatprep.subr.bf16.mxu0 0
      %754 = vmatpush1.bf16.msra.mxu0 0
      %755 = vmatprep.subr.bf16.mxu0 0
      %756 = vmatpush1.bf16.msra.mxu0 0
      %757 = vmatprep.subr.bf16.mxu0 0
      %758 = vmatpush1.bf16.msra.mxu0 0
      %759 = vmatprep.subr.bf16.mxu0 0
      %760 = vmatpush1.bf16.msra.mxu0 0
      %761 = vmatprep.subr.bf16.mxu0 0
      %762 = vmatpush1.bf16.msra.mxu0 0
      %763 = vmatprep.subr.bf16.mxu0 0
      %764 = vmatpush1.bf16.msra.mxu0 0
      %765 = vmatprep.subr.bf16.mxu0 0
      %766 = vmatpush1.bf16.msra.mxu0 0
      %767 = vmatprep.subr.bf16.mxu0 0
      %768 = vmatpush1.bf16.msra.mxu0 0
      %769 = vmatprep.subr.bf16.mxu0 0
      %770 = vmatpush1.bf16.msra.mxu0 0
      %771 = vmatprep.subr.bf16.mxu0 0
      %772 = vmatpush1.bf16.msra.mxu0 0
      %773 = vmatprep.subr.bf16.mxu0 0
      %774 = vmatpush1.bf16.msra.mxu0 0
      %775 = vmatprep.subr.bf16.mxu0 0
      %776 = vmatpush1.bf16.msra.mxu0 0
      %777 = vmatprep.subr.bf16.mxu0 0
      %778 = vmatpush1.bf16.msra.mxu0 0
      %779 = vmatprep.mubr.bf16.mxu0 0
      %780 = vmatmul.mubr.bf16.gmra.mrb[0].mxu0 %v733
      %v781 = vpop.f32.mrb[0].mxu0
      %v782 = vadd.f32 0.0, %v781
      %v783 = vpop.f32.mrb[0].mxu0
      %v784 = vpop.f32.mrb[0].mxu0
      %v785 = vadd.f32 0.0, %v784
      %v786 = vpop.f32.mrb[0].mxu0
      %787 = vmatprep.mubr.bf16.mxu0 0
      %788 = vmatmul.mubr.bf16.gmra.mrb[0].mxu0 %v736
      %v789 = vpop.f32.mrb[0].mxu0
      %v790 = vadd.f32 0.0, %v789
      %v791 = vpop.f32.mrb[0].mxu0
      %v792 = vpop.f32.mrb[0].mxu0
      %v793 = vadd.f32 0.0, %v792
      %v794 = vpop.f32.mrb[0].mxu0
      %795 = vmatprep.mubr.bf16.mxu0 0
      %796 = vmatmul.mubr.bf16.gmra.mrb[0].mxu0 %v739
      %v797 = vpop.f32.mrb[0].mxu0
      %v798 = vadd.f32 0.0, %v797
      %v799 = vpop.f32.mrb[0].mxu0
      %v800 = vpop.f32.mrb[0].mxu0
      %v801 = vadd.f32 0.0, %v800
      %v802 = vpop.f32.mrb[0].mxu0
      %803 = vmatprep.mubr.bf16.mxu0 0
      %804 = vmatmul.mubr.bf16.gmra.mrb[0].mxu0 %v742
      %v805 = vpop.f32.mrb[0].mxu0
      %v806 = vadd.f32 0.0, %v805
      %v807 = vpop.f32.mrb[0].mxu0
      %v808 = vpop.f32.mrb[0].mxu0
      %v809 = vadd.f32 0.0, %v808
      %v810 = vpop.f32.mrb[0].mxu0
      %811 = vdwg.mxu0
      %v812 = vadd.f32 %v710, %v782
      %v813 = vadd.f32 %v711, %v785
      %v814 = vadd.f32 %v712, %v790
      %v815 = vadd.f32 %v713, %v793
      %v816 = vadd.f32 %v714, %v798
      %v817 = vadd.f32 %v715, %v801
      %v818 = vadd.f32 %v716, %v806
      %v819 = vadd.f32 %v717, %v809
      %v820 = vld [vmem:[%s300 + $0x2] sm:$0xff]
      %v821 = vld [vmem:[%s300 + $0x12] sm:$0xff]
      %v822 = vld [vmem:[%s300 + $0x22] sm:$0xff]
      %v823 = vld [vmem:[%s300 + $0x32] sm:$0xff]
      %v824 = vld [vmem:[%s300 + $0x42] sm:$0xff]
      %v825 = vld [vmem:[%s300 + $0x52] sm:$0xff]
      %v826 = vld [vmem:[%s300 + $0x62] sm:$0xff]
      %v827 = vld [vmem:[%s300 + $0x72] sm:$0xff]
      %v828 = vpack.c.bf16 %v821, %v820
      %v829 = vpack.c.bf16 %v823, %v822
      %v830 = vpack.c.bf16 %v825, %v824
      %v831 = vpack.c.bf16 %v827, %v826
      %s832 = scalar_lea.vmem %s3, 20
      %v833 = vld [vmem:[%s832] sm:$0xf]
      %v835 = vsel %vm294, %v828, 0
      %v838 = vsel %vm294, %v829, 0
      %v841 = vsel %vm294, %v830, 0
      %v844 = vsel %vm294, %v831, 0
      %v847 = vsel %vm365, %v833, 0
      %849 = vmatprep.subr.bf16.mxu0 0
      %850 = vmatpush1.bf16.msra.mxu0 %v847
      %851 = vmatprep.subr.bf16.mxu0 0
      %852 = vmatpush1.bf16.msra.mxu0 0
      %853 = vmatprep.subr.bf16.mxu0 0
      %854 = vmatpush1.bf16.msra.mxu0 0
      %855 = vmatprep.subr.bf16.mxu0 0
      %856 = vmatpush1.bf16.msra.mxu0 0
      %857 = vmatprep.subr.bf16.mxu0 0
      %858 = vmatpush1.bf16.msra.mxu0 0
      %859 = vmatprep.subr.bf16.mxu0 0
      %860 = vmatpush1.bf16.msra.mxu0 0
      %861 = vmatprep.subr.bf16.mxu0 0
      %862 = vmatpush1.bf16.msra.mxu0 0
      %863 = vmatprep.subr.bf16.mxu0 0
      %864 = vmatpush1.bf16.msra.mxu0 0
      %865 = vmatprep.subr.bf16.mxu0 0
      %866 = vmatpush1.bf16.msra.mxu0 0
      %867 = vmatprep.subr.bf16.mxu0 0
      %868 = vmatpush1.bf16.msra.mxu0 0
      %869 = vmatprep.subr.bf16.mxu0 0
      %870 = vmatpush1.bf16.msra.mxu0 0
      %871 = vmatprep.subr.bf16.mxu0 0
      %872 = vmatpush1.bf16.msra.mxu0 0
      %873 = vmatprep.subr.bf16.mxu0 0
      %874 = vmatpush1.bf16.msra.mxu0 0
      %875 = vmatprep.subr.bf16.mxu0 0
      %876 = vmatpush1.bf16.msra.mxu0 0
      %877 = vmatprep.subr.bf16.mxu0 0
      %878 = vmatpush1.bf16.msra.mxu0 0
      %879 = vmatprep.subr.bf16.mxu0 0
      %880 = vmatpush1.bf16.msra.mxu0 0
      %881 = vmatprep.mubr.bf16.mxu0 0
      %882 = vmatmul.mubr.bf16.gmra.mrb[0].mxu0 %v835
      %v883 = vpop.f32.mrb[0].mxu0
      %v884 = vadd.f32 0.0, %v883
      %v885 = vpop.f32.mrb[0].mxu0
      %v886 = vpop.f32.mrb[0].mxu0
      %v887 = vadd.f32 0.0, %v886
      %v888 = vpop.f32.mrb[0].mxu0
      %889 = vmatprep.mubr.bf16.mxu0 0
      %890 = vmatmul.mubr.bf16.gmra.mrb[0].mxu0 %v838
      %v891 = vpop.f32.mrb[0].mxu0
      %v892 = vadd.f32 0.0, %v891
      %v893 = vpop.f32.mrb[0].mxu0
      %v894 = vpop.f32.mrb[0].mxu0
      %v895 = vadd.f32 0.0, %v894
      %v896 = vpop.f32.mrb[0].mxu0
      %897 = vmatprep.mubr.bf16.mxu0 0
      %898 = vmatmul.mubr.bf16.gmra.mrb[0].mxu0 %v841
      %v899 = vpop.f32.mrb[0].mxu0
      %v900 = vadd.f32 0.0, %v899
      %v901 = vpop.f32.mrb[0].mxu0
      %v902 = vpop.f32.mrb[0].mxu0
      %v903 = vadd.f32 0.0, %v902
      %v904 = vpop.f32.mrb[0].mxu0
      %905 = vmatprep.mubr.bf16.mxu0 0
      %906 = vmatmul.mubr.bf16.gmra.mrb[0].mxu0 %v844
      %v907 = vpop.f32.mrb[0].mxu0
      %v908 = vadd.f32 0.0, %v907
      %v909 = vpop.f32.mrb[0].mxu0
      %v910 = vpop.f32.mrb[0].mxu0
      %v911 = vadd.f32 0.0, %v910
      %v912 = vpop.f32.mrb[0].mxu0
      %913 = vdwg.mxu0
      %v914 = vadd.f32 %v812, %v884
      %v915 = vadd.f32 %v813, %v887
      %v916 = vadd.f32 %v814, %v892
      %v917 = vadd.f32 %v815, %v895
      %v918 = vadd.f32 %v816, %v900
      %v919 = vadd.f32 %v817, %v903
      %v920 = vadd.f32 %v818, %v908
      %v921 = vadd.f32 %v819, %v911
      %s922 = scalar_lea.vmem [#allocation2], 32
      %v923 = vld [vmem:[%s922] sm:$0xff]
      %v924 = vld [vmem:[%s922 + $0x10] sm:$0xff]
      %v925 = vld [vmem:[%s922 + $0x20] sm:$0xff]
      %v926 = vld [vmem:[%s922 + $0x30] sm:$0xff]
      %v927 = vld [vmem:[%s922 + $0x40] sm:$0xff]
      %v928 = vld [vmem:[%s922 + $0x50] sm:$0xff]
      %v929 = vld [vmem:[%s922 + $0x60] sm:$0xff]
      %v930 = vld [vmem:[%s922 + $0x70] sm:$0xff]
      %v931 = vpack.c.bf16 %v924, %v923
      %v932 = vpack.c.bf16 %v926, %v925
      %v933 = vpack.c.bf16 %v928, %v927
      %v934 = vpack.c.bf16 %v930, %v929
      %s935 = scalar_lea.vmem %s3, 24
      %v936 = vld [vmem:[%s935] sm:$0xf]
      %v938 = vsel %vm294, %v931, 0
      %v941 = vsel %vm294, %v932, 0
      %v944 = vsel %vm294, %v933, 0
      %v947 = vsel %vm294, %v934, 0
      %v950 = vsel %vm365, %v936, 0
      %952 = vmatprep.subr.bf16.mxu0 0
      %953 = vmatpush1.bf16.msra.mxu0 %v950
      %954 = vmatprep.subr.bf16.mxu0 0
      %955 = vmatpush1.bf16.msra.mxu0 0
      %956 = vmatprep.subr.bf16.mxu0 0
      %957 = vmatpush1.bf16.msra.mxu0 0
      %958 = vmatprep.subr.bf16.mxu0 0
      %959 = vmatpush1.bf16.msra.mxu0 0
      %960 = vmatprep.subr.bf16.mxu0 0
      %961 = vmatpush1.bf16.msra.mxu0 0
      %962 = vmatprep.subr.bf16.mxu0 0
      %963 = vmatpush1.bf16.msra.mxu0 0
      %964 = vmatprep.subr.bf16.mxu0 0
      %965 = vmatpush1.bf16.msra.mxu0 0
      %966 = vmatprep.subr.bf16.mxu0 0
      %967 = vmatpush1.bf16.msra.mxu0 0
      %968 = vmatprep.subr.bf16.mxu0 0
      %969 = vmatpush1.bf16.msra.mxu0 0
      %970 = vmatprep.subr.bf16.mxu0 0
      %971 = vmatpush1.bf16.msra.mxu0 0
      %972 = vmatprep.subr.bf16.mxu0 0
      %973 = vmatpush1.bf16.msra.mxu0 0
      %974 = vmatprep.subr.bf16.mxu0 0
      %975 = vmatpush1.bf16.msra.mxu0 0
      %976 = vmatprep.subr.bf16.mxu0 0
      %977 = vmatpush1.bf16.msra.mxu0 0
      %978 = vmatprep.subr.bf16.mxu0 0
      %979 = vmatpush1.bf16.msra.mxu0 0
      %980 = vmatprep.subr.bf16.mxu0 0
      %981 = vmatpush1.bf16.msra.mxu0 0
      %982 = vmatprep.subr.bf16.mxu0 0
      %983 = vmatpush1.bf16.msra.mxu0 0
      %984 = vmatprep.mubr.bf16.mxu0 0
      %985 = vmatmul.mubr.bf16.gmra.mrb[0].mxu0 %v938
      %v986 = vpop.f32.mrb[0].mxu0
      %v987 = vadd.f32 0.0, %v986
      %v988 = vpop.f32.mrb[0].mxu0
      %v989 = vpop.f32.mrb[0].mxu0
      %v990 = vadd.f32 0.0, %v989
      %v991 = vpop.f32.mrb[0].mxu0
      %992 = vmatprep.mubr.bf16.mxu0 0
      %993 = vmatmul.mubr.bf16.gmra.mrb[0].mxu0 %v941
      %v994 = vpop.f32.mrb[0].mxu0
      %v995 = vadd.f32 0.0, %v994
      %v996 = vpop.f32.mrb[0].mxu0
      %v997 = vpop.f32.mrb[0].mxu0
      %v998 = vadd.f32 0.0, %v997
      %v999 = vpop.f32.mrb[0].mxu0
      %1000 = vmatprep.mubr.bf16.mxu0 0
      %1001 = vmatmul.mubr.bf16.gmra.mrb[0].mxu0 %v944
      %v1002 = vpop.f32.mrb[0].mxu0
      %v1003 = vadd.f32 0.0, %v1002
      %v1004 = vpop.f32.mrb[0].mxu0
      %v1005 = vpop.f32.mrb[0].mxu0
      %v1006 = vadd.f32 0.0, %v1005
      %v1007 = vpop.f32.mrb[0].mxu0
      %1008 = vmatprep.mubr.bf16.mxu0 0
      %1009 = vmatmul.mubr.bf16.gmra.mrb[0].mxu0 %v947
      %v1010 = vpop.f32.mrb[0].mxu0
      %v1011 = vadd.f32 0.0, %v1010
      %v1012 = vpop.f32.mrb[0].mxu0
      %v1013 = vpop.f32.mrb[0].mxu0
      %v1014 = vadd.f32 0.0, %v1013
      %v1015 = vpop.f32.mrb[0].mxu0
      %1016 = vdwg.mxu0
      %v1017 = vadd.f32 %v914, %v987
      %v1018 = vadd.f32 %v915, %v990
      %v1019 = vadd.f32 %v916, %v995
      %v1020 = vadd.f32 %v917, %v998
      %v1021 = vadd.f32 %v918, %v1003
      %v1022 = vadd.f32 %v919, %v1006
      %v1023 = vadd.f32 %v920, %v1011
      %v1024 = vadd.f32 %v921, %v1014
      %v1025 = vld [vmem:[%s922 + $0x1] sm:$0xff]
      %v1026 = vld [vmem:[%s922 + $0x11] sm:$0xff]
      %v1027 = vld [vmem:[%s922 + $0x21] sm:$0xff]
      %v1028 = vld [vmem:[%s922 + $0x31] sm:$0xff]
      %v1029 = vld [vmem:[%s922 + $0x41] sm:$0xff]
      %v1030 = vld [vmem:[%s922 + $0x51] sm:$0xff]
      %v1031 = vld [vmem:[%s922 + $0x61] sm:$0xff]
      %v1032 = vld [vmem:[%s922 + $0x71] sm:$0xff]
      %v1033 = vpack.c.bf16 %v1026, %v1025
      %v1034 = vpack.c.bf16 %v1028, %v1027
      %v1035 = vpack.c.bf16 %v1030, %v1029
      %v1036 = vpack.c.bf16 %v1032, %v1031
      %s1037 = scalar_lea.vmem %s3, 28
      %v1038 = vld [vmem:[%s1037] sm:$0xf]
      %v1040 = vsel %vm294, %v1033, 0
      %v1043 = vsel %vm294, %v1034, 0
      %v1046 = vsel %vm294, %v1035, 0
      %v1049 = vsel %vm294, %v1036, 0
      %v1052 = vsel %vm365, %v1038, 0
      %1054 = vmatprep.subr.bf16.mxu0 0
      %1055 = vmatpush1.bf16.msra.mxu0 %v1052
      %1056 = vmatprep.subr.bf16.mxu0 0
      %1057 = vmatpush1.bf16.msra.mxu0 0
      %1058 = vmatprep.subr.bf16.mxu0 0
      %1059 = vmatpush1.bf16.msra.mxu0 0
      %1060 = vmatprep.subr.bf16.mxu0 0
      %1061 = vmatpush1.bf16.msra.mxu0 0
      %1062 = vmatprep.subr.bf16.mxu0 0
      %1063 = vmatpush1.bf16.msra.mxu0 0
      %1064 = vmatprep.subr.bf16.mxu0 0
      %1065 = vmatpush1.bf16.msra.mxu0 0
      %1066 = vmatprep.subr.bf16.mxu0 0
      %1067 = vmatpush1.bf16.msra.mxu0 0
      %1068 = vmatprep.subr.bf16.mxu0 0
      %1069 = vmatpush1.bf16.msra.mxu0 0
      %1070 = vmatprep.subr.bf16.mxu0 0
      %1071 = vmatpush1.bf16.msra.mxu0 0
      %1072 = vmatprep.subr.bf16.mxu0 0
      %1073 = vmatpush1.bf16.msra.mxu0 0
      %1074 = vmatprep.subr.bf16.mxu0 0
      %1075 = vmatpush1.bf16.msra.mxu0 0
      %1076 = vmatprep.subr.bf16.mxu0 0
      %1077 = vmatpush1.bf16.msra.mxu0 0
      %1078 = vmatprep.subr.bf16.mxu0 0
      %1079 = vmatpush1.bf16.msra.mxu0 0
      %1080 = vmatprep.subr.bf16.mxu0 0
      %1081 = vmatpush1.bf16.msra.mxu0 0
      %1082 = vmatprep.subr.bf16.mxu0 0
      %1083 = vmatpush1.bf16.msra.mxu0 0
      %1084 = vmatprep.subr.bf16.mxu0 0
      %1085 = vmatpush1.bf16.msra.mxu0 0
      %1086 = vmatprep.mubr.bf16.mxu0 0
      %1087 = vmatmul.mubr.bf16.gmra.mrb[0].mxu0 %v1040
      %v1088 = vpop.f32.mrb[0].mxu0
      %v1089 = vadd.f32 0.0, %v1088
      %v1090 = vpop.f32.mrb[0].mxu0
      %v1091 = vpop.f32.mrb[0].mxu0
      %v1092 = vadd.f32 0.0, %v1091
      %v1093 = vpop.f32.mrb[0].mxu0
      %1094 = vmatprep.mubr.bf16.mxu0 0
      %1095 = vmatmul.mubr.bf16.gmra.mrb[0].mxu0 %v1043
      %v1096 = vpop.f32.mrb[0].mxu0
      %v1097 = vadd.f32 0.0, %v1096
      %v1098 = vpop.f32.mrb[0].mxu0
      %v1099 = vpop.f32.mrb[0].mxu0
      %v1100 = vadd.f32 0.0, %v1099
      %v1101 = vpop.f32.mrb[0].mxu0
      %1102 = vmatprep.mubr.bf16.mxu0 0
      %1103 = vmatmul.mubr.bf16.gmra.mrb[0].mxu0 %v1046
      %v1104 = vpop.f32.mrb[0].mxu0
      %v1105 = vadd.f32 0.0, %v1104
      %v1106 = vpop.f32.mrb[0].mxu0
      %v1107 = vpop.f32.mrb[0].mxu0
      %v1108 = vadd.f32 0.0, %v1107
      %v1109 = vpop.f32.mrb[0].mxu0
      %1110 = vmatprep.mubr.bf16.mxu0 0
      %1111 = vmatmul.mubr.bf16.gmra.mrb[0].mxu0 %v1049
      %v1112 = vpop.f32.mrb[0].mxu0
      %v1113 = vadd.f32 0.0, %v1112
      %v1114 = vpop.f32.mrb[0].mxu0
      %v1115 = vpop.f32.mrb[0].mxu0
      %v1116 = vadd.f32 0.0, %v1115
      %v1117 = vpop.f32.mrb[0].mxu0
      %1118 = vdwg.mxu0
      %v1119 = vadd.f32 %v1017, %v1089
      %v1120 = vadd.f32 %v1018, %v1092
      %v1121 = vadd.f32 %v1019, %v1097
      %v1122 = vadd.f32 %v1020, %v1100
      %v1123 = vadd.f32 %v1021, %v1105
      %v1124 = vadd.f32 %v1022, %v1108
      %v1125 = vadd.f32 %v1023, %v1113
      %v1126 = vadd.f32 %v1024, %v1116
      %v1127 = vld [vmem:[%s922 + $0x2] sm:$0xff]
      %v1128 = vld [vmem:[%s922 + $0x12] sm:$0xff]
      %v1129 = vld [vmem:[%s922 + $0x22] sm:$0xff]
      %v1130 = vld [vmem:[%s922 + $0x32] sm:$0xff]
      %v1131 = vld [vmem:[%s922 + $0x42] sm:$0xff]
      %v1132 = vld [vmem:[%s922 + $0x52] sm:$0xff]
      %v1133 = vld [vmem:[%s922 + $0x62] sm:$0xff]
      %v1134 = vld [vmem:[%s922 + $0x72] sm:$0xff]
      %v1135 = vpack.c.bf16 %v1128, %v1127
      %v1136 = vpack.c.bf16 %v1130, %v1129
      %v1137 = vpack.c.bf16 %v1132, %v1131
      %v1138 = vpack.c.bf16 %v1134, %v1133
      %s1139 = scalar_lea.vmem %s3, 32
      %v1140 = vld [vmem:[%s1139] sm:$0xf]
      %v1142 = vsel %vm294, %v1135, 0
      %v1145 = vsel %vm294, %v1136, 0
      %v1148 = vsel %vm294, %v1137, 0
      %v1151 = vsel %vm294, %v1138, 0
      %v1154 = vsel %vm365, %v1140, 0
      %1156 = vmatprep.subr.bf16.mxu0 0
      %1157 = vmatpush1.bf16.msra.mxu0 %v1154
      %1158 = vmatprep.subr.bf16.mxu0 0
      %1159 = vmatpush1.bf16.msra.mxu0 0
      %1160 = vmatprep.subr.bf16.mxu0 0
      %1161 = vmatpush1.bf16.msra.mxu0 0
      %1162 = vmatprep.subr.bf16.mxu0 0
      %1163 = vmatpush1.bf16.msra.mxu0 0
      %1164 = vmatprep.subr.bf16.mxu0 0
      %1165 = vmatpush1.bf16.msra.mxu0 0
      %1166 = vmatprep.subr.bf16.mxu0 0
      %1167 = vmatpush1.bf16.msra.mxu0 0
      %1168 = vmatprep.subr.bf16.mxu0 0
      %1169 = vmatpush1.bf16.msra.mxu0 0
      %1170 = vmatprep.subr.bf16.mxu0 0
      %1171 = vmatpush1.bf16.msra.mxu0 0
      %1172 = vmatprep.subr.bf16.mxu0 0
      %1173 = vmatpush1.bf16.msra.mxu0 0
      %1174 = vmatprep.subr.bf16.mxu0 0
      %1175 = vmatpush1.bf16.msra.mxu0 0
      %1176 = vmatprep.subr.bf16.mxu0 0
      %1177 = vmatpush1.bf16.msra.mxu0 0
      %1178 = vmatprep.subr.bf16.mxu0 0
      %1179 = vmatpush1.bf16.msra.mxu0 0
      %1180 = vmatprep.subr.bf16.mxu0 0
      %1181 = vmatpush1.bf16.msra.mxu0 0
      %1182 = vmatprep.subr.bf16.mxu0 0
      %1183 = vmatpush1.bf16.msra.mxu0 0
      %1184 = vmatprep.subr.bf16.mxu0 0
      %1185 = vmatpush1.bf16.msra.mxu0 0
      %1186 = vmatprep.subr.bf16.mxu0 0
      %1187 = vmatpush1.bf16.msra.mxu0 0
      %1188 = vmatprep.mubr.bf16.mxu0 0
      %1189 = vmatmul.mubr.bf16.gmra.mrb[0].mxu0 %v1142
      %v1190 = vpop.f32.mrb[0].mxu0
      %v1191 = vadd.f32 0.0, %v1190
      %v1192 = vpop.f32.mrb[0].mxu0
      %v1193 = vpop.f32.mrb[0].mxu0
      %v1194 = vadd.f32 0.0, %v1193
      %v1195 = vpop.f32.mrb[0].mxu0
      %1196 = vmatprep.mubr.bf16.mxu0 0
      %1197 = vmatmul.mubr.bf16.gmra.mrb[0].mxu0 %v1145
      %v1198 = vpop.f32.mrb[0].mxu0
      %v1199 = vadd.f32 0.0, %v1198
      %v1200 = vpop.f32.mrb[0].mxu0
      %v1201 = vpop.f32.mrb[0].mxu0
      %v1202 = vadd.f32 0.0, %v1201
      %v1203 = vpop.f32.mrb[0].mxu0
      %1204 = vmatprep.mubr.bf16.mxu0 0
      %1205 = vmatmul.mubr.bf16.gmra.mrb[0].mxu0 %v1148
      %v1206 = vpop.f32.mrb[0].mxu0
      %v1207 = vadd.f32 0.0, %v1206
      %v1208 = vpop.f32.mrb[0].mxu0
      %v1209 = vpop.f32.mrb[0].mxu0
      %v1210 = vadd.f32 0.0, %v1209
      %v1211 = vpop.f32.mrb[0].mxu0
      %1212 = vmatprep.mubr.bf16.mxu0 0
      %1213 = vmatmul.mubr.bf16.gmra.mrb[0].mxu0 %v1151
      %v1214 = vpop.f32.mrb[0].mxu0
      %v1215 = vadd.f32 0.0, %v1214
      %v1216 = vpop.f32.mrb[0].mxu0
      %v1217 = vpop.f32.mrb[0].mxu0
      %v1218 = vadd.f32 0.0, %v1217
      %v1219 = vpop.f32.mrb[0].mxu0
      %1220 = vdwg.mxu0
      %v1221 = vadd.f32 %v1119, %v1191
      %v1222 = vadd.f32 %v1120, %v1194
      %v1223 = vadd.f32 %v1121, %v1199
      %v1224 = vadd.f32 %v1122, %v1202
      %v1225 = vadd.f32 %v1123, %v1207
      %v1226 = vadd.f32 %v1124, %v1210
      %v1227 = vadd.f32 %v1125, %v1215
      %v1228 = vadd.f32 %v1126, %v1218
      %v1229 = vpack.c.bf16 %v1221, %v1221
      %v1230 = vpack.c.bf16 %v1222, %v1222
      %v1231 = vpack.c.bf16 %v1223, %v1223
      %v1232 = vpack.c.bf16 %v1224, %v1224
      %v1233 = vpack.c.bf16 %v1225, %v1225
      %v1234 = vpack.c.bf16 %v1226, %v1226
      %v1235 = vpack.c.bf16 %v1227, %v1227
      %v1236 = vpack.c.bf16 %v1228, %v1228
      %vm1237 = vcmask 60416
      %1238 = vst.msk [vmem:[%s233] sm:$0xf] %vm1237, %v1229
      %1239 = vst.msk [vmem:[%s233 + $0x4] sm:$0xf] %vm1237, %v1230
      %1240 = vst.msk [vmem:[%s233 + $0x8] sm:$0xf] %vm1237, %v1231
      %1241 = vst.msk [vmem:[%s233 + $0xc] sm:$0xf] %vm1237, %v1232
      %1242 = vst.msk [vmem:[%s233 + $0x10] sm:$0xf] %vm1237, %v1233
      %1243 = vst.msk [vmem:[%s233 + $0x14] sm:$0xf] %vm1237, %v1234
      %1244 = vst.msk [vmem:[%s233 + $0x18] sm:$0xf] %vm1237, %v1235
      %1245 = vst.msk [vmem:[%s233 + $0x1c] sm:$0xf] %vm1237, %v1236
      %v1246 = vsel %vm294, %v1221, 0.0
      %v1247 = vsel %vm294, %v1222, 0.0
      %v1248 = vadd.f32 %v1246, %v1247
      %v1249 = vsel %vm294, %v1223, 0.0
      %v1250 = vadd.f32 %v1248, %v1249
      %v1251 = vsel %vm294, %v1224, 0.0
      %v1252 = vadd.f32 %v1250, %v1251
      %v1253 = vsel %vm294, %v1225, 0.0
      %v1254 = vadd.f32 %v1252, %v1253
      %v1255 = vsel %vm294, %v1226, 0.0
      %v1256 = vadd.f32 %v1254, %v1255
      %v1257 = vsel %vm294, %v1227, 0.0
      %v1258 = vadd.f32 %v1256, %v1257
      %v1259 = vsel %vm294, %v1228, 0.0
      %v1260 = vadd.f32 %v1258, %v1259
      %v1261 = vrot.slane %v1260, 4
      %v1262 = vadd.f32 %v1260, %v1261
      %v1263 = vrot.slane %v1262, 2
      %v1264 = vadd.f32 %v1262, %v1263
      %v1265 = vrot.slane %v1264, 1
      %v1266 = vadd.f32 %v1264, %v1265
      %v1267 = vmul.f32 %v1266, 0.015625
      %v1268 = vsub.f32 %v1221, %v1267
      %v1269 = vsub.f32 %v1222, %v1267
      %v1270 = vsub.f32 %v1223, %v1267
      %v1271 = vsub.f32 %v1224, %v1267
      %v1272 = vsub.f32 %v1225, %v1267
      %v1273 = vsub.f32 %v1226, %v1267
      %v1274 = vsub.f32 %v1227, %v1267
      %v1275 = vsub.f32 %v1228, %v1267
      %1276 = vst.msk [vmem:[%s238] sm:$0x1] %vm301, %v1267
      %v1277 = vmul.f32 %v1268, %v1268
      %v1278 = vmul.f32 %v1269, %v1269
      %v1279 = vmul.f32 %v1270, %v1270
      %v1280 = vmul.f32 %v1271, %v1271
      %v1281 = vmul.f32 %v1272, %v1272
      %v1282 = vmul.f32 %v1273, %v1273
      %v1283 = vmul.f32 %v1274, %v1274
      %v1284 = vmul.f32 %v1275, %v1275
      %v1285 = vsel %vm294, %v1277, 0.0
      %v1286 = vsel %vm294, %v1278, 0.0
      %v1287 = vadd.f32 %v1285, %v1286
      %v1288 = vsel %vm294, %v1279, 0.0
      %v1289 = vadd.f32 %v1287, %v1288
      %v1290 = vsel %vm294, %v1280, 0.0
      %v1291 = vadd.f32 %v1289, %v1290
      %v1292 = vsel %vm294, %v1281, 0.0
      %v1293 = vadd.f32 %v1291, %v1292
      %v1294 = vsel %vm294, %v1282, 0.0
      %v1295 = vadd.f32 %v1293, %v1294
      %v1296 = vsel %vm294, %v1283, 0.0
      %v1297 = vadd.f32 %v1295, %v1296
      %v1298 = vsel %vm294, %v1284, 0.0
      %v1299 = vadd.f32 %v1297, %v1298
      %v1300 = vrot.slane %v1299, 4
      %v1301 = vadd.f32 %v1299, %v1300
      %v1302 = vrot.slane %v1301, 2
      %v1303 = vadd.f32 %v1301, %v1302
      %v1304 = vrot.slane %v1303, 1
      %v1305 = vadd.f32 %v1303, %v1304
      %1306 = vst.msk [vmem:[%s238 + $0x1] sm:$0x1] %vm301, %v1305
      %s1307 = smul.u32 8, %s17
      %p1308 = scmp.lt.s32.totalorder %s1307, 15
      %s1309 = scalar_select %p1308, %s1307, 15
      %s1310 = smul.addr %s1309, 4
      %s1311 = scalar_lea.vmem %s4, %s1310
      %p1312 = scmp.lt.s32.totalorder %s17, 1
      %s1313 = scalar_select %p1312, %s17, 1
      %s1314 = smul.addr %s1313, 2
      %s1315 = scalar_lea.vmem %s5, %s1314
      // Predicated region
      $region37: #{down_forward.4} parent=35 // pred_check
        %p1316 = pneg %p124
      $region38: #{down_forward.4} parent=35 // pred_check_branch
        %1318 = sbr.rel (%p1316) target = $region40
      $region39: #{down_forward.4} parent=35 // pred_region
        %s1319 = smul.u32 8, %s17
      $region40: #{down_forward.4} parent=35 // pred_fallthru
        _
      // Predicated region
      $region41: #{down_forward.4} parent=35 // pred_check
        %p1320 = pneg %p150
      $region42: #{down_forward.4} parent=35 // pred_check_branch
        %1322 = sbr.rel (%p1320) target = $region44
      $region43: #{down_forward.4} parent=35 // pred_region
        _
      $region44: #{down_forward.4} parent=35 // pred_fallthru
        _
    $region36: #{down_forward.4} parent=5 // pred_fallthru
      _
    %p1323 = scmp.le.s32.totalorder 2, %s12
    // Predicated region
    $region45: #{down_forward.4} parent=5 // pred_check
      %p1324 = pneg %p1323
    $region46: #{down_forward.4} parent=5 // pred_check_branch
      %1326 = sbr.rel (%p1324) target = $region48
    $region47: #{down_forward.4} parent=5 // pred_region
      %s1327 = ssub.s32 %s12, 2
      // Predicated region
      $region49: #{down_forward.4} parent=47 // pred_check
        %p1328 = pneg %p130
      $region50: #{down_forward.4} parent=47 // pred_check_branch
        %1330 = sbr.rel (%p1328) target = $region52
      $region51: #{down_forward.4} parent=47 // pred_region
        %s1331 = smul.u32 8, %s18
        %p1332 = scmp.lt.s32.totalorder %s1331, 15
        %s1333 = scalar_select %p1332, %s1331, 15
        %s1334 = smul.addr %s1333, 4
        %s1335 = scalar_lea.vmem %s4, %s1334
      $region52: #{down_forward.4} parent=47 // pred_fallthru
        _
      // Predicated region
      $region53: #{down_forward.4} parent=47 // pred_check
        %p1336 = pneg %p156
      $region54: #{down_forward.4} parent=47 // pred_check_branch
        %1338 = sbr.rel (%p1336) target = $region56
      $region55: #{down_forward.4} parent=47 // pred_region
        %p1339 = scmp.lt.s32.totalorder %s18, 1
        %s1340 = scalar_select %p1339, %s18, 1
        %s1341 = smul.addr %s1340, 2
        %s1342 = scalar_lea.vmem %s5, %s1341
      $region56: #{down_forward.4} parent=47 // pred_fallthru
        _
    $region48: #{down_forward.4} parent=5 // pred_fallthru
      _
  $region6: #{down_forward.4} parent=0 // loop_footer
    %s16 = sadd.s32 1, %s12
  $region7: #{down_forward.4} parent=0 // loop_footer_branch
    %11 = sbr.rel target = $region3
  $region8: #{down_forward.4} parent=0 // loop_exit
    _

</llo_original>
